<compile_context>
chip_gen: v7x
topology: tpu7x:2x2x1
jax: 0.10.0
libtpu: 0.0.40
codegen_flags: <defaults>
</compile_context>

<pallas_src>
import functools

import jax
import jax.numpy as jnp
from jax.experimental import pallas as pl
from jax.experimental.pallas import tpu as pltpu

LEAKY_SLOPE = 0.2
EPS = 1e-8
LANE = 128                             # channel dims padded to lane width
TARGET_ROWS = 512                      # target M (= TH*W) of the per-tap matmul
VMEM_LIMIT_BYTES = 32 * 1024 * 1024    # explicit; safe on v5e/v6e (128MiB) and v7x (64MiB)


def _round_up(x, m):
    return ((x + m - 1) // m) * m


def _pick_row_tile(H, W, target=TARGET_ROWS):
    """Largest divisor TH of H with TH*W <= max(target, W)."""
    best, cap = 1, max(target, W)
    for th in range(1, H + 1):
        if H % th == 0 and th * W <= cap:
            best = th
    return best


# ----------------------------------------------------------------------------
# Pallas kernel: k x k modulated conv as k*k MXU matmuls per
# (batch, row-tile, Cout-tile, Cin-tile) grid cell, K-accumulated in VMEM f32.
# Noise / bias are folded into an extra K channel; LeakyReLU fused on writeback.
# ----------------------------------------------------------------------------
def _make_modconv_kernel(k, TH, W):
    def kernel(x_ref, w_ref, o_ref, acc_ref):
        kt = pl.program_id(3)

        @pl.when(kt == 0)
        def _init():
            acc_ref[...] = jnp.zeros_like(acc_ref)

        acc = acc_ref[...]
        for kh in range(k):                                   # unrolled tap loop
            for kw in range(k):
                xt = x_ref[0, kh:kh + TH, kw:kw + W, :]       # (TH, W, TK) bf16
                xt = xt.reshape(TH * W, xt.shape[-1])
                wt = w_ref[0, kh * k + kw]                    # (TK, TN) bf16
                acc = acc + jnp.dot(xt, wt, preferred_element_type=jnp.float32)
        acc_ref[...] = acc

        @pl.when(kt == pl.num_programs(3) - 1)
        def _finalize():
            y = acc_ref[...]
            y = jnp.where(y >= 0, y, LEAKY_SLOPE * y)         # fused LeakyReLU(0.2)
            o_ref[0] = y.reshape(TH, W, o_ref.shape[-1]).astype(o_ref.dtype)

    return kernel


def _modconv_call(x_in, w_taps, *, k):
    """x_in: (B,H,W,Kp) bf16 (one channel = noise/bias lane, rest zero-padded).
       w_taps: (B or 1, k*k, Kp, Np) bf16.  Returns (B,H,W,Np) f32 (activated)."""
    B, H, W, Kp = x_in.shape
    Wb, kk, _, Np = w_taps.shape
    halo = (k - 1) // 2

    TH = _pick_row_tile(H, W)
    n_h = H // TH
    TK = 256 if Kp % 256 == 0 else 128          # MXU-native K/N tile widths
    TN = 256 if Np % 256 == 0 else 128
    n_k, n_n = Kp // TK, Np // TN

    # 'same' spatial padding + overlapping row tiles (only 2*halo rows duplicated
    # per tile -- vs the 9x activation blow-up of HBM-level im2col).
    x_pad = jnp.pad(x_in, ((0, 0), (halo, halo), (halo, halo), (0, 0))) if halo else x_in
    Wp = W + 2 * halo
    if n_h == 1:
        x_tiles = x_pad                                       # (B, TH+2h, Wp, Kp)
    else:
        rows = jnp.arange(n_h)[:, None] * TH + jnp.arange(TH + 2 * halo)[None, :]
        x_tiles = x_pad[:, rows].reshape(B * n_h, TH + 2 * halo, Wp, Kp)

    if Wb == B:
        w_index = lambda b, h, n, kt: (b, 0, kt, n)           # per-batch modulated weights
    else:
        w_index = lambda b, h, n, kt: (0, 0, kt, n)           # shared weights stay VMEM-resident
    x_index = lambda b, h, n, kt: (b * n_h + h, 0, 0, kt)
    o_index = lambda b, h, n, kt: (b, h, 0, n)

    flops = 2 * B * H * W * (k * k * Kp) * Np
    bytes_accessed = (x_tiles.size * x_tiles.dtype.itemsize
                      + w_taps.size * w_taps.dtype.itemsize
                      + B * H * W * Np * 4)

    return pl.pallas_call(
        _make_modconv_kernel(k, TH, W),
        out_shape=jax.ShapeDtypeStruct((B, H, W, Np), jnp.float32),
        grid=(B, n_h, n_n, n_k),
        in_specs=[
            pl.BlockSpec((1, TH + 2 * halo, Wp, TK), x_index),
            # TODO(synk): consider pipeline_mode=pl.Buffered(3) on the weight spec
            # if profiling shows exposed weight DMA at small tiles.
            pl.BlockSpec((1, kk, TK, TN), w_index),
        ],
        out_specs=pl.BlockSpec((1, TH, W, TN), o_index),
        scratch_shapes=[pltpu.VMEM((TH * W, TN), jnp.float32)],
        compiler_params=pltpu.CompilerParams(
            dimension_semantics=("parallel", "parallel", "parallel", "arbitrary"),
            vmem_limit_bytes=VMEM_LIMIT_BYTES),
        cost_estimate=pl.CostEstimate(flops=flops, transcendentals=0,
                                      bytes_accessed=bytes_accessed),
    )(x_tiles, w_taps)


# ----------------------------------------------------------------------------
# Plain-JAX glue: weight (de)modulation, channel padding, bilinear upsample
# ----------------------------------------------------------------------------
def conv2demod_apply(params, x_nhwc, ws, noise_hw):
    """Conv2Demod + B*noise + LeakyReLU (the Act that follows it in BlockG).
    x_nhwc may carry padded channels; only the first Cin are used.
    Returns (B,H,W,Np) f32; channels >= Cout are exactly zero."""
    weight = params["weight"]                                 # (Cout, Cin, k, k)
    Cout, Cin, k, _ = weight.shape
    B, H, W, _ = x_nhwc.shape

    # Style modulation + demodulation stay in f32 (tiny, outside the kernel).
    styles = ws @ params["A_w"].T + params["A_b"]             # (B, Cin)
    wmod = weight[None] * styles[:, None, :, None, None]      # (B, Cout, Cin, k, k)
    d = jax.lax.rsqrt(jnp.sum(wmod * wmod, axis=(2, 3, 4)) + EPS)
    wmod = wmod * d[:, :, None, None, None]

    Kp = _round_up(Cin + 1, LANE)       # +1: noise lane (bias trick)
    Np = _round_up(Cout, LANE)          # lane-dense output slab; caller slices

    w_taps = jnp.zeros((B, k * k, Kp, Np), jnp.float32)
    w_taps = w_taps.at[:, :, :Cin, :Cout].set(
        wmod.transpose(0, 3, 4, 2, 1).reshape(B, k * k, Cin, Cout))
    # Noise scale B[o] as an extra (un-demodulated) weight row at the centre tap.
    w_taps = w_taps.at[:, (k * k) // 2, Cin, :Cout].set(params["B"])
    w_taps = w_taps.astype(jnp.bfloat16)

    x_in = jnp.zeros((B, H, W, Kp), jnp.bfloat16)
    x_in = x_in.at[..., :Cin].set(x_nhwc[..., :Cin].astype(jnp.bfloat16))
    x_in = x_in.at[..., Cin].set(noise_hw.astype(jnp.bfloat16))    # noise lane

    return _modconv_call(x_in, w_taps, k=k)


def plain_conv1x1_apply(params, x_nhwc):
    """is_last tRGB: plain 1x1 conv + bias + LeakyReLU. Weights shared across
    the batch (passed once; constant index_map keeps them VMEM-resident)."""
    weight = params["weight"]                                 # (Cout, Cin, 1, 1)
    bias = params["bias"]
    Cout, Cin = weight.shape[:2]
    B, H, W, _ = x_nhwc.shape

    Kp = _round_up(Cin + 1, LANE)
    Np = _round_up(Cout, LANE)

    w_taps = jnp.zeros((1, 1, Kp, Np), jnp.float32)
    w_taps = w_taps.at[0, 0, :Cin, :Cout].set(weight.reshape(Cout, Cin).T)
    w_taps = w_taps.at[0, 0, Cin, :Cout].set(bias)            # bias lane
    w_taps = w_taps.astype(jnp.bfloat16)

    x_in = jnp.zeros((B, H, W, Kp), jnp.bfloat16)
    x_in = x_in.at[..., :Cin].set(x_nhwc[..., :Cin].astype(jnp.bfloat16))
    x_in = x_in.at[..., Cin].set(1.0)                         # bias lane = 1
    return _modconv_call(x_in, w_taps, k=1)


def bilinear_up2_align_corners(x):
    """NHWC, matches nn.Upsample(scale_factor=2, mode='bilinear', align_corners=True).
    Separable: each source row/col is gathered exactly once."""
    # TODO(synk): fuse the x2 upsample into the conv1 input pipeline to avoid the
    # 4x-larger f32 intermediate on mem-bound early blocks.
    B, H, W, C = x.shape
    Ho, Wo = 2 * H, 2 * W

    def coords(n_in, n_out):
        c = jnp.arange(n_out, dtype=jnp.float32) * (n_in - 1) / (n_out - 1)
        i0 = jnp.floor(c).astype(jnp.int32)
        i1 = jnp.minimum(i0 + 1, n_in - 1)
        return i0, i1, c - i0.astype(jnp.float32)

    y0, y1, fy = coords(H, Ho)
    x0, x1, fx = coords(W, Wo)
    xh = (x[:, y0] * (1.0 - fy)[None, :, None, None]
          + x[:, y1] * fy[None, :, None, None])
    out = (xh[:, :, x0] * (1.0 - fx)[None, None, :, None]
           + xh[:, :, x1] * fx[None, None, :, None])
    return out


# ----------------------------------------------------------------------------
# BlockG forward (NCHW in / out, like the PyTorch module)
# ----------------------------------------------------------------------------
def blockg_forward(params, x_nchw, rgb_nchw, w, noise_keys, *, res_in, res_out,
                   is_last=False):
    assert x_nchw.ndim == 4
    x = jnp.transpose(x_nchw, (0, 2, 3, 1)).astype(jnp.float32)      # NCHW -> NHWC
    rgb = jnp.transpose(rgb_nchw, (0, 2, 3, 1)).astype(jnp.float32)

    if res_out == 2 * res_in:
        x = bilinear_up2_align_corners(x)
        rgb = bilinear_up2_align_corners(rgb)

    B, H, W, _ = x.shape
    n1 = jax.random.normal(noise_keys[0], (B, H, W), jnp.float32)
    n2 = jax.random.normal(noise_keys[1], (B, H, W), jnp.float32)
    n3 = jax.random.normal(noise_keys[2], (B, H, W), jnp.float32)

    y1 = conv2demod_apply(params["conv1"], x, w, n1)    # Conv1 + noise + Act (fused)
    y2 = conv2demod_apply(params["conv2"], y1, w, n2)   # Conv2 + noise + Act (fused)

    if is_last:
        t = plain_conv1x1_apply(params["trgb"], y2)     # 1x1 conv + bias + Act
    else:
        t = conv2demod_apply(params["trgb"], y2, w, n3) # Conv2Demod 1x1 + noise + Act
    rgb_c = rgb.shape[-1]
    rgb = rgb + t[..., :rgb_c]                          # slice lane-padded slab

    c2_out = params["conv2"]["weight"].shape[0]
    x_out = y2[..., :c2_out]
    return (jnp.transpose(x_out, (0, 3, 1, 2)),
            jnp.transpose(rgb, (0, 3, 1, 2)))


# ----------------------------------------------------------------------------
# Deterministic parameter initialization (shapes follow the PyTorch __init__)
# ----------------------------------------------------------------------------
def _xavier_normal(key, shape, fan_in, fan_out):
    std = (2.0 / (fan_in + fan_out)) ** 0.5
    return std * jax.random.normal(key, shape, jnp.float32)


def init_conv2demod(key, in_c, out_c, z_dim, ksize):
    k1, k2, k3 = jax.random.split(key, 3)
    return {
        "weight": _xavier_normal(k1, (out_c, in_c, ksize, ksize),
                                 in_c * ksize * ksize, out_c * ksize * ksize),
        "A_w": jax.random.normal(k2, (in_c, z_dim), jnp.float32) / jnp.sqrt(z_dim),
        "A_b": 0.01 * jax.random.normal(k3, (in_c,), jnp.float32),
        "B": jnp.zeros((out_c,), jnp.float32),
    }


def init_blockg(key, in_c, out_c, rgb_c, latent, is_last=False):
    k1, k2, k3 = jax.random.split(key, 3)
    params = {
        "conv1": init_conv2demod(k1, in_c, in_c, latent, 3),
        "conv2": init_conv2demod(k2, in_c, out_c, latent, 3),
    }
    if is_last:
        kw, _ = jax.random.split(k3)
        params["trgb"] = {
            "weight": _xavier_normal(kw, (rgb_c, out_c, 1, 1), out_c, rgb_c),
            "bias": jnp.zeros((rgb_c,), jnp.float32),
        }
    else:
        params["trgb"] = init_conv2demod(k3, out_c, rgb_c, latent, 1)
    return params


# ----------------------------------------------------------------------------
if __name__ == "__main__":
    key = jax.random.PRNGKey(0)
    B, res_in, res_out = 2, 8, 16
    Cin, Cout, Crgb, latent = 4, 4, 3, 8

    keys = jax.random.split(key, 8)
    params = init_blockg(keys[0], Cin, Cout, Crgb, latent, is_last=False)

    x = jax.random.normal(keys[1], (B, Cin, res_in, res_in), jnp.float32)
    rgb = jax.random.normal(keys[2], (B, Crgb, res_in, res_in), jnp.float32)
    w = jax.random.normal(keys[3], (B, latent), jnp.float32)
    noise_keys = (keys[4], keys[5], keys[6])

    # main path: upsample x2, Conv2Demod tRGB
    fwd = functools.partial(blockg_forward, res_in=res_in, res_out=res_out,
                            is_last=False)
    x_out, rgb_out = jax.jit(fwd)(params, x, rgb, w, noise_keys)
    jax.block_until_ready((x_out, rgb_out))
    assert x_out.shape == (B, Cout, res_out, res_out)
    assert rgb_out.shape == (B, Crgb, res_out, res_out)

    # also exercise the is_last branch (plain 1x1 tRGB, no upsample)
    params_last = init_blockg(keys[7], Cin, Cout, Crgb, latent, is_last=True)
    fwd_last = functools.partial(blockg_forward, res_in=res_in, res_out=res_in,
                                 is_last=True)
    x2, rgb2 = jax.jit(fwd_last)(params_last, x, rgb, w, noise_keys)
    jax.block_until_ready((x2, rgb2))
    assert x2.shape == (B, Cout, res_in, res_in)
    assert rgb2.shape == (B, Crgb, res_in, res_in)

    print("KERNEL_OK")
</pallas_src>

<mosaic_0001>
module attributes {stable_mosaic.version = 11 : i64} {
  func.func @kernel(%arg0: i32, %arg1: i32, %arg2: i32, %arg3: i32, %arg4: memref<1x18x18x128xbf16, #tpu.memory_space<vmem>>, %arg5: memref<1x9x128x128xbf16, #tpu.memory_space<vmem>>, %arg6: memref<1x16x16x128xf32, #tpu.memory_space<vmem>>, %arg7: memref<256x128xf32, #tpu.memory_space<vmem>>) attributes {dimension_semantics = [#tpu.dimension_semantics<parallel>, #tpu.dimension_semantics<parallel>, #tpu.dimension_semantics<parallel>, #tpu.dimension_semantics<arbitrary>], iteration_bounds = array<i64: 2, 1, 1, 1>, scalar_prefetch = 0 : i64, scratch_operands = 1 : i64, tpu.core_type = #tpu.core_type<tc>, window_params = [{transform_indices = @transform_0, window_bounds = array<i64: 1, 18, 18, 128>}, {transform_indices = @transform_1, window_bounds = array<i64: 1, 9, 128, 128>}, {transform_indices = @transform_2, window_bounds = array<i64: 1, 16, 16, 128>}]} {
    %c0_i32 = arith.constant 0 : i32
    %0 = arith.cmpi eq, %arg3, %c0_i32 : i32
    %1 = arith.extui %0 : i1 to i32
    %c0_i32_0 = arith.constant 0 : i32
    %2 = arith.cmpi ne, %1, %c0_i32_0 : i32
    scf.if %2 {
      %cst_78 = arith.constant 0.000000e+00 : f32
      %71 = vector.broadcast %cst_78 : f32 to vector<256x128xf32>
      %c0_79 = arith.constant 0 : index
      %c0_80 = arith.constant 0 : index
      %72 = vector.load %arg7[%c0_79, %c0_80] : memref<256x128xf32, #tpu.memory_space<vmem>>, vector<256x128xf32>
      tpu.vector_store %arg7[%c0_79, %c0_80], %71 {strides = array<i32>} : memref<256x128xf32, #tpu.memory_space<vmem>>, vector<256x128xf32>,
    } else {
    }
    %c0 = arith.constant 0 : index
    %c0_1 = arith.constant 0 : index
    %3 = vector.load %arg7[%c0, %c0_1] : memref<256x128xf32, #tpu.memory_space<vmem>>, vector<256x128xf32>
    %c0_2 = arith.constant 0 : index
    %c0_3 = arith.constant 0 : index
    %c0_4 = arith.constant 0 : index
    %c0_5 = arith.constant 0 : index
    %4 = vector.load %arg4[%c0_2, %c0_3, %c0_4, %c0_5] : memref<1x18x18x128xbf16, #tpu.memory_space<vmem>>, vector<1x16x16x128xbf16>
    %5 = vector.shape_cast %4 : vector<1x16x16x128xbf16> to vector<16x16x128xbf16>
    %6 = vector.shape_cast %5 : vector<16x16x128xbf16> to vector<256x128xbf16>
    %c0_6 = arith.constant 0 : index
    %c0_7 = arith.constant 0 : index
    %c0_8 = arith.constant 0 : index
    %c0_9 = arith.constant 0 : index
    %7 = vector.load %arg5[%c0_6, %c0_7, %c0_8, %c0_9] : memref<1x9x128x128xbf16, #tpu.memory_space<vmem>>, vector<1x1x128x128xbf16>
    %8 = vector.shape_cast %7 : vector<1x1x128x128xbf16> to vector<128x128xbf16>
    %cst = arith.constant dense<0.000000e+00> : vector<256x128xf32>
    %9 = tpu.matmul %6, %8, %cst {dimension_numbers = #tpu.dot_dimension_numbers<[1], [0], [0], [1], [0, 0, 1, 1], [], []>} : vector<256x128xbf16>, vector<128x128xbf16>, vector<256x128xf32> -> vector<256x128xf32>
    %10 = arith.addf %3, %9 : vector<256x128xf32>
    %c0_10 = arith.constant 0 : index
    %c0_11 = arith.constant 0 : index
    %c1 = arith.constant 1 : index
    %c0_12 = arith.constant 0 : index
    %11 = vector.load %arg4[%c0_10, %c0_11, %c1, %c0_12] : memref<1x18x18x128xbf16, #tpu.memory_space<vmem>>, vector<1x16x16x128xbf16>
    %12 = vector.shape_cast %11 : vector<1x16x16x128xbf16> to vector<16x16x128xbf16>
    %13 = vector.shape_cast %12 : vector<16x16x128xbf16> to vector<256x128xbf16>
    %c0_13 = arith.constant 0 : index
    %c1_14 = arith.constant 1 : index
    %c0_15 = arith.constant 0 : index
    %c0_16 = arith.constant 0 : index
    %14 = vector.load %arg5[%c0_13, %c1_14, %c0_15, %c0_16] : memref<1x9x128x128xbf16, #tpu.memory_space<vmem>>, vector<1x1x128x128xbf16>
    %15 = vector.shape_cast %14 : vector<1x1x128x128xbf16> to vector<128x128xbf16>
    %cst_17 = arith.constant dense<0.000000e+00> : vector<256x128xf32>
    %16 = tpu.matmul %13, %15, %cst_17 {dimension_numbers = #tpu.dot_dimension_numbers<[1], [0], [0], [1], [0, 0, 1, 1], [], []>} : vector<256x128xbf16>, vector<128x128xbf16>, vector<256x128xf32> -> vector<256x128xf32>
    %17 = arith.addf %10, %16 : vector<256x128xf32>
    %c0_18 = arith.constant 0 : index
    %c0_19 = arith.constant 0 : index
    %c2 = arith.constant 2 : index
    %c0_20 = arith.constant 0 : index
    %18 = vector.load %arg4[%c0_18, %c0_19, %c2, %c0_20] : memref<1x18x18x128xbf16, #tpu.memory_space<vmem>>, vector<1x16x16x128xbf16>
    %19 = vector.shape_cast %18 : vector<1x16x16x128xbf16> to vector<16x16x128xbf16>
    %20 = vector.shape_cast %19 : vector<16x16x128xbf16> to vector<256x128xbf16>
    %c0_21 = arith.constant 0 : index
    %c2_22 = arith.constant 2 : index
    %c0_23 = arith.constant 0 : index
    %c0_24 = arith.constant 0 : index
    %21 = vector.load %arg5[%c0_21, %c2_22, %c0_23, %c0_24] : memref<1x9x128x128xbf16, #tpu.memory_space<vmem>>, vector<1x1x128x128xbf16>
    %22 = vector.shape_cast %21 : vector<1x1x128x128xbf16> to vector<128x128xbf16>
    %cst_25 = arith.constant dense<0.000000e+00> : vector<256x128xf32>
    %23 = tpu.matmul %20, %22, %cst_25 {dimension_numbers = #tpu.dot_dimension_numbers<[1], [0], [0], [1], [0, 0, 1, 1], [], []>} : vector<256x128xbf16>, vector<128x128xbf16>, vector<256x128xf32> -> vector<256x128xf32>
    %24 = arith.addf %17, %23 : vector<256x128xf32>
    %c0_26 = arith.constant 0 : index
    %c1_27 = arith.constant 1 : index
    %c0_28 = arith.constant 0 : index
    %c0_29 = arith.constant 0 : index
    %25 = vector.load %arg4[%c0_26, %c1_27, %c0_28, %c0_29] : memref<1x18x18x128xbf16, #tpu.memory_space<vmem>>, vector<1x16x16x128xbf16>
    %26 = vector.shape_cast %25 : vector<1x16x16x128xbf16> to vector<16x16x128xbf16>
    %27 = vector.shape_cast %26 : vector<16x16x128xbf16> to vector<256x128xbf16>
    %c0_30 = arith.constant 0 : index
    %c3 = arith.constant 3 : index
    %c0_31 = arith.constant 0 : index
    %c0_32 = arith.constant 0 : index
    %28 = vector.load %arg5[%c0_30, %c3, %c0_31, %c0_32] : memref<1x9x128x128xbf16, #tpu.memory_space<vmem>>, vector<1x1x128x128xbf16>
    %29 = vector.shape_cast %28 : vector<1x1x128x128xbf16> to vector<128x128xbf16>
    %cst_33 = arith.constant dense<0.000000e+00> : vector<256x128xf32>
    %30 = tpu.matmul %27, %29, %cst_33 {dimension_numbers = #tpu.dot_dimension_numbers<[1], [0], [0], [1], [0, 0, 1, 1], [], []>} : vector<256x128xbf16>, vector<128x128xbf16>, vector<256x128xf32> -> vector<256x128xf32>
    %31 = arith.addf %24, %30 : vector<256x128xf32>
    %c0_34 = arith.constant 0 : index
    %c1_35 = arith.constant 1 : index
    %c1_36 = arith.constant 1 : index
    %c0_37 = arith.constant 0 : index
    %32 = vector.load %arg4[%c0_34, %c1_35, %c1_36, %c0_37] : memref<1x18x18x128xbf16, #tpu.memory_space<vmem>>, vector<1x16x16x128xbf16>
    %33 = vector.shape_cast %32 : vector<1x16x16x128xbf16> to vector<16x16x128xbf16>
    %34 = vector.shape_cast %33 : vector<16x16x128xbf16> to vector<256x128xbf16>
    %c0_38 = arith.constant 0 : index
    %c4 = arith.constant 4 : index
    %c0_39 = arith.constant 0 : index
    %c0_40 = arith.constant 0 : index
    %35 = vector.load %arg5[%c0_38, %c4, %c0_39, %c0_40] : memref<1x9x128x128xbf16, #tpu.memory_space<vmem>>, vector<1x1x128x128xbf16>
    %36 = vector.shape_cast %35 : vector<1x1x128x128xbf16> to vector<128x128xbf16>
    %cst_41 = arith.constant dense<0.000000e+00> : vector<256x128xf32>
    %37 = tpu.matmul %34, %36, %cst_41 {dimension_numbers = #tpu.dot_dimension_numbers<[1], [0], [0], [1], [0, 0, 1, 1], [], []>} : vector<256x128xbf16>, vector<128x128xbf16>, vector<256x128xf32> -> vector<256x128xf32>
    %38 = arith.addf %31, %37 : vector<256x128xf32>
    %c0_42 = arith.constant 0 : index
    %c1_43 = arith.constant 1 : index
    %c2_44 = arith.constant 2 : index
    %c0_45 = arith.constant 0 : index
    %39 = vector.load %arg4[%c0_42, %c1_43, %c2_44, %c0_45] : memref<1x18x18x128xbf16, #tpu.memory_space<vmem>>, vector<1x16x16x128xbf16>
    %40 = vector.shape_cast %39 : vector<1x16x16x128xbf16> to vector<16x16x128xbf16>
    %41 = vector.shape_cast %40 : vector<16x16x128xbf16> to vector<256x128xbf16>
    %c0_46 = arith.constant 0 : index
    %c5 = arith.constant 5 : index
    %c0_47 = arith.constant 0 : index
    %c0_48 = arith.constant 0 : index
    %42 = vector.load %arg5[%c0_46, %c5, %c0_47, %c0_48] : memref<1x9x128x128xbf16, #tpu.memory_space<vmem>>, vector<1x1x128x128xbf16>
    %43 = vector.shape_cast %42 : vector<1x1x128x128xbf16> to vector<128x128xbf16>
    %cst_49 = arith.constant dense<0.000000e+00> : vector<256x128xf32>
    %44 = tpu.matmul %41, %43, %cst_49 {dimension_numbers = #tpu.dot_dimension_numbers<[1], [0], [0], [1], [0, 0, 1, 1], [], []>} : vector<256x128xbf16>, vector<128x128xbf16>, vector<256x128xf32> -> vector<256x128xf32>
    %45 = arith.addf %38, %44 : vector<256x128xf32>
    %c0_50 = arith.constant 0 : index
    %c2_51 = arith.constant 2 : index
    %c0_52 = arith.constant 0 : index
    %c0_53 = arith.constant 0 : index
    %46 = vector.load %arg4[%c0_50, %c2_51, %c0_52, %c0_53] : memref<1x18x18x128xbf16, #tpu.memory_space<vmem>>, vector<1x16x16x128xbf16>
    %47 = vector.shape_cast %46 : vector<1x16x16x128xbf16> to vector<16x16x128xbf16>
    %48 = vector.shape_cast %47 : vector<16x16x128xbf16> to vector<256x128xbf16>
    %c0_54 = arith.constant 0 : index
    %c6 = arith.constant 6 : index
    %c0_55 = arith.constant 0 : index
    %c0_56 = arith.constant 0 : index
    %49 = vector.load %arg5[%c0_54, %c6, %c0_55, %c0_56] : memref<1x9x128x128xbf16, #tpu.memory_space<vmem>>, vector<1x1x128x128xbf16>
    %50 = vector.shape_cast %49 : vector<1x1x128x128xbf16> to vector<128x128xbf16>
    %cst_57 = arith.constant dense<0.000000e+00> : vector<256x128xf32>
    %51 = tpu.matmul %48, %50, %cst_57 {dimension_numbers = #tpu.dot_dimension_numbers<[1], [0], [0], [1], [0, 0, 1, 1], [], []>} : vector<256x128xbf16>, vector<128x128xbf16>, vector<256x128xf32> -> vector<256x128xf32>
    %52 = arith.addf %45, %51 : vector<256x128xf32>
    %c0_58 = arith.constant 0 : index
    %c2_59 = arith.constant 2 : index
    %c1_60 = arith.constant 1 : index
    %c0_61 = arith.constant 0 : index
    %53 = vector.load %arg4[%c0_58, %c2_59, %c1_60, %c0_61] : memref<1x18x18x128xbf16, #tpu.memory_space<vmem>>, vector<1x16x16x128xbf16>
    %54 = vector.shape_cast %53 : vector<1x16x16x128xbf16> to vector<16x16x128xbf16>
    %55 = vector.shape_cast %54 : vector<16x16x128xbf16> to vector<256x128xbf16>
    %c0_62 = arith.constant 0 : index
    %c7 = arith.constant 7 : index
    %c0_63 = arith.constant 0 : index
    %c0_64 = arith.constant 0 : index
    %56 = vector.load %arg5[%c0_62, %c7, %c0_63, %c0_64] : memref<1x9x128x128xbf16, #tpu.memory_space<vmem>>, vector<1x1x128x128xbf16>
    %57 = vector.shape_cast %56 : vector<1x1x128x128xbf16> to vector<128x128xbf16>
    %cst_65 = arith.constant dense<0.000000e+00> : vector<256x128xf32>
    %58 = tpu.matmul %55, %57, %cst_65 {dimension_numbers = #tpu.dot_dimension_numbers<[1], [0], [0], [1], [0, 0, 1, 1], [], []>} : vector<256x128xbf16>, vector<128x128xbf16>, vector<256x128xf32> -> vector<256x128xf32>
    %59 = arith.addf %52, %58 : vector<256x128xf32>
    %c0_66 = arith.constant 0 : index
    %c2_67 = arith.constant 2 : index
    %c2_68 = arith.constant 2 : index
    %c0_69 = arith.constant 0 : index
    %60 = vector.load %arg4[%c0_66, %c2_67, %c2_68, %c0_69] : memref<1x18x18x128xbf16, #tpu.memory_space<vmem>>, vector<1x16x16x128xbf16>
    %61 = vector.shape_cast %60 : vector<1x16x16x128xbf16> to vector<16x16x128xbf16>
    %62 = vector.shape_cast %61 : vector<16x16x128xbf16> to vector<256x128xbf16>
    %c0_70 = arith.constant 0 : index
    %c8 = arith.constant 8 : index
    %c0_71 = arith.constant 0 : index
    %c0_72 = arith.constant 0 : index
    %63 = vector.load %arg5[%c0_70, %c8, %c0_71, %c0_72] : memref<1x9x128x128xbf16, #tpu.memory_space<vmem>>, vector<1x1x128x128xbf16>
    %64 = vector.shape_cast %63 : vector<1x1x128x128xbf16> to vector<128x128xbf16>
    %cst_73 = arith.constant dense<0.000000e+00> : vector<256x128xf32>
    %65 = tpu.matmul %62, %64, %cst_73 {dimension_numbers = #tpu.dot_dimension_numbers<[1], [0], [0], [1], [0, 0, 1, 1], [], []>} : vector<256x128xbf16>, vector<128x128xbf16>, vector<256x128xf32> -> vector<256x128xf32>
    %66 = arith.addf %59, %65 : vector<256x128xf32>
    %c0_74 = arith.constant 0 : index
    %c0_75 = arith.constant 0 : index
    %67 = vector.load %arg7[%c0_74, %c0_75] : memref<256x128xf32, #tpu.memory_space<vmem>>, vector<256x128xf32>
    tpu.vector_store %arg7[%c0_74, %c0_75], %66 {strides = array<i32>} : memref<256x128xf32, #tpu.memory_space<vmem>>, vector<256x128xf32>,
    %c0_i32_76 = arith.constant 0 : i32
    %68 = arith.cmpi eq, %arg3, %c0_i32_76 : i32
    %69 = arith.extui %68 : i1 to i32
    %c0_i32_77 = arith.constant 0 : i32
    %70 = arith.cmpi ne, %69, %c0_i32_77 : i32
    scf.if %70 {
      %c0_78 = arith.constant 0 : index
      %c0_79 = arith.constant 0 : index
      %71 = vector.load %arg7[%c0_78, %c0_79] : memref<256x128xf32, #tpu.memory_space<vmem>>, vector<256x128xf32>
      %cst_80 = arith.constant 0.000000e+00 : f32
      %72 = vector.broadcast %cst_80 : f32 to vector<256x128xf32>
      %73 = arith.cmpf oge, %71, %72 : vector<256x128xf32>
      %cst_81 = arith.constant 2.000000e-01 : f32
      %74 = vector.broadcast %cst_81 : f32 to vector<256x128xf32>
      %75 = arith.mulf %74, %71 : vector<256x128xf32>
      %76 = arith.select %73, %71, %75 : vector<256x128xi1>, vector<256x128xf32>
      %77 = vector.shape_cast %76 : vector<256x128xf32> to vector<16x16x128xf32>
      %c0_82 = arith.constant 0 : index
      %c0_83 = arith.constant 0 : index
      %c0_84 = arith.constant 0 : index
      %c0_85 = arith.constant 0 : index
      %78 = vector.load %arg6[%c0_82, %c0_83, %c0_84, %c0_85] : memref<1x16x16x128xf32, #tpu.memory_space<vmem>>, vector<1x16x16x128xf32>
      %79 = vector.shape_cast %78 : vector<1x16x16x128xf32> to vector<16x16x128xf32>
      %80 = vector.shape_cast %77 : vector<16x16x128xf32> to vector<1x16x16x128xf32>
      tpu.vector_store %arg6[%c0_82, %c0_83, %c0_84, %c0_85], %80 {strides = array<i32>} : memref<1x16x16x128xf32, #tpu.memory_space<vmem>>, vector<1x16x16x128xf32>,
    } else {
    }
    return
  }
  func.func @transform_0(%arg0: i32, %arg1: i32, %arg2: i32, %arg3: i32) -> (i32, i32, i32, i32) {
    %c1_i32 = arith.constant 1 : i32
    %0 = arith.muli %arg0, %c1_i32 : i32
    %1 = arith.addi %0, %arg1 : i32
    %c0_i32 = arith.constant 0 : i32
    %c0_i32_0 = arith.constant 0 : i32
    %c0_i32_1 = arith.constant 0 : i32
    return %1, %c0_i32, %c0_i32_0, %arg3 : i32, i32, i32, i32
  }
  func.func @transform_1(%arg0: i32, %arg1: i32, %arg2: i32, %arg3: i32) -> (i32, i32, i32, i32) {
    %c0_i32 = arith.constant 0 : i32
    %c0_i32_0 = arith.constant 0 : i32
    return %arg0, %c0_i32, %arg3, %arg2 : i32, i32, i32, i32
  }
  func.func @transform_2(%arg0: i32, %arg1: i32, %arg2: i32, %arg3: i32) -> (i32, i32, i32, i32) {
    %c0_i32 = arith.constant 0 : i32
    %c0_i32_0 = arith.constant 0 : i32
    return %arg0, %arg1, %c0_i32, %arg2 : i32, i32, i32, i32
  }
}

module attributes {stable_mosaic.version = 11 : i64} {
  func.func @kernel(%arg0: i32, %arg1: i32, %arg2: i32, %arg3: i32, %arg4: memref<1x16x16x128xbf16, #tpu.memory_space<vmem>>, %arg5: memref<1x1x128x128xbf16, #tpu.memory_space<vmem>>, %arg6: memref<1x16x16x128xf32, #tpu.memory_space<vmem>>, %arg7: memref<256x128xf32, #tpu.memory_space<vmem>>) attributes {dimension_semantics = [#tpu.dimension_semantics<parallel>, #tpu.dimension_semantics<parallel>, #tpu.dimension_semantics<parallel>, #tpu.dimension_semantics<arbitrary>], iteration_bounds = array<i64: 2, 1, 1, 1>, scalar_prefetch = 0 : i64, scratch_operands = 1 : i64, tpu.core_type = #tpu.core_type<tc>, window_params = [{transform_indices = @transform_0, window_bounds = array<i64: 1, 16, 16, 128>}, {transform_indices = @transform_1, window_bounds = array<i64: 1, 1, 128, 128>}, {transform_indices = @transform_2, window_bounds = array<i64: 1, 16, 16, 128>}]} {
    %c0_i32 = arith.constant 0 : i32
    %0 = arith.cmpi eq, %arg3, %c0_i32 : i32
    %1 = arith.extui %0 : i1 to i32
    %c0_i32_0 = arith.constant 0 : i32
    %2 = arith.cmpi ne, %1, %c0_i32_0 : i32
    scf.if %2 {
      %cst_14 = arith.constant 0.000000e+00 : f32
      %15 = vector.broadcast %cst_14 : f32 to vector<256x128xf32>
      %c0_15 = arith.constant 0 : index
      %c0_16 = arith.constant 0 : index
      %16 = vector.load %arg7[%c0_15, %c0_16] : memref<256x128xf32, #tpu.memory_space<vmem>>, vector<256x128xf32>
      tpu.vector_store %arg7[%c0_15, %c0_16], %15 {strides = array<i32>} : memref<256x128xf32, #tpu.memory_space<vmem>>, vector<256x128xf32>,
    } else {
    }
    %c0 = arith.constant 0 : index
    %c0_1 = arith.constant 0 : index
    %3 = vector.load %arg7[%c0, %c0_1] : memref<256x128xf32, #tpu.memory_space<vmem>>, vector<256x128xf32>
    %c0_2 = arith.constant 0 : index
    %c0_3 = arith.constant 0 : index
    %c0_4 = arith.constant 0 : index
    %c0_5 = arith.constant 0 : index
    %4 = vector.load %arg4[%c0_2, %c0_3, %c0_4, %c0_5] : memref<1x16x16x128xbf16, #tpu.memory_space<vmem>>, vector<1x16x16x128xbf16>
    %5 = vector.shape_cast %4 : vector<1x16x16x128xbf16> to vector<16x16x128xbf16>
    %6 = vector.shape_cast %5 : vector<16x16x128xbf16> to vector<256x128xbf16>
    %c0_6 = arith.constant 0 : index
    %c0_7 = arith.constant 0 : index
    %c0_8 = arith.constant 0 : index
    %c0_9 = arith.constant 0 : index
    %7 = vector.load %arg5[%c0_6, %c0_7, %c0_8, %c0_9] : memref<1x1x128x128xbf16, #tpu.memory_space<vmem>>, vector<1x1x128x128xbf16>
    %8 = vector.shape_cast %7 : vector<1x1x128x128xbf16> to vector<128x128xbf16>
    %cst = arith.constant dense<0.000000e+00> : vector<256x128xf32>
    %9 = tpu.matmul %6, %8, %cst {dimension_numbers = #tpu.dot_dimension_numbers<[1], [0], [0], [1], [0, 0, 1, 1], [], []>} : vector<256x128xbf16>, vector<128x128xbf16>, vector<256x128xf32> -> vector<256x128xf32>
    %10 = arith.addf %3, %9 : vector<256x128xf32>
    %c0_10 = arith.constant 0 : index
    %c0_11 = arith.constant 0 : index
    %11 = vector.load %arg7[%c0_10, %c0_11] : memref<256x128xf32, #tpu.memory_space<vmem>>, vector<256x128xf32>
    tpu.vector_store %arg7[%c0_10, %c0_11], %10 {strides = array<i32>} : memref<256x128xf32, #tpu.memory_space<vmem>>, vector<256x128xf32>,
    %c0_i32_12 = arith.constant 0 : i32
    %12 = arith.cmpi eq, %arg3, %c0_i32_12 : i32
    %13 = arith.extui %12 : i1 to i32
    %c0_i32_13 = arith.constant 0 : i32
    %14 = arith.cmpi ne, %13, %c0_i32_13 : i32
    scf.if %14 {
      %c0_14 = arith.constant 0 : index
      %c0_15 = arith.constant 0 : index
      %15 = vector.load %arg7[%c0_14, %c0_15] : memref<256x128xf32, #tpu.memory_space<vmem>>, vector<256x128xf32>
      %cst_16 = arith.constant 0.000000e+00 : f32
      %16 = vector.broadcast %cst_16 : f32 to vector<256x128xf32>
      %17 = arith.cmpf oge, %15, %16 : vector<256x128xf32>
      %cst_17 = arith.constant 2.000000e-01 : f32
      %18 = vector.broadcast %cst_17 : f32 to vector<256x128xf32>
      %19 = arith.mulf %18, %15 : vector<256x128xf32>
      %20 = arith.select %17, %15, %19 : vector<256x128xi1>, vector<256x128xf32>
      %21 = vector.shape_cast %20 : vector<256x128xf32> to vector<16x16x128xf32>
      %c0_18 = arith.constant 0 : index
      %c0_19 = arith.constant 0 : index
      %c0_20 = arith.constant 0 : index
      %c0_21 = arith.constant 0 : index
      %22 = vector.load %arg6[%c0_18, %c0_19, %c0_20, %c0_21] : memref<1x16x16x128xf32, #tpu.memory_space<vmem>>, vector<1x16x16x128xf32>
      %23 = vector.shape_cast %22 : vector<1x16x16x128xf32> to vector<16x16x128xf32>
      %24 = vector.shape_cast %21 : vector<16x16x128xf32> to vector<1x16x16x128xf32>
      tpu.vector_store %arg6[%c0_18, %c0_19, %c0_20, %c0_21], %24 {strides = array<i32>} : memref<1x16x16x128xf32, #tpu.memory_space<vmem>>, vector<1x16x16x128xf32>,
    } else {
    }
    return
  }
  func.func @transform_0(%arg0: i32, %arg1: i32, %arg2: i32, %arg3: i32) -> (i32, i32, i32, i32) {
    %c1_i32 = arith.constant 1 : i32
    %0 = arith.muli %arg0, %c1_i32 : i32
    %1 = arith.addi %0, %arg1 : i32
    %c0_i32 = arith.constant 0 : i32
    %c0_i32_0 = arith.constant 0 : i32
    %c0_i32_1 = arith.constant 0 : i32
    return %1, %c0_i32, %c0_i32_0, %arg3 : i32, i32, i32, i32
  }
  func.func @transform_1(%arg0: i32, %arg1: i32, %arg2: i32, %arg3: i32) -> (i32, i32, i32, i32) {
    %c0_i32 = arith.constant 0 : i32
    %c0_i32_0 = arith.constant 0 : i32
    return %arg0, %c0_i32, %arg3, %arg2 : i32, i32, i32, i32
  }
  func.func @transform_2(%arg0: i32, %arg1: i32, %arg2: i32, %arg3: i32) -> (i32, i32, i32, i32) {
    %c0_i32 = arith.constant 0 : i32
    %c0_i32_0 = arith.constant 0 : i32
    return %arg0, %arg1, %c0_i32, %arg2 : i32, i32, i32, i32
  }
}

</mosaic_0001>

<llo_original>
// kernel: blockg_forward.5
$region0: #{blockg_forward.5}
  #allocation0 [shape = 'u32[]', space=smem, size = 0x4, offset = 0x4, fixed_abs, tag = 'smem constant byte address 0x4 - core index']
  #allocation1 [shape = 'u32[144,128]{1,0:T(1,128)}', space=vmem, size = 0x12000, scoped, tag = 'internal scratch']
  #allocation2 [shape = 'f32[256,128]{1,0:T(8,128)}', space=vmem, size = 0x20000, scoped, tag = 'scratch operand']
  %s0 = inlined_call_operand.vmem [shape: bf16[2,16,16,128], index: 0, kind: input, shape index: {}]
  %s1 = inlined_call_operand.vmem [shape: bf16[2,1,128,128], index: 1, kind: input, shape index: {}]
  %s2 = inlined_call_operand.vmem [shape: f32[2,16,16,128], index: 2, kind: output, shape index: {}]
  %s3 = sld [smem:[#allocation0]]
  $region49: #{blockg_forward.5} parent=0
    _
  %s5 = ssub.s32 1, %s3
  %s6 = scalar_select 0, %s5, %s3
  loop: start=0, step=1, limit=4
  $region2: #{blockg_forward.5} parent=0 // loop_pre_header
    _
  $region3: #{blockg_forward.5} parent=0 // loop_header
    %s8 = sphi 0, %s12
    %p9 = scmp.ge.s32.totalorder %s8, 4
    %s15 = sphi 0, %s41
    %s16 = sphi 0, %s37
    %s17 = sphi 0, %s33
    %s18 = sphi 0, %s29
    %s19 = sphi 0, %s15
    %s20 = sphi 0, %s16
    %s21 = sphi 0, %s17
    %s22 = sphi 0, %s18
    %s23 = sphi 0, %s19
    %s24 = sphi 0, %s20
    %s25 = sphi 0, %s21
    %s26 = sphi 0, %s22
    %s48 = sphi 0, %s50
    %s51 = sphi 0, %s48
    %s52 = sphi 0, %s51
    %s68 = sphi 0, %s52
    %s78 = sphi 0, %s80
    %s81 = sphi 0, %s78
    %s82 = sphi 0, %s81
    %s98 = sphi 0, %s82
    %s108 = sphi 0, %s110
    %s111 = sphi 0, %s108
    %s112 = sphi 0, %s111
    %s128 = sphi 0, %s112
  $region4: #{blockg_forward.5} parent=0 // loop_header_branch
    %11 = sbr.rel (%p9) target = $region8
  $region5: #{blockg_forward.5} parent=0 // loop_body
    %s13 = ssub.s32 %s8, 1
    %s14 = ssub.s32 %s8, 2
    %s27 = sadd.s32 1, %s18
    %p28 = scmp.ge.s32.totalorder %s27, 1
    %s29 = scalar_select %p28, 0, %s27
    %s30 = sadd.s32 1, %s17
    %s31 = scalar_select %p28, %s30, %s17
    %p32 = scmp.ge.s32.totalorder %s31, 1
    %s33 = scalar_select %p32, 0, %s31
    %s34 = sadd.s32 1, %s16
    %s35 = scalar_select %p32, %s34, %s16
    %p36 = scmp.ge.s32.totalorder %s35, 1
    %s37 = scalar_select %p36, 0, %s35
    %s38 = sadd.s32 1, %s15
    %s39 = scalar_select %p36, %s38, %s15
    %p40 = scmp.ge.s32.totalorder %s39, 2
    %s41 = scalar_select %p40, 0, %s39
    %s42 = sadd.s32 %s15, %s16
    %s43 = sadd.s32 %s41, %s37
    %s44 = ssub.s32 %s42, %s43
    %s45 = ssub.s32 %s18, %s29
    %s46 = sor.u32 %s44, %s45
    %p47 = scmp.eq.s32.totalorder %s46, 0
    %s49 = sadd.s32 %s48, 1
    %s50 = scalar_select %p47, %s48, %s49
    %p53 = pneg %p47
    %p54 = scmp.eq.s32.totalorder %s8, 1
    %p55 = por %p53, %p54
    %p56 = scmp.ne.s32.totalorder %s48, %s51
    %p57 = scmp.eq.s32.totalorder %s8, 0
    %p58 = por %p56, %p57
    %p59 = scmp.ne.s32.totalorder %s48, %s51
    %p60 = scmp.eq.s32.totalorder %s13, 1
    %p61 = por %p59, %p60
    %p62 = scmp.ne.s32.totalorder %s51, %s52
    %p63 = scmp.eq.s32.totalorder %s13, 0
    %p64 = por %p62, %p63
    %p65 = scmp.ne.s32.totalorder %s51, %s52
    %p66 = scmp.eq.s32.totalorder %s14, 1
    %p67 = por %p65, %p66
    %p69 = scmp.ne.s32.totalorder %s52, %s68
    %p70 = scmp.eq.s32.totalorder %s14, 0
    %p71 = por %p69, %p70
    %s72 = ssub.s32 %s15, %s41
    %s73 = ssub.s32 %s18, %s29
    %s74 = sor.u32 %s72, %s73
    %s75 = ssub.s32 %s17, %s33
    %s76 = sor.u32 %s74, %s75
    %p77 = scmp.eq.s32.totalorder %s76, 0
    %s79 = sadd.s32 %s78, 1
    %s80 = scalar_select %p77, %s78, %s79
    %p83 = pneg %p77
    %p84 = scmp.eq.s32.totalorder %s8, 1
    %p85 = por %p83, %p84
    %p86 = scmp.ne.s32.totalorder %s78, %s81
    %p87 = scmp.eq.s32.totalorder %s8, 0
    %p88 = por %p86, %p87
    %p89 = scmp.ne.s32.totalorder %s78, %s81
    %p90 = scmp.eq.s32.totalorder %s13, 1
    %p91 = por %p89, %p90
    %p92 = scmp.ne.s32.totalorder %s81, %s82
    %p93 = scmp.eq.s32.totalorder %s13, 0
    %p94 = por %p92, %p93
    %p95 = scmp.ne.s32.totalorder %s81, %s82
    %p96 = scmp.eq.s32.totalorder %s14, 1
    %p97 = por %p95, %p96
    %p99 = scmp.ne.s32.totalorder %s82, %s98
    %p100 = scmp.eq.s32.totalorder %s14, 0
    %p101 = por %p99, %p100
    %s102 = ssub.s32 %s15, %s41
    %s103 = ssub.s32 %s16, %s37
    %s104 = sor.u32 %s102, %s103
    %s105 = ssub.s32 %s17, %s33
    %s106 = sor.u32 %s104, %s105
    %p107 = scmp.eq.s32.totalorder %s106, 0
    %s109 = sadd.s32 %s108, 1
    %s110 = scalar_select %p107, %s108, %s109
    %p113 = pneg %p107
    %p114 = scmp.eq.s32.totalorder %s8, 1
    %p115 = por %p113, %p114
    %p116 = scmp.ne.s32.totalorder %s108, %s111
    %p117 = scmp.eq.s32.totalorder %s8, 0
    %p118 = por %p116, %p117
    %p119 = scmp.ne.s32.totalorder %s108, %s111
    %p120 = scmp.eq.s32.totalorder %s13, 1
    %p121 = por %p119, %p120
    %p122 = scmp.ne.s32.totalorder %s111, %s112
    %p123 = scmp.eq.s32.totalorder %s13, 0
    %p124 = por %p122, %p123
    %p125 = scmp.ne.s32.totalorder %s111, %s112
    %p126 = scmp.eq.s32.totalorder %s14, 1
    %p127 = por %p125, %p126
    %p129 = scmp.ne.s32.totalorder %s112, %s128
    %p130 = scmp.eq.s32.totalorder %s14, 0
    %p131 = por %p129, %p130
    %p132 = scmp.le.s32.totalorder 1, %s8
    %p133 = scmp.lt.s32.totalorder %s8, 3
    %p134 = pnand %p132, %p133
    %p135 = pneg %p134
    // Predicated region
    $region9: #{blockg_forward.5} parent=5 // pred_check
      _
    $region10: #{blockg_forward.5} parent=5 // pred_check_branch
      %137 = sbr.rel (%p134) target = $region12
    $region11: #{blockg_forward.5} parent=5 // pred_region
      %s138 = ssub.s32 %s8, 1
    $region12: #{blockg_forward.5} parent=5 // pred_fallthru
      _
    %p139 = scmp.lt.s32.totalorder %s8, 2
    // Predicated region
    $region13: #{blockg_forward.5} parent=5 // pred_check
      %p140 = pneg %p139
    $region14: #{blockg_forward.5} parent=5 // pred_check_branch
      %142 = sbr.rel (%p140) target = $region16
    $region15: #{blockg_forward.5} parent=5 // pred_region
      // Predicated region
      $region17: #{blockg_forward.5} parent=15 // pred_check
        %p143 = pneg %p58
      $region18: #{blockg_forward.5} parent=15 // pred_check_branch
        %145 = sbr.rel (%p143) target = $region20
      $region19: #{blockg_forward.5} parent=15 // pred_region
        %s146 = sadd.s32 %s15, %s16
        %p147 = scmp.lt.s32.totalorder %s146, 1
        %s148 = scalar_select %p147, %s146, 1
        %p149 = scmp.lt.s32.totalorder %s18, 0
        %s150 = scalar_select %p149, %s18, 0
        %s151 = smul.addr %s148, 32
        %s152 = sadd.s32 %s150, %s151
        %s153 = smul.addr %s152, 4
        %s154 = scalar_lea.vmem %s0, %s153
        %s155 = sadd.s32 %s15, %s16
      $region20: #{blockg_forward.5} parent=15 // pred_fallthru
        _
      // Predicated region
      $region21: #{blockg_forward.5} parent=15 // pred_check
        %p156 = pneg %p88
      $region22: #{blockg_forward.5} parent=15 // pred_check_branch
        %158 = sbr.rel (%p156) target = $region24
      $region23: #{blockg_forward.5} parent=15 // pred_region
        %s159 = smul.u32 16, %s18
        %p160 = scmp.lt.s32.totalorder %s15, 1
        %s161 = scalar_select %p160, %s15, 1
        %p162 = scmp.lt.s32.totalorder %s159, 15
        %s163 = scalar_select %p162, %s159, 15
        %p164 = scmp.lt.s32.totalorder %s17, 0
        %s165 = scalar_select %p164, %s17, 0
        %s166 = sadd.s32 %s165, %s163
        %s167 = smul.addr %s161, 16
        %s168 = sadd.s32 %s166, %s167
        %s169 = smul.addr %s168, 4
        %s170 = scalar_lea.vmem %s1, %s169
        %s171 = smul.u32 16, %s18
      $region24: #{blockg_forward.5} parent=15 // pred_fallthru
        _
    $region16: #{blockg_forward.5} parent=5 // pred_fallthru
      _
    %p172 = scmp.le.s32.totalorder 1, %s8
    %p173 = scmp.lt.s32.totalorder %s8, 3
    %p174 = pnand %p172, %p173
    %p175 = pneg %p174
    // Predicated region
    $region25: #{blockg_forward.5} parent=5 // pred_check
      _
    $region26: #{blockg_forward.5} parent=5 // pred_check_branch
      %177 = sbr.rel (%p174) target = $region28
    $region27: #{blockg_forward.5} parent=5 // pred_region
      %s178 = ssub.s32 %s8, 1
      %s179 = sadd.s32 %s19, %s20
      %p180 = scmp.lt.s32.totalorder %s179, 1
      %s181 = scalar_select %p180, %s179, 1
      %p182 = scmp.lt.s32.totalorder %s22, 0
      %s183 = scalar_select %p182, %s22, 0
      %s184 = smul.addr %s181, 32
      %s185 = sadd.s32 %s183, %s184
      %s186 = smul.addr %s185, 4
      %s187 = scalar_lea.vmem %s0, %s186
      %p188 = pneg %p64
      %p189 = pneg %p61
      %s190 = smul.u32 16, %s22
      %p191 = scmp.lt.s32.totalorder %s19, 1
      %s192 = scalar_select %p191, %s19, 1
      %p193 = scmp.lt.s32.totalorder %s190, 15
      %s194 = scalar_select %p193, %s190, 15
      %p195 = scmp.lt.s32.totalorder %s21, 0
      %s196 = scalar_select %p195, %s21, 0
      %s197 = sadd.s32 %s196, %s194
      %s198 = smul.addr %s192, 16
      %s199 = sadd.s32 %s197, %s198
      %s200 = smul.addr %s199, 4
      %s201 = scalar_lea.vmem %s1, %s200
      %p202 = pneg %p94
      %p203 = pneg %p91
      %p204 = pneg %p124
      %p205 = pneg %p121
      %s206 = smul.u32 16, %s20
      %p207 = scmp.lt.s32.totalorder %s19, 1
      %s208 = scalar_select %p207, %s19, 1
      %p209 = scmp.lt.s32.totalorder %s206, 15
      %s210 = scalar_select %p209, %s206, 15
      %p211 = scmp.lt.s32.totalorder %s21, 0
      %s212 = scalar_select %p211, %s21, 0
      %s213 = smul.addr %s210, 2
      %s214 = sadd.s32 %s212, %s213
      %s215 = smul.addr %s208, 32
      %s216 = sadd.s32 %s214, %s215
      %s217 = smul.addr %s216, 8
      %s218 = scalar_lea.vmem %s2, %s217
      %s219 = sadd.s32 %s19, %s20
      %p220 = scmp.lt.s32.totalorder %s219, 1
      %s221 = scalar_select %p220, %s219, 1
      %p222 = scmp.lt.s32.totalorder %s22, 0
      %s223 = scalar_select %p222, %s22, 0
      %s224 = smul.addr %s221, 32
      %s225 = sadd.s32 %s223, %s224
      %s226 = smul.addr %s225, 4
      %s227 = scalar_lea.vmem %s0, %s226
      %s228 = sadd.s32 %s19, %s20
      %s229 = smul.u32 16, %s22
      %p230 = scmp.lt.s32.totalorder %s19, 1
      %s231 = scalar_select %p230, %s19, 1
      %p232 = scmp.lt.s32.totalorder %s229, 15
      %s233 = scalar_select %p232, %s229, 15
      %p234 = scmp.lt.s32.totalorder %s21, 0
      %s235 = scalar_select %p234, %s21, 0
      %s236 = sadd.s32 %s235, %s233
      %s237 = smul.addr %s231, 16
      %s238 = sadd.s32 %s236, %s237
      %s239 = smul.addr %s238, 4
      %s240 = scalar_lea.vmem %s1, %s239
      %s241 = smul.u32 16, %s22
      %s242 = smul.u32 16, %s20
      %p243 = scmp.lt.s32.totalorder %s19, 1
      %s244 = scalar_select %p243, %s19, 1
      %p245 = scmp.lt.s32.totalorder %s242, 15
      %s246 = scalar_select %p245, %s242, 15
      %p247 = scmp.lt.s32.totalorder %s21, 0
      %s248 = scalar_select %p247, %s21, 0
      %s249 = smul.addr %s246, 2
      %s250 = sadd.s32 %s248, %s249
      %s251 = smul.addr %s244, 32
      %s252 = sadd.s32 %s250, %s251
      %s253 = smul.addr %s252, 8
      %s254 = scalar_lea.vmem %s2, %s253
      %s255 = smul.u32 16, %s20
      %p257 = scmp.eq.s32.totalorder %s22, 0
      // Predicated region
      $region29: #{blockg_forward.5} parent=27 // pred_check
        %p258 = pneg %p257
      $region30: #{blockg_forward.5} parent=27 // pred_check_branch
        %260 = sbr.rel (%p258) target = $region32
      $region31: #{blockg_forward.5} parent=27 // pred_region
        %261 = vst [vmem:[#allocation2] sm:$0xff] 0.0
        %262 = vst [vmem:[#allocation2 + $0x8] sm:$0xff] 0.0
        %263 = vst [vmem:[#allocation2 + $0x10] sm:$0xff] 0.0
        %264 = vst [vmem:[#allocation2 + $0x18] sm:$0xff] 0.0
        %265 = vst [vmem:[#allocation2 + $0x20] sm:$0xff] 0.0
        %266 = vst [vmem:[#allocation2 + $0x28] sm:$0xff] 0.0
        %267 = vst [vmem:[#allocation2 + $0x30] sm:$0xff] 0.0
        %268 = vst [vmem:[#allocation2 + $0x38] sm:$0xff] 0.0
        %269 = vst [vmem:[#allocation2 + $0x40] sm:$0xff] 0.0
        %270 = vst [vmem:[#allocation2 + $0x48] sm:$0xff] 0.0
        %271 = vst [vmem:[#allocation2 + $0x50] sm:$0xff] 0.0
        %272 = vst [vmem:[#allocation2 + $0x58] sm:$0xff] 0.0
        %273 = vst [vmem:[#allocation2 + $0x60] sm:$0xff] 0.0
        %274 = vst [vmem:[#allocation2 + $0x68] sm:$0xff] 0.0
        %275 = vst [vmem:[#allocation2 + $0x70] sm:$0xff] 0.0
        %276 = vst [vmem:[#allocation2 + $0x78] sm:$0xff] 0.0
        %277 = vst [vmem:[#allocation2 + $0x80] sm:$0xff] 0.0
        %278 = vst [vmem:[#allocation2 + $0x88] sm:$0xff] 0.0
        %279 = vst [vmem:[#allocation2 + $0x90] sm:$0xff] 0.0
        %280 = vst [vmem:[#allocation2 + $0x98] sm:$0xff] 0.0
        %281 = vst [vmem:[#allocation2 + $0xa0] sm:$0xff] 0.0
        %282 = vst [vmem:[#allocation2 + $0xa8] sm:$0xff] 0.0
        %283 = vst [vmem:[#allocation2 + $0xb0] sm:$0xff] 0.0
        %284 = vst [vmem:[#allocation2 + $0xb8] sm:$0xff] 0.0
        %285 = vst [vmem:[#allocation2 + $0xc0] sm:$0xff] 0.0
        %286 = vst [vmem:[#allocation2 + $0xc8] sm:$0xff] 0.0
        %287 = vst [vmem:[#allocation2 + $0xd0] sm:$0xff] 0.0
        %288 = vst [vmem:[#allocation2 + $0xd8] sm:$0xff] 0.0
        %289 = vst [vmem:[#allocation2 + $0xe0] sm:$0xff] 0.0
        %290 = vst [vmem:[#allocation2 + $0xe8] sm:$0xff] 0.0
        %291 = vst [vmem:[#allocation2 + $0xf0] sm:$0xff] 0.0
        %292 = vst [vmem:[#allocation2 + $0xf8] sm:$0xff] 0.0
      $region32: #{blockg_forward.5} parent=27 // pred_fallthru
        _
      %v293 = vld [vmem:[#allocation2] sm:$0xff]
      %v294 = vld [vmem:[#allocation2 + $0x8] sm:$0xff]
      %v295 = vld [vmem:[#allocation2 + $0x10] sm:$0xff]
      %v296 = vld [vmem:[#allocation2 + $0x18] sm:$0xff]
      %v297 = vld [vmem:[#allocation2 + $0x20] sm:$0xff]
      %v298 = vld [vmem:[#allocation2 + $0x28] sm:$0xff]
      %v299 = vld [vmem:[#allocation2 + $0x30] sm:$0xff]
      %v300 = vld [vmem:[#allocation2 + $0x38] sm:$0xff]
      %v301 = vld [vmem:[#allocation2 + $0x40] sm:$0xff]
      %v302 = vld [vmem:[#allocation2 + $0x48] sm:$0xff]
      %v303 = vld [vmem:[#allocation2 + $0x50] sm:$0xff]
      %v304 = vld [vmem:[#allocation2 + $0x58] sm:$0xff]
      %v305 = vld [vmem:[#allocation2 + $0x60] sm:$0xff]
      %v306 = vld [vmem:[#allocation2 + $0x68] sm:$0xff]
      %v307 = vld [vmem:[#allocation2 + $0x70] sm:$0xff]
      %v308 = vld [vmem:[#allocation2 + $0x78] sm:$0xff]
      %v309 = vld [vmem:[#allocation2 + $0x80] sm:$0xff]
      %v310 = vld [vmem:[#allocation2 + $0x88] sm:$0xff]
      %v311 = vld [vmem:[#allocation2 + $0x90] sm:$0xff]
      %v312 = vld [vmem:[#allocation2 + $0x98] sm:$0xff]
      %v313 = vld [vmem:[#allocation2 + $0xa0] sm:$0xff]
      %v314 = vld [vmem:[#allocation2 + $0xa8] sm:$0xff]
      %v315 = vld [vmem:[#allocation2 + $0xb0] sm:$0xff]
      %v316 = vld [vmem:[#allocation2 + $0xb8] sm:$0xff]
      %v317 = vld [vmem:[#allocation2 + $0xc0] sm:$0xff]
      %v318 = vld [vmem:[#allocation2 + $0xc8] sm:$0xff]
      %v319 = vld [vmem:[#allocation2 + $0xd0] sm:$0xff]
      %v320 = vld [vmem:[#allocation2 + $0xd8] sm:$0xff]
      %v321 = vld [vmem:[#allocation2 + $0xe0] sm:$0xff]
      %v322 = vld [vmem:[#allocation2 + $0xe8] sm:$0xff]
      %v323 = vld [vmem:[#allocation2 + $0xf0] sm:$0xff]
      %v324 = vld [vmem:[#allocation2 + $0xf8] sm:$0xff]
      %v325 = vld [vmem:[%s227] sm:$0xf]
      %v326 = vld [vmem:[%s227 + $0x4] sm:$0xf]
      %v327 = vld [vmem:[%s227 + $0x8] sm:$0xf]
      %v328 = vld [vmem:[%s227 + $0xc] sm:$0xf]
      %v329 = vld [vmem:[%s227 + $0x10] sm:$0xf]
      %v330 = vld [vmem:[%s227 + $0x14] sm:$0xf]
      %v331 = vld [vmem:[%s227 + $0x18] sm:$0xf]
      %v332 = vld [vmem:[%s227 + $0x1c] sm:$0xf]
      %v333 = vld [vmem:[%s227 + $0x20] sm:$0xf]
      %v334 = vld [vmem:[%s227 + $0x24] sm:$0xf]
      %v335 = vld [vmem:[%s227 + $0x28] sm:$0xf]
      %v336 = vld [vmem:[%s227 + $0x2c] sm:$0xf]
      %v337 = vld [vmem:[%s227 + $0x30] sm:$0xf]
      %v338 = vld [vmem:[%s227 + $0x34] sm:$0xf]
      %v339 = vld [vmem:[%s227 + $0x38] sm:$0xf]
      %v340 = vld [vmem:[%s227 + $0x3c] sm:$0xf]
      %v341 = vld [vmem:[%s227 + $0x40] sm:$0xf]
      %v342 = vld [vmem:[%s227 + $0x44] sm:$0xf]
      %v343 = vld [vmem:[%s227 + $0x48] sm:$0xf]
      %v344 = vld [vmem:[%s227 + $0x4c] sm:$0xf]
      %v345 = vld [vmem:[%s227 + $0x50] sm:$0xf]
      %v346 = vld [vmem:[%s227 + $0x54] sm:$0xf]
      %v347 = vld [vmem:[%s227 + $0x58] sm:$0xf]
      %v348 = vld [vmem:[%s227 + $0x5c] sm:$0xf]
      %v349 = vld [vmem:[%s227 + $0x60] sm:$0xf]
      %v350 = vld [vmem:[%s227 + $0x64] sm:$0xf]
      %v351 = vld [vmem:[%s227 + $0x68] sm:$0xf]
      %v352 = vld [vmem:[%s227 + $0x6c] sm:$0xf]
      %v353 = vld [vmem:[%s227 + $0x70] sm:$0xf]
      %v354 = vld [vmem:[%s227 + $0x74] sm:$0xf]
      %v355 = vld [vmem:[%s227 + $0x78] sm:$0xf]
      %v356 = vld [vmem:[%s227 + $0x7c] sm:$0xf]
      %v357 = vld [vmem:[%s240] sm:$0xf]
      %v358 = vld [vmem:[%s240 + $0x4] sm:$0xf]
      %v359 = vld [vmem:[%s240 + $0x8] sm:$0xf]
      %v360 = vld [vmem:[%s240 + $0xc] sm:$0xf]
      %v361 = vld [vmem:[%s240 + $0x10] sm:$0xf]
      %v362 = vld [vmem:[%s240 + $0x14] sm:$0xf]
      %v363 = vld [vmem:[%s240 + $0x18] sm:$0xf]
      %v364 = vld [vmem:[%s240 + $0x1c] sm:$0xf]
      %v365 = vld [vmem:[%s240 + $0x20] sm:$0xf]
      %v366 = vld [vmem:[%s240 + $0x24] sm:$0xf]
      %v367 = vld [vmem:[%s240 + $0x28] sm:$0xf]
      %v368 = vld [vmem:[%s240 + $0x2c] sm:$0xf]
      %v369 = vld [vmem:[%s240 + $0x30] sm:$0xf]
      %v370 = vld [vmem:[%s240 + $0x34] sm:$0xf]
      %v371 = vld [vmem:[%s240 + $0x38] sm:$0xf]
      %v372 = vld [vmem:[%s240 + $0x3c] sm:$0xf]
      %v405 = vunpack.c.l.b16 %v325
      %v406 = vunpack.c.l.b16 %v326
      %v407 = vunpack.c.l.b16 %v327
      %v408 = vunpack.c.l.b16 %v328
      %v409 = vunpack.c.l.b16 %v329
      %v410 = vunpack.c.l.b16 %v330
      %v411 = vunpack.c.l.b16 %v331
      %v412 = vunpack.c.l.b16 %v332
      %v413 = vunpack.c.l.b16 %v333
      %v414 = vunpack.c.l.b16 %v334
      %v415 = vunpack.c.l.b16 %v335
      %v416 = vunpack.c.l.b16 %v336
      %v417 = vunpack.c.l.b16 %v337
      %v418 = vunpack.c.l.b16 %v338
      %v419 = vunpack.c.l.b16 %v339
      %v420 = vunpack.c.l.b16 %v340
      %v421 = vunpack.c.l.b16 %v341
      %v422 = vunpack.c.l.b16 %v342
      %v423 = vunpack.c.l.b16 %v343
      %v424 = vunpack.c.l.b16 %v344
      %v425 = vunpack.c.l.b16 %v345
      %v426 = vunpack.c.l.b16 %v346
      %v427 = vunpack.c.l.b16 %v347
      %v428 = vunpack.c.l.b16 %v348
      %v429 = vunpack.c.l.b16 %v349
      %v430 = vunpack.c.l.b16 %v350
      %v431 = vunpack.c.l.b16 %v351
      %v432 = vunpack.c.l.b16 %v352
      %v433 = vunpack.c.l.b16 %v353
      %v434 = vunpack.c.l.b16 %v354
      %v435 = vunpack.c.l.b16 %v355
      %v436 = vunpack.c.l.b16 %v356
      %v437 = vpack.c.b16 %v406, %v405
      %v438 = vpack.c.b16 %v408, %v407
      %v439 = vpack.c.b16 %v410, %v409
      %v440 = vpack.c.b16 %v412, %v411
      %v441 = vpack.c.b16 %v414, %v413
      %v442 = vpack.c.b16 %v416, %v415
      %v443 = vpack.c.b16 %v418, %v417
      %v444 = vpack.c.b16 %v420, %v419
      %v445 = vpack.c.b16 %v422, %v421
      %v446 = vpack.c.b16 %v424, %v423
      %v447 = vpack.c.b16 %v426, %v425
      %v448 = vpack.c.b16 %v428, %v427
      %v449 = vpack.c.b16 %v430, %v429
      %v450 = vpack.c.b16 %v432, %v431
      %v451 = vpack.c.b16 %v434, %v433
      %v452 = vpack.c.b16 %v436, %v435
      %v485 = vunpack.c.l.b16 %v357
      %v486 = vunpack.c.l.b16 %v358
      %v487 = vunpack.c.l.b16 %v359
      %v488 = vunpack.c.l.b16 %v360
      %v489 = vunpack.c.l.b16 %v361
      %v490 = vunpack.c.l.b16 %v362
      %v491 = vunpack.c.l.b16 %v363
      %v492 = vunpack.c.l.b16 %v364
      %v493 = vunpack.c.l.b16 %v365
      %v494 = vunpack.c.l.b16 %v366
      %v495 = vunpack.c.l.b16 %v367
      %v496 = vunpack.c.l.b16 %v368
      %v497 = vunpack.c.l.b16 %v369
      %v498 = vunpack.c.l.b16 %v370
      %v499 = vunpack.c.l.b16 %v371
      %v500 = vunpack.c.l.b16 %v372
      %v501 = vpack.c.b16 %v486, %v485
      %v502 = vpack.c.b16 %v488, %v487
      %v503 = vpack.c.b16 %v490, %v489
      %v504 = vpack.c.b16 %v492, %v491
      %v505 = vpack.c.b16 %v494, %v493
      %v506 = vpack.c.b16 %v496, %v495
      %v507 = vpack.c.b16 %v498, %v497
      %v508 = vpack.c.b16 %v500, %v499
      %517 = vmatprep.subr.bf16.mxu0 0
      %518 = vmatpush1.bf16.msra.mxu0 %v501
      %519 = vmatprep.subr.bf16.mxu0 0
      %520 = vmatpush1.bf16.msra.mxu0 %v502
      %521 = vmatprep.subr.bf16.mxu0 0
      %522 = vmatpush1.bf16.msra.mxu0 %v503
      %523 = vmatprep.subr.bf16.mxu0 0
      %524 = vmatpush1.bf16.msra.mxu0 %v504
      %525 = vmatprep.subr.bf16.mxu0 0
      %526 = vmatpush1.bf16.msra.mxu0 %v505
      %527 = vmatprep.subr.bf16.mxu0 0
      %528 = vmatpush1.bf16.msra.mxu0 %v506
      %529 = vmatprep.subr.bf16.mxu0 0
      %530 = vmatpush1.bf16.msra.mxu0 %v507
      %531 = vmatprep.subr.bf16.mxu0 0
      %532 = vmatpush1.bf16.msra.mxu0 %v508
      %533 = vmatprep.subr.bf16.mxu0 0
      %534 = vmatpush1.bf16.msra.mxu0 0
      %535 = vmatprep.subr.bf16.mxu0 0
      %536 = vmatpush1.bf16.msra.mxu0 0
      %537 = vmatprep.subr.bf16.mxu0 0
      %538 = vmatpush1.bf16.msra.mxu0 0
      %539 = vmatprep.subr.bf16.mxu0 0
      %540 = vmatpush1.bf16.msra.mxu0 0
      %541 = vmatprep.subr.bf16.mxu0 0
      %542 = vmatpush1.bf16.msra.mxu0 0
      %543 = vmatprep.subr.bf16.mxu0 0
      %544 = vmatpush1.bf16.msra.mxu0 0
      %545 = vmatprep.subr.bf16.mxu0 0
      %546 = vmatpush1.bf16.msra.mxu0 0
      %547 = vmatprep.subr.bf16.mxu0 0
      %548 = vmatpush1.bf16.msra.mxu0 0
      %549 = vmatprep.mubr.bf16.mxu0 0
      %550 = vmatmul.mubr.bf16.gmra.mrb[0].mxu0 %v437
      %v551 = vpop.f32.mrb[0].mxu0
      %v552 = vadd.f32 0.0, %v551
      %v553 = vpop.f32.mrb[0].mxu0
      %v554 = vpop.f32.mrb[0].mxu0
      %v555 = vadd.f32 0.0, %v554
      %v556 = vpop.f32.mrb[0].mxu0
      %557 = vmatprep.mubr.bf16.mxu0 0
      %558 = vmatmul.mubr.bf16.gmra.mrb[0].mxu0 %v438
      %v559 = vpop.f32.mrb[0].mxu0
      %v560 = vadd.f32 0.0, %v559
      %v561 = vpop.f32.mrb[0].mxu0
      %v562 = vpop.f32.mrb[0].mxu0
      %v563 = vadd.f32 0.0, %v562
      %v564 = vpop.f32.mrb[0].mxu0
      %565 = vmatprep.mubr.bf16.mxu0 0
      %566 = vmatmul.mubr.bf16.gmra.mrb[0].mxu0 %v439
      %v567 = vpop.f32.mrb[0].mxu0
      %v568 = vadd.f32 0.0, %v567
      %v569 = vpop.f32.mrb[0].mxu0
      %v570 = vpop.f32.mrb[0].mxu0
      %v571 = vadd.f32 0.0, %v570
      %v572 = vpop.f32.mrb[0].mxu0
      %573 = vmatprep.mubr.bf16.mxu0 0
      %574 = vmatmul.mubr.bf16.gmra.mrb[0].mxu0 %v440
      %v575 = vpop.f32.mrb[0].mxu0
      %v576 = vadd.f32 0.0, %v575
      %v577 = vpop.f32.mrb[0].mxu0
      %v578 = vpop.f32.mrb[0].mxu0
      %v579 = vadd.f32 0.0, %v578
      %v580 = vpop.f32.mrb[0].mxu0
      %581 = vmatprep.mubr.bf16.mxu0 0
      %582 = vmatmul.mubr.bf16.gmra.mrb[0].mxu0 %v441
      %v583 = vpop.f32.mrb[0].mxu0
      %v584 = vadd.f32 0.0, %v583
      %v585 = vpop.f32.mrb[0].mxu0
      %v586 = vpop.f32.mrb[0].mxu0
      %v587 = vadd.f32 0.0, %v586
      %v588 = vpop.f32.mrb[0].mxu0
      %589 = vmatprep.mubr.bf16.mxu0 0
      %590 = vmatmul.mubr.bf16.gmra.mrb[0].mxu0 %v442
      %v591 = vpop.f32.mrb[0].mxu0
      %v592 = vadd.f32 0.0, %v591
      %v593 = vpop.f32.mrb[0].mxu0
      %v594 = vpop.f32.mrb[0].mxu0
      %v595 = vadd.f32 0.0, %v594
      %v596 = vpop.f32.mrb[0].mxu0
      %597 = vmatprep.mubr.bf16.mxu0 0
      %598 = vmatmul.mubr.bf16.gmra.mrb[0].mxu0 %v443
      %v599 = vpop.f32.mrb[0].mxu0
      %v600 = vadd.f32 0.0, %v599
      %v601 = vpop.f32.mrb[0].mxu0
      %v602 = vpop.f32.mrb[0].mxu0
      %v603 = vadd.f32 0.0, %v602
      %v604 = vpop.f32.mrb[0].mxu0
      %605 = vmatprep.mubr.bf16.mxu0 0
      %606 = vmatmul.mubr.bf16.gmra.mrb[0].mxu0 %v444
      %v607 = vpop.f32.mrb[0].mxu0
      %v608 = vadd.f32 0.0, %v607
      %v609 = vpop.f32.mrb[0].mxu0
      %v610 = vpop.f32.mrb[0].mxu0
      %v611 = vadd.f32 0.0, %v610
      %v612 = vpop.f32.mrb[0].mxu0
      %613 = vmatprep.mubr.bf16.mxu0 0
      %614 = vmatmul.mubr.bf16.gmra.mrb[0].mxu0 %v445
      %v615 = vpop.f32.mrb[0].mxu0
      %v616 = vadd.f32 0.0, %v615
      %v617 = vpop.f32.mrb[0].mxu0
      %v618 = vpop.f32.mrb[0].mxu0
      %v619 = vadd.f32 0.0, %v618
      %v620 = vpop.f32.mrb[0].mxu0
      %621 = vmatprep.mubr.bf16.mxu0 0
      %622 = vmatmul.mubr.bf16.gmra.mrb[0].mxu0 %v446
      %v623 = vpop.f32.mrb[0].mxu0
      %v624 = vadd.f32 0.0, %v623
      %v625 = vpop.f32.mrb[0].mxu0
      %v626 = vpop.f32.mrb[0].mxu0
      %v627 = vadd.f32 0.0, %v626
      %v628 = vpop.f32.mrb[0].mxu0
      %629 = vmatprep.mubr.bf16.mxu0 0
      %630 = vmatmul.mubr.bf16.gmra.mrb[0].mxu0 %v447
      %v631 = vpop.f32.mrb[0].mxu0
      %v632 = vadd.f32 0.0, %v631
      %v633 = vpop.f32.mrb[0].mxu0
      %v634 = vpop.f32.mrb[0].mxu0
      %v635 = vadd.f32 0.0, %v634
      %v636 = vpop.f32.mrb[0].mxu0
      %637 = vmatprep.mubr.bf16.mxu0 0
      %638 = vmatmul.mubr.bf16.gmra.mrb[0].mxu0 %v448
      %v639 = vpop.f32.mrb[0].mxu0
      %v640 = vadd.f32 0.0, %v639
      %v641 = vpop.f32.mrb[0].mxu0
      %v642 = vpop.f32.mrb[0].mxu0
      %v643 = vadd.f32 0.0, %v642
      %v644 = vpop.f32.mrb[0].mxu0
      %645 = vmatprep.mubr.bf16.mxu0 0
      %646 = vmatmul.mubr.bf16.gmra.mrb[0].mxu0 %v449
      %v647 = vpop.f32.mrb[0].mxu0
      %v648 = vadd.f32 0.0, %v647
      %v649 = vpop.f32.mrb[0].mxu0
      %v650 = vpop.f32.mrb[0].mxu0
      %v651 = vadd.f32 0.0, %v650
      %v652 = vpop.f32.mrb[0].mxu0
      %653 = vmatprep.mubr.bf16.mxu0 0
      %654 = vmatmul.mubr.bf16.gmra.mrb[0].mxu0 %v450
      %v655 = vpop.f32.mrb[0].mxu0
      %v656 = vadd.f32 0.0, %v655
      %v657 = vpop.f32.mrb[0].mxu0
      %v658 = vpop.f32.mrb[0].mxu0
      %v659 = vadd.f32 0.0, %v658
      %v660 = vpop.f32.mrb[0].mxu0
      %661 = vmatprep.mubr.bf16.mxu0 0
      %662 = vmatmul.mubr.bf16.gmra.mrb[0].mxu0 %v451
      %v663 = vpop.f32.mrb[0].mxu0
      %v664 = vadd.f32 0.0, %v663
      %v665 = vpop.f32.mrb[0].mxu0
      %v666 = vpop.f32.mrb[0].mxu0
      %v667 = vadd.f32 0.0, %v666
      %v668 = vpop.f32.mrb[0].mxu0
      %669 = vmatprep.mubr.bf16.mxu0 0
      %670 = vmatmul.mubr.bf16.gmra.mrb[0].mxu0 %v452
      %v671 = vpop.f32.mrb[0].mxu0
      %v672 = vadd.f32 0.0, %v671
      %v673 = vpop.f32.mrb[0].mxu0
      %v674 = vpop.f32.mrb[0].mxu0
      %v675 = vadd.f32 0.0, %v674
      %v676 = vpop.f32.mrb[0].mxu0
      %677 = vdwg.mxu0
      %v678 = vadd.f32 %v293, %v552
      %v679 = vadd.f32 %v294, %v555
      %v680 = vadd.f32 %v295, %v560
      %v681 = vadd.f32 %v296, %v563
      %v682 = vadd.f32 %v297, %v568
      %v683 = vadd.f32 %v298, %v571
      %v684 = vadd.f32 %v299, %v576
      %v685 = vadd.f32 %v300, %v579
      %v686 = vadd.f32 %v301, %v584
      %v687 = vadd.f32 %v302, %v587
      %v688 = vadd.f32 %v303, %v592
      %v689 = vadd.f32 %v304, %v595
      %v690 = vadd.f32 %v305, %v600
      %v691 = vadd.f32 %v306, %v603
      %v692 = vadd.f32 %v307, %v608
      %v693 = vadd.f32 %v308, %v611
      %v694 = vadd.f32 %v309, %v616
      %v695 = vadd.f32 %v310, %v619
      %v696 = vadd.f32 %v311, %v624
      %v697 = vadd.f32 %v312, %v627
      %v698 = vadd.f32 %v313, %v632
      %v699 = vadd.f32 %v314, %v635
      %v700 = vadd.f32 %v315, %v640
      %v701 = vadd.f32 %v316, %v643
      %v702 = vadd.f32 %v317, %v648
      %v703 = vadd.f32 %v318, %v651
      %v704 = vadd.f32 %v319, %v656
      %v705 = vadd.f32 %v320, %v659
      %v706 = vadd.f32 %v321, %v664
      %v707 = vadd.f32 %v322, %v667
      %v708 = vadd.f32 %v323, %v672
      %v709 = vadd.f32 %v324, %v675
      %710 = vst [vmem:[#allocation2] sm:$0xff] %v678
      %711 = vst [vmem:[#allocation2 + $0x8] sm:$0xff] %v679
      %712 = vst [vmem:[#allocation2 + $0x10] sm:$0xff] %v680
      %713 = vst [vmem:[#allocation2 + $0x18] sm:$0xff] %v681
      %714 = vst [vmem:[#allocation2 + $0x20] sm:$0xff] %v682
      %715 = vst [vmem:[#allocation2 + $0x28] sm:$0xff] %v683
      %716 = vst [vmem:[#allocation2 + $0x30] sm:$0xff] %v684
      %717 = vst [vmem:[#allocation2 + $0x38] sm:$0xff] %v685
      %718 = vst [vmem:[#allocation2 + $0x40] sm:$0xff] %v686
      %719 = vst [vmem:[#allocation2 + $0x48] sm:$0xff] %v687
      %720 = vst [vmem:[#allocation2 + $0x50] sm:$0xff] %v688
      %721 = vst [vmem:[#allocation2 + $0x58] sm:$0xff] %v689
      %722 = vst [vmem:[#allocation2 + $0x60] sm:$0xff] %v690
      %723 = vst [vmem:[#allocation2 + $0x68] sm:$0xff] %v691
      %724 = vst [vmem:[#allocation2 + $0x70] sm:$0xff] %v692
      %725 = vst [vmem:[#allocation2 + $0x78] sm:$0xff] %v693
      %726 = vst [vmem:[#allocation2 + $0x80] sm:$0xff] %v694
      %727 = vst [vmem:[#allocation2 + $0x88] sm:$0xff] %v695
      %728 = vst [vmem:[#allocation2 + $0x90] sm:$0xff] %v696
      %729 = vst [vmem:[#allocation2 + $0x98] sm:$0xff] %v697
      %730 = vst [vmem:[#allocation2 + $0xa0] sm:$0xff] %v698
      %731 = vst [vmem:[#allocation2 + $0xa8] sm:$0xff] %v699
      %732 = vst [vmem:[#allocation2 + $0xb0] sm:$0xff] %v700
      %733 = vst [vmem:[#allocation2 + $0xb8] sm:$0xff] %v701
      %734 = vst [vmem:[#allocation2 + $0xc0] sm:$0xff] %v702
      %735 = vst [vmem:[#allocation2 + $0xc8] sm:$0xff] %v703
      %736 = vst [vmem:[#allocation2 + $0xd0] sm:$0xff] %v704
      %737 = vst [vmem:[#allocation2 + $0xd8] sm:$0xff] %v705
      %738 = vst [vmem:[#allocation2 + $0xe0] sm:$0xff] %v706
      %739 = vst [vmem:[#allocation2 + $0xe8] sm:$0xff] %v707
      %740 = vst [vmem:[#allocation2 + $0xf0] sm:$0xff] %v708
      %741 = vst [vmem:[#allocation2 + $0xf8] sm:$0xff] %v709
      // Predicated region
      $region33: #{blockg_forward.5} parent=27 // pred_check
        %p742 = pneg %p257
      $region34: #{blockg_forward.5} parent=27 // pred_check_branch
        %744 = sbr.rel (%p742) target = $region36
      $region35: #{blockg_forward.5} parent=27 // pred_region
        %v745 = vld [vmem:[#allocation2] sm:$0xff]
        %v746 = vld [vmem:[#allocation2 + $0x8] sm:$0xff]
        %v747 = vld [vmem:[#allocation2 + $0x10] sm:$0xff]
        %v748 = vld [vmem:[#allocation2 + $0x18] sm:$0xff]
        %v749 = vld [vmem:[#allocation2 + $0x20] sm:$0xff]
        %v750 = vld [vmem:[#allocation2 + $0x28] sm:$0xff]
        %v751 = vld [vmem:[#allocation2 + $0x30] sm:$0xff]
        %v752 = vld [vmem:[#allocation2 + $0x38] sm:$0xff]
        %v753 = vld [vmem:[#allocation2 + $0x40] sm:$0xff]
        %v754 = vld [vmem:[#allocation2 + $0x48] sm:$0xff]
        %v755 = vld [vmem:[#allocation2 + $0x50] sm:$0xff]
        %v756 = vld [vmem:[#allocation2 + $0x58] sm:$0xff]
        %v757 = vld [vmem:[#allocation2 + $0x60] sm:$0xff]
        %v758 = vld [vmem:[#allocation2 + $0x68] sm:$0xff]
        %v759 = vld [vmem:[#allocation2 + $0x70] sm:$0xff]
        %v760 = vld [vmem:[#allocation2 + $0x78] sm:$0xff]
        %v761 = vld [vmem:[#allocation2 + $0x80] sm:$0xff]
        %v762 = vld [vmem:[#allocation2 + $0x88] sm:$0xff]
        %v763 = vld [vmem:[#allocation2 + $0x90] sm:$0xff]
        %v764 = vld [vmem:[#allocation2 + $0x98] sm:$0xff]
        %v765 = vld [vmem:[#allocation2 + $0xa0] sm:$0xff]
        %v766 = vld [vmem:[#allocation2 + $0xa8] sm:$0xff]
        %v767 = vld [vmem:[#allocation2 + $0xb0] sm:$0xff]
        %v768 = vld [vmem:[#allocation2 + $0xb8] sm:$0xff]
        %v769 = vld [vmem:[#allocation2 + $0xc0] sm:$0xff]
        %v770 = vld [vmem:[#allocation2 + $0xc8] sm:$0xff]
        %v771 = vld [vmem:[#allocation2 + $0xd0] sm:$0xff]
        %v772 = vld [vmem:[#allocation2 + $0xd8] sm:$0xff]
        %v773 = vld [vmem:[#allocation2 + $0xe0] sm:$0xff]
        %v774 = vld [vmem:[#allocation2 + $0xe8] sm:$0xff]
        %v775 = vld [vmem:[#allocation2 + $0xf0] sm:$0xff]
        %v776 = vld [vmem:[#allocation2 + $0xf8] sm:$0xff]
        %vm777 = vcmp.ge.f32.partialorder %v745, 0.0
        %vm778 = vcmp.ge.f32.partialorder %v746, 0.0
        %vm779 = vcmp.ge.f32.partialorder %v747, 0.0
        %vm780 = vcmp.ge.f32.partialorder %v748, 0.0
        %vm781 = vcmp.ge.f32.partialorder %v749, 0.0
        %vm782 = vcmp.ge.f32.partialorder %v750, 0.0
        %vm783 = vcmp.ge.f32.partialorder %v751, 0.0
        %vm784 = vcmp.ge.f32.partialorder %v752, 0.0
        %vm785 = vcmp.ge.f32.partialorder %v753, 0.0
        %vm786 = vcmp.ge.f32.partialorder %v754, 0.0
        %vm787 = vcmp.ge.f32.partialorder %v755, 0.0
        %vm788 = vcmp.ge.f32.partialorder %v756, 0.0
        %vm789 = vcmp.ge.f32.partialorder %v757, 0.0
        %vm790 = vcmp.ge.f32.partialorder %v758, 0.0
        %vm791 = vcmp.ge.f32.partialorder %v759, 0.0
        %vm792 = vcmp.ge.f32.partialorder %v760, 0.0
        %vm793 = vcmp.ge.f32.partialorder %v761, 0.0
        %vm794 = vcmp.ge.f32.partialorder %v762, 0.0
        %vm795 = vcmp.ge.f32.partialorder %v763, 0.0
        %vm796 = vcmp.ge.f32.partialorder %v764, 0.0
        %vm797 = vcmp.ge.f32.partialorder %v765, 0.0
        %vm798 = vcmp.ge.f32.partialorder %v766, 0.0
        %vm799 = vcmp.ge.f32.partialorder %v767, 0.0
        %vm800 = vcmp.ge.f32.partialorder %v768, 0.0
        %vm801 = vcmp.ge.f32.partialorder %v769, 0.0
        %vm802 = vcmp.ge.f32.partialorder %v770, 0.0
        %vm803 = vcmp.ge.f32.partialorder %v771, 0.0
        %vm804 = vcmp.ge.f32.partialorder %v772, 0.0
        %vm805 = vcmp.ge.f32.partialorder %v773, 0.0
        %vm806 = vcmp.ge.f32.partialorder %v774, 0.0
        %vm807 = vcmp.ge.f32.partialorder %v775, 0.0
        %vm808 = vcmp.ge.f32.partialorder %v776, 0.0
        %v809 = vmul.f32 %v745, 0.2
        %v810 = vmul.f32 %v746, 0.2
        %v811 = vmul.f32 %v747, 0.2
        %v812 = vmul.f32 %v748, 0.2
        %v813 = vmul.f32 %v749, 0.2
        %v814 = vmul.f32 %v750, 0.2
        %v815 = vmul.f32 %v751, 0.2
        %v816 = vmul.f32 %v752, 0.2
        %v817 = vmul.f32 %v753, 0.2
        %v818 = vmul.f32 %v754, 0.2
        %v819 = vmul.f32 %v755, 0.2
        %v820 = vmul.f32 %v756, 0.2
        %v821 = vmul.f32 %v757, 0.2
        %v822 = vmul.f32 %v758, 0.2
        %v823 = vmul.f32 %v759, 0.2
        %v824 = vmul.f32 %v760, 0.2
        %v825 = vmul.f32 %v761, 0.2
        %v826 = vmul.f32 %v762, 0.2
        %v827 = vmul.f32 %v763, 0.2
        %v828 = vmul.f32 %v764, 0.2
        %v829 = vmul.f32 %v765, 0.2
        %v830 = vmul.f32 %v766, 0.2
        %v831 = vmul.f32 %v767, 0.2
        %v832 = vmul.f32 %v768, 0.2
        %v833 = vmul.f32 %v769, 0.2
        %v834 = vmul.f32 %v770, 0.2
        %v835 = vmul.f32 %v771, 0.2
        %v836 = vmul.f32 %v772, 0.2
        %v837 = vmul.f32 %v773, 0.2
        %v838 = vmul.f32 %v774, 0.2
        %v839 = vmul.f32 %v775, 0.2
        %v840 = vmul.f32 %v776, 0.2
        %v841 = vsel %vm777, %v745, %v809
        %v842 = vsel %vm778, %v746, %v810
        %v843 = vsel %vm779, %v747, %v811
        %v844 = vsel %vm780, %v748, %v812
        %v845 = vsel %vm781, %v749, %v813
        %v846 = vsel %vm782, %v750, %v814
        %v847 = vsel %vm783, %v751, %v815
        %v848 = vsel %vm784, %v752, %v816
        %v849 = vsel %vm785, %v753, %v817
        %v850 = vsel %vm786, %v754, %v818
        %v851 = vsel %vm787, %v755, %v819
        %v852 = vsel %vm788, %v756, %v820
        %v853 = vsel %vm789, %v757, %v821
        %v854 = vsel %vm790, %v758, %v822
        %v855 = vsel %vm791, %v759, %v823
        %v856 = vsel %vm792, %v760, %v824
        %v857 = vsel %vm793, %v761, %v825
        %v858 = vsel %vm794, %v762, %v826
        %v859 = vsel %vm795, %v763, %v827
        %v860 = vsel %vm796, %v764, %v828
        %v861 = vsel %vm797, %v765, %v829
        %v862 = vsel %vm798, %v766, %v830
        %v863 = vsel %vm799, %v767, %v831
        %v864 = vsel %vm800, %v768, %v832
        %v865 = vsel %vm801, %v769, %v833
        %v866 = vsel %vm802, %v770, %v834
        %v867 = vsel %vm803, %v771, %v835
        %v868 = vsel %vm804, %v772, %v836
        %v869 = vsel %vm805, %v773, %v837
        %v870 = vsel %vm806, %v774, %v838
        %v871 = vsel %vm807, %v775, %v839
        %v872 = vsel %vm808, %v776, %v840
        %873 = vst [vmem:[%s254] sm:$0xff] %v841
        %874 = vst [vmem:[%s254 + $0x8] sm:$0xff] %v842
        %875 = vst [vmem:[%s254 + $0x10] sm:$0xff] %v843
        %876 = vst [vmem:[%s254 + $0x18] sm:$0xff] %v844
        %877 = vst [vmem:[%s254 + $0x20] sm:$0xff] %v845
        %878 = vst [vmem:[%s254 + $0x28] sm:$0xff] %v846
        %879 = vst [vmem:[%s254 + $0x30] sm:$0xff] %v847
        %880 = vst [vmem:[%s254 + $0x38] sm:$0xff] %v848
        %881 = vst [vmem:[%s254 + $0x40] sm:$0xff] %v849
        %882 = vst [vmem:[%s254 + $0x48] sm:$0xff] %v850
        %883 = vst [vmem:[%s254 + $0x50] sm:$0xff] %v851
        %884 = vst [vmem:[%s254 + $0x58] sm:$0xff] %v852
        %885 = vst [vmem:[%s254 + $0x60] sm:$0xff] %v853
        %886 = vst [vmem:[%s254 + $0x68] sm:$0xff] %v854
        %887 = vst [vmem:[%s254 + $0x70] sm:$0xff] %v855
        %888 = vst [vmem:[%s254 + $0x78] sm:$0xff] %v856
        %889 = vst [vmem:[%s254 + $0x80] sm:$0xff] %v857
        %890 = vst [vmem:[%s254 + $0x88] sm:$0xff] %v858
        %891 = vst [vmem:[%s254 + $0x90] sm:$0xff] %v859
        %892 = vst [vmem:[%s254 + $0x98] sm:$0xff] %v860
        %893 = vst [vmem:[%s254 + $0xa0] sm:$0xff] %v861
        %894 = vst [vmem:[%s254 + $0xa8] sm:$0xff] %v862
        %895 = vst [vmem:[%s254 + $0xb0] sm:$0xff] %v863
        %896 = vst [vmem:[%s254 + $0xb8] sm:$0xff] %v864
        %897 = vst [vmem:[%s254 + $0xc0] sm:$0xff] %v865
        %898 = vst [vmem:[%s254 + $0xc8] sm:$0xff] %v866
        %899 = vst [vmem:[%s254 + $0xd0] sm:$0xff] %v867
        %900 = vst [vmem:[%s254 + $0xd8] sm:$0xff] %v868
        %901 = vst [vmem:[%s254 + $0xe0] sm:$0xff] %v869
        %902 = vst [vmem:[%s254 + $0xe8] sm:$0xff] %v870
        %903 = vst [vmem:[%s254 + $0xf0] sm:$0xff] %v871
        %904 = vst [vmem:[%s254 + $0xf8] sm:$0xff] %v872
      $region36: #{blockg_forward.5} parent=27 // pred_fallthru
        _
      %s905 = smul.u32 16, %s20
      %p906 = scmp.lt.s32.totalorder %s19, 1
      %s907 = scalar_select %p906, %s19, 1
      %p908 = scmp.lt.s32.totalorder %s905, 15
      %s909 = scalar_select %p908, %s905, 15
      %p910 = scmp.lt.s32.totalorder %s21, 0
      %s911 = scalar_select %p910, %s21, 0
      %s912 = smul.addr %s909, 2
      %s913 = sadd.s32 %s911, %s912
      %s914 = smul.addr %s907, 32
      %s915 = sadd.s32 %s913, %s914
      %s916 = smul.addr %s915, 8
      %s917 = scalar_lea.vmem %s2, %s916
      // Predicated region
      $region37: #{blockg_forward.5} parent=27 // pred_check
        %p918 = pneg %p121
      $region38: #{blockg_forward.5} parent=27 // pred_check_branch
        %920 = sbr.rel (%p918) target = $region40
      $region39: #{blockg_forward.5} parent=27 // pred_region
        %s921 = smul.u32 16, %s20
      $region40: #{blockg_forward.5} parent=27 // pred_fallthru
        _
    $region28: #{blockg_forward.5} parent=5 // pred_fallthru
      _
    %p922 = scmp.le.s32.totalorder 2, %s8
    // Predicated region
    $region41: #{blockg_forward.5} parent=5 // pred_check
      %p923 = pneg %p922
    $region42: #{blockg_forward.5} parent=5 // pred_check_branch
      %925 = sbr.rel (%p923) target = $region44
    $region43: #{blockg_forward.5} parent=5 // pred_region
      %s926 = ssub.s32 %s8, 2
      // Predicated region
      $region45: #{blockg_forward.5} parent=43 // pred_check
        %p927 = pneg %p127
      $region46: #{blockg_forward.5} parent=43 // pred_check_branch
        %929 = sbr.rel (%p927) target = $region48
      $region47: #{blockg_forward.5} parent=43 // pred_region
        %s930 = smul.u32 16, %s24
        %p931 = scmp.lt.s32.totalorder %s23, 1
        %s932 = scalar_select %p931, %s23, 1
        %p933 = scmp.lt.s32.totalorder %s930, 15
        %s934 = scalar_select %p933, %s930, 15
        %p935 = scmp.lt.s32.totalorder %s25, 0
        %s936 = scalar_select %p935, %s25, 0
        %s937 = smul.addr %s934, 2
        %s938 = sadd.s32 %s936, %s937
        %s939 = smul.addr %s932, 32
        %s940 = sadd.s32 %s938, %s939
        %s941 = smul.addr %s940, 8
        %s942 = scalar_lea.vmem %s2, %s941
      $region48: #{blockg_forward.5} parent=43 // pred_fallthru
        _
    $region44: #{blockg_forward.5} parent=5 // pred_fallthru
      _
  $region6: #{blockg_forward.5} parent=0 // loop_footer
    %s12 = sadd.s32 1, %s8
  $region7: #{blockg_forward.5} parent=0 // loop_footer_branch
    %7 = sbr.rel target = $region3
  $region8: #{blockg_forward.5} parent=0 // loop_exit
    _

// kernel: blockg_forward.3
$region0: #{blockg_forward.3}
  #allocation0 [shape = 'u32[]', space=smem, size = 0x4, offset = 0x4, fixed_abs, tag = 'smem constant byte address 0x4 - core index']
  #allocation1 [shape = 'u32[144,128]{1,0:T(1,128)}', space=vmem, size = 0x12000, scoped, tag = 'internal scratch']
  #allocation2 [shape = 'f32[256,128]{1,0:T(8,128)}', space=vmem, size = 0x20000, scoped, tag = 'scratch operand']
  %s0 = inlined_call_operand.vmem [shape: bf16[2,18,18,128], index: 0, kind: input, shape index: {}]
  %s1 = inlined_call_operand.vmem [shape: bf16[2,9,128,128], index: 1, kind: input, shape index: {}]
  %s2 = inlined_call_operand.vmem [shape: f32[2,16,16,128], index: 2, kind: output, shape index: {}]
  %s3 = sld [smem:[#allocation0]]
  $region49: #{blockg_forward.3} parent=0
    _
  %s5 = ssub.s32 1, %s3
  %s6 = scalar_select 0, %s5, %s3
  loop: start=0, step=1, limit=4
  $region2: #{blockg_forward.3} parent=0 // loop_pre_header
    _
  $region3: #{blockg_forward.3} parent=0 // loop_header
    %s8 = sphi 0, %s12
    %p9 = scmp.ge.s32.totalorder %s8, 4
    %s15 = sphi 0, %s41
    %s16 = sphi 0, %s37
    %s17 = sphi 0, %s33
    %s18 = sphi 0, %s29
    %s19 = sphi 0, %s15
    %s20 = sphi 0, %s16
    %s21 = sphi 0, %s17
    %s22 = sphi 0, %s18
    %s23 = sphi 0, %s19
    %s24 = sphi 0, %s20
    %s25 = sphi 0, %s21
    %s26 = sphi 0, %s22
    %s48 = sphi 0, %s50
    %s51 = sphi 0, %s48
    %s52 = sphi 0, %s51
    %s68 = sphi 0, %s52
    %s78 = sphi 0, %s80
    %s81 = sphi 0, %s78
    %s82 = sphi 0, %s81
    %s98 = sphi 0, %s82
    %s108 = sphi 0, %s110
    %s111 = sphi 0, %s108
    %s112 = sphi 0, %s111
    %s128 = sphi 0, %s112
  $region4: #{blockg_forward.3} parent=0 // loop_header_branch
    %11 = sbr.rel (%p9) target = $region8
  $region5: #{blockg_forward.3} parent=0 // loop_body
    %s13 = ssub.s32 %s8, 1
    %s14 = ssub.s32 %s8, 2
    %s27 = sadd.s32 1, %s18
    %p28 = scmp.ge.s32.totalorder %s27, 1
    %s29 = scalar_select %p28, 0, %s27
    %s30 = sadd.s32 1, %s17
    %s31 = scalar_select %p28, %s30, %s17
    %p32 = scmp.ge.s32.totalorder %s31, 1
    %s33 = scalar_select %p32, 0, %s31
    %s34 = sadd.s32 1, %s16
    %s35 = scalar_select %p32, %s34, %s16
    %p36 = scmp.ge.s32.totalorder %s35, 1
    %s37 = scalar_select %p36, 0, %s35
    %s38 = sadd.s32 1, %s15
    %s39 = scalar_select %p36, %s38, %s15
    %p40 = scmp.ge.s32.totalorder %s39, 2
    %s41 = scalar_select %p40, 0, %s39
    %s42 = sadd.s32 %s15, %s16
    %s43 = sadd.s32 %s41, %s37
    %s44 = ssub.s32 %s42, %s43
    %s45 = ssub.s32 %s18, %s29
    %s46 = sor.u32 %s44, %s45
    %p47 = scmp.eq.s32.totalorder %s46, 0
    %s49 = sadd.s32 %s48, 1
    %s50 = scalar_select %p47, %s48, %s49
    %p53 = pneg %p47
    %p54 = scmp.eq.s32.totalorder %s8, 1
    %p55 = por %p53, %p54
    %p56 = scmp.ne.s32.totalorder %s48, %s51
    %p57 = scmp.eq.s32.totalorder %s8, 0
    %p58 = por %p56, %p57
    %p59 = scmp.ne.s32.totalorder %s48, %s51
    %p60 = scmp.eq.s32.totalorder %s13, 1
    %p61 = por %p59, %p60
    %p62 = scmp.ne.s32.totalorder %s51, %s52
    %p63 = scmp.eq.s32.totalorder %s13, 0
    %p64 = por %p62, %p63
    %p65 = scmp.ne.s32.totalorder %s51, %s52
    %p66 = scmp.eq.s32.totalorder %s14, 1
    %p67 = por %p65, %p66
    %p69 = scmp.ne.s32.totalorder %s52, %s68
    %p70 = scmp.eq.s32.totalorder %s14, 0
    %p71 = por %p69, %p70
    %s72 = ssub.s32 %s15, %s41
    %s73 = ssub.s32 %s18, %s29
    %s74 = sor.u32 %s72, %s73
    %s75 = ssub.s32 %s17, %s33
    %s76 = sor.u32 %s74, %s75
    %p77 = scmp.eq.s32.totalorder %s76, 0
    %s79 = sadd.s32 %s78, 1
    %s80 = scalar_select %p77, %s78, %s79
    %p83 = pneg %p77
    %p84 = scmp.eq.s32.totalorder %s8, 1
    %p85 = por %p83, %p84
    %p86 = scmp.ne.s32.totalorder %s78, %s81
    %p87 = scmp.eq.s32.totalorder %s8, 0
    %p88 = por %p86, %p87
    %p89 = scmp.ne.s32.totalorder %s78, %s81
    %p90 = scmp.eq.s32.totalorder %s13, 1
    %p91 = por %p89, %p90
    %p92 = scmp.ne.s32.totalorder %s81, %s82
    %p93 = scmp.eq.s32.totalorder %s13, 0
    %p94 = por %p92, %p93
    %p95 = scmp.ne.s32.totalorder %s81, %s82
    %p96 = scmp.eq.s32.totalorder %s14, 1
    %p97 = por %p95, %p96
    %p99 = scmp.ne.s32.totalorder %s82, %s98
    %p100 = scmp.eq.s32.totalorder %s14, 0
    %p101 = por %p99, %p100
    %s102 = ssub.s32 %s15, %s41
    %s103 = ssub.s32 %s16, %s37
    %s104 = sor.u32 %s102, %s103
    %s105 = ssub.s32 %s17, %s33
    %s106 = sor.u32 %s104, %s105
    %p107 = scmp.eq.s32.totalorder %s106, 0
    %s109 = sadd.s32 %s108, 1
    %s110 = scalar_select %p107, %s108, %s109
    %p113 = pneg %p107
    %p114 = scmp.eq.s32.totalorder %s8, 1
    %p115 = por %p113, %p114
    %p116 = scmp.ne.s32.totalorder %s108, %s111
    %p117 = scmp.eq.s32.totalorder %s8, 0
    %p118 = por %p116, %p117
    %p119 = scmp.ne.s32.totalorder %s108, %s111
    %p120 = scmp.eq.s32.totalorder %s13, 1
    %p121 = por %p119, %p120
    %p122 = scmp.ne.s32.totalorder %s111, %s112
    %p123 = scmp.eq.s32.totalorder %s13, 0
    %p124 = por %p122, %p123
    %p125 = scmp.ne.s32.totalorder %s111, %s112
    %p126 = scmp.eq.s32.totalorder %s14, 1
    %p127 = por %p125, %p126
    %p129 = scmp.ne.s32.totalorder %s112, %s128
    %p130 = scmp.eq.s32.totalorder %s14, 0
    %p131 = por %p129, %p130
    %p132 = scmp.le.s32.totalorder 1, %s8
    %p133 = scmp.lt.s32.totalorder %s8, 3
    %p134 = pnand %p132, %p133
    %p135 = pneg %p134
    // Predicated region
    $region9: #{blockg_forward.3} parent=5 // pred_check
      _
    $region10: #{blockg_forward.3} parent=5 // pred_check_branch
      %137 = sbr.rel (%p134) target = $region12
    $region11: #{blockg_forward.3} parent=5 // pred_region
      %s138 = ssub.s32 %s8, 1
    $region12: #{blockg_forward.3} parent=5 // pred_fallthru
      _
    %p139 = scmp.lt.s32.totalorder %s8, 2
    // Predicated region
    $region13: #{blockg_forward.3} parent=5 // pred_check
      %p140 = pneg %p139
    $region14: #{blockg_forward.3} parent=5 // pred_check_branch
      %142 = sbr.rel (%p140) target = $region16
    $region15: #{blockg_forward.3} parent=5 // pred_region
      // Predicated region
      $region17: #{blockg_forward.3} parent=15 // pred_check
        %p143 = pneg %p58
      $region18: #{blockg_forward.3} parent=15 // pred_check_branch
        %145 = sbr.rel (%p143) target = $region20
      $region19: #{blockg_forward.3} parent=15 // pred_region
        %s146 = sadd.s32 %s15, %s16
        %p147 = scmp.lt.s32.totalorder %s146, 1
        %s148 = scalar_select %p147, %s146, 1
        %p149 = scmp.lt.s32.totalorder %s18, 0
        %s150 = scalar_select %p149, %s18, 0
        %s151 = smul.addr %s148, 54
        %s152 = sadd.s32 %s150, %s151
        %s153 = smul.addr %s152, 4
        %s154 = scalar_lea.vmem %s0, %s153
        %s155 = sadd.s32 %s15, %s16
      $region20: #{blockg_forward.3} parent=15 // pred_fallthru
        _
      // Predicated region
      $region21: #{blockg_forward.3} parent=15 // pred_check
        %p156 = pneg %p88
      $region22: #{blockg_forward.3} parent=15 // pred_check_branch
        %158 = sbr.rel (%p156) target = $region24
      $region23: #{blockg_forward.3} parent=15 // pred_region
        %s159 = smul.u32 16, %s18
        %p160 = scmp.lt.s32.totalorder %s15, 1
        %s161 = scalar_select %p160, %s15, 1
        %p162 = scmp.lt.s32.totalorder %s159, 15
        %s163 = scalar_select %p162, %s159, 15
        %p164 = scmp.lt.s32.totalorder %s17, 0
        %s165 = scalar_select %p164, %s17, 0
        %s166 = sadd.s32 %s165, %s163
        %s167 = smul.addr %s161, 144
        %s168 = sadd.s32 %s166, %s167
        %s169 = smul.addr %s168, 4
        %s170 = scalar_lea.vmem %s1, %s169
        %s171 = smul.u32 16, %s18
      $region24: #{blockg_forward.3} parent=15 // pred_fallthru
        _
    $region16: #{blockg_forward.3} parent=5 // pred_fallthru
      _
    %p172 = scmp.le.s32.totalorder 1, %s8
    %p173 = scmp.lt.s32.totalorder %s8, 3
    %p174 = pnand %p172, %p173
    %p175 = pneg %p174
    // Predicated region
    $region25: #{blockg_forward.3} parent=5 // pred_check
      _
    $region26: #{blockg_forward.3} parent=5 // pred_check_branch
      %177 = sbr.rel (%p174) target = $region28
    $region27: #{blockg_forward.3} parent=5 // pred_region
      %s178 = ssub.s32 %s8, 1
      %s179 = sadd.s32 %s19, %s20
      %p180 = scmp.lt.s32.totalorder %s179, 1
      %s181 = scalar_select %p180, %s179, 1
      %p182 = scmp.lt.s32.totalorder %s22, 0
      %s183 = scalar_select %p182, %s22, 0
      %s184 = smul.addr %s181, 54
      %s185 = sadd.s32 %s183, %s184
      %s186 = smul.addr %s185, 4
      %s187 = scalar_lea.vmem %s0, %s186
      %p188 = pneg %p64
      %p189 = pneg %p61
      %s190 = smul.u32 16, %s22
      %p191 = scmp.lt.s32.totalorder %s19, 1
      %s192 = scalar_select %p191, %s19, 1
      %p193 = scmp.lt.s32.totalorder %s190, 15
      %s194 = scalar_select %p193, %s190, 15
      %p195 = scmp.lt.s32.totalorder %s21, 0
      %s196 = scalar_select %p195, %s21, 0
      %s197 = sadd.s32 %s196, %s194
      %s198 = smul.addr %s192, 144
      %s199 = sadd.s32 %s197, %s198
      %s200 = smul.addr %s199, 4
      %s201 = scalar_lea.vmem %s1, %s200
      %p202 = pneg %p94
      %p203 = pneg %p91
      %p204 = pneg %p124
      %p205 = pneg %p121
      %s206 = smul.u32 16, %s20
      %p207 = scmp.lt.s32.totalorder %s19, 1
      %s208 = scalar_select %p207, %s19, 1
      %p209 = scmp.lt.s32.totalorder %s206, 15
      %s210 = scalar_select %p209, %s206, 15
      %p211 = scmp.lt.s32.totalorder %s21, 0
      %s212 = scalar_select %p211, %s21, 0
      %s213 = smul.addr %s210, 2
      %s214 = sadd.s32 %s212, %s213
      %s215 = smul.addr %s208, 32
      %s216 = sadd.s32 %s214, %s215
      %s217 = smul.addr %s216, 8
      %s218 = scalar_lea.vmem %s2, %s217
      %s219 = sadd.s32 %s19, %s20
      %p220 = scmp.lt.s32.totalorder %s219, 1
      %s221 = scalar_select %p220, %s219, 1
      %p222 = scmp.lt.s32.totalorder %s22, 0
      %s223 = scalar_select %p222, %s22, 0
      %s224 = smul.addr %s221, 54
      %s225 = sadd.s32 %s223, %s224
      %s226 = smul.addr %s225, 4
      %s227 = scalar_lea.vmem %s0, %s226
      %s228 = sadd.s32 %s19, %s20
      %s229 = smul.u32 16, %s22
      %p230 = scmp.lt.s32.totalorder %s19, 1
      %s231 = scalar_select %p230, %s19, 1
      %p232 = scmp.lt.s32.totalorder %s229, 15
      %s233 = scalar_select %p232, %s229, 15
      %p234 = scmp.lt.s32.totalorder %s21, 0
      %s235 = scalar_select %p234, %s21, 0
      %s236 = sadd.s32 %s235, %s233
      %s237 = smul.addr %s231, 144
      %s238 = sadd.s32 %s236, %s237
      %s239 = smul.addr %s238, 4
      %s240 = scalar_lea.vmem %s1, %s239
      %s241 = smul.u32 16, %s22
      %s242 = smul.u32 16, %s20
      %p243 = scmp.lt.s32.totalorder %s19, 1
      %s244 = scalar_select %p243, %s19, 1
      %p245 = scmp.lt.s32.totalorder %s242, 15
      %s246 = scalar_select %p245, %s242, 15
      %p247 = scmp.lt.s32.totalorder %s21, 0
      %s248 = scalar_select %p247, %s21, 0
      %s249 = smul.addr %s246, 2
      %s250 = sadd.s32 %s248, %s249
      %s251 = smul.addr %s244, 32
      %s252 = sadd.s32 %s250, %s251
      %s253 = smul.addr %s252, 8
      %s254 = scalar_lea.vmem %s2, %s253
      %s255 = smul.u32 16, %s20
      %p257 = scmp.eq.s32.totalorder %s22, 0
      // Predicated region
      $region29: #{blockg_forward.3} parent=27 // pred_check
        %p258 = pneg %p257
      $region30: #{blockg_forward.3} parent=27 // pred_check_branch
        %260 = sbr.rel (%p258) target = $region32
      $region31: #{blockg_forward.3} parent=27 // pred_region
        %261 = vst [vmem:[#allocation2] sm:$0xff] 0.0
        %262 = vst [vmem:[#allocation2 + $0x8] sm:$0xff] 0.0
        %263 = vst [vmem:[#allocation2 + $0x10] sm:$0xff] 0.0
        %264 = vst [vmem:[#allocation2 + $0x18] sm:$0xff] 0.0
        %265 = vst [vmem:[#allocation2 + $0x20] sm:$0xff] 0.0
        %266 = vst [vmem:[#allocation2 + $0x28] sm:$0xff] 0.0
        %267 = vst [vmem:[#allocation2 + $0x30] sm:$0xff] 0.0
        %268 = vst [vmem:[#allocation2 + $0x38] sm:$0xff] 0.0
        %269 = vst [vmem:[#allocation2 + $0x40] sm:$0xff] 0.0
        %270 = vst [vmem:[#allocation2 + $0x48] sm:$0xff] 0.0
        %271 = vst [vmem:[#allocation2 + $0x50] sm:$0xff] 0.0
        %272 = vst [vmem:[#allocation2 + $0x58] sm:$0xff] 0.0
        %273 = vst [vmem:[#allocation2 + $0x60] sm:$0xff] 0.0
        %274 = vst [vmem:[#allocation2 + $0x68] sm:$0xff] 0.0
        %275 = vst [vmem:[#allocation2 + $0x70] sm:$0xff] 0.0
        %276 = vst [vmem:[#allocation2 + $0x78] sm:$0xff] 0.0
        %277 = vst [vmem:[#allocation2 + $0x80] sm:$0xff] 0.0
        %278 = vst [vmem:[#allocation2 + $0x88] sm:$0xff] 0.0
        %279 = vst [vmem:[#allocation2 + $0x90] sm:$0xff] 0.0
        %280 = vst [vmem:[#allocation2 + $0x98] sm:$0xff] 0.0
        %281 = vst [vmem:[#allocation2 + $0xa0] sm:$0xff] 0.0
        %282 = vst [vmem:[#allocation2 + $0xa8] sm:$0xff] 0.0
        %283 = vst [vmem:[#allocation2 + $0xb0] sm:$0xff] 0.0
        %284 = vst [vmem:[#allocation2 + $0xb8] sm:$0xff] 0.0
        %285 = vst [vmem:[#allocation2 + $0xc0] sm:$0xff] 0.0
        %286 = vst [vmem:[#allocation2 + $0xc8] sm:$0xff] 0.0
        %287 = vst [vmem:[#allocation2 + $0xd0] sm:$0xff] 0.0
        %288 = vst [vmem:[#allocation2 + $0xd8] sm:$0xff] 0.0
        %289 = vst [vmem:[#allocation2 + $0xe0] sm:$0xff] 0.0
        %290 = vst [vmem:[#allocation2 + $0xe8] sm:$0xff] 0.0
        %291 = vst [vmem:[#allocation2 + $0xf0] sm:$0xff] 0.0
        %292 = vst [vmem:[#allocation2 + $0xf8] sm:$0xff] 0.0
      $region32: #{blockg_forward.3} parent=27 // pred_fallthru
        _
      %v293 = vld [vmem:[#allocation2] sm:$0xff]
      %v294 = vld [vmem:[#allocation2 + $0x8] sm:$0xff]
      %v295 = vld [vmem:[#allocation2 + $0x10] sm:$0xff]
      %v296 = vld [vmem:[#allocation2 + $0x18] sm:$0xff]
      %v297 = vld [vmem:[#allocation2 + $0x20] sm:$0xff]
      %v298 = vld [vmem:[#allocation2 + $0x28] sm:$0xff]
      %v299 = vld [vmem:[#allocation2 + $0x30] sm:$0xff]
      %v300 = vld [vmem:[#allocation2 + $0x38] sm:$0xff]
      %v301 = vld [vmem:[#allocation2 + $0x40] sm:$0xff]
      %v302 = vld [vmem:[#allocation2 + $0x48] sm:$0xff]
      %v303 = vld [vmem:[#allocation2 + $0x50] sm:$0xff]
      %v304 = vld [vmem:[#allocation2 + $0x58] sm:$0xff]
      %v305 = vld [vmem:[#allocation2 + $0x60] sm:$0xff]
      %v306 = vld [vmem:[#allocation2 + $0x68] sm:$0xff]
      %v307 = vld [vmem:[#allocation2 + $0x70] sm:$0xff]
      %v308 = vld [vmem:[#allocation2 + $0x78] sm:$0xff]
      %v309 = vld [vmem:[#allocation2 + $0x80] sm:$0xff]
      %v310 = vld [vmem:[#allocation2 + $0x88] sm:$0xff]
      %v311 = vld [vmem:[#allocation2 + $0x90] sm:$0xff]
      %v312 = vld [vmem:[#allocation2 + $0x98] sm:$0xff]
      %v313 = vld [vmem:[#allocation2 + $0xa0] sm:$0xff]
      %v314 = vld [vmem:[#allocation2 + $0xa8] sm:$0xff]
      %v315 = vld [vmem:[#allocation2 + $0xb0] sm:$0xff]
      %v316 = vld [vmem:[#allocation2 + $0xb8] sm:$0xff]
      %v317 = vld [vmem:[#allocation2 + $0xc0] sm:$0xff]
      %v318 = vld [vmem:[#allocation2 + $0xc8] sm:$0xff]
      %v319 = vld [vmem:[#allocation2 + $0xd0] sm:$0xff]
      %v320 = vld [vmem:[#allocation2 + $0xd8] sm:$0xff]
      %v321 = vld [vmem:[#allocation2 + $0xe0] sm:$0xff]
      %v322 = vld [vmem:[#allocation2 + $0xe8] sm:$0xff]
      %v323 = vld [vmem:[#allocation2 + $0xf0] sm:$0xff]
      %v324 = vld [vmem:[#allocation2 + $0xf8] sm:$0xff]
      %v325 = vld [vmem:[%s227] sm:$0xf]
      %v326 = vld [vmem:[%s227 + $0x4] sm:$0xf]
      %v327 = vld [vmem:[%s227 + $0xc] sm:$0xf]
      %v328 = vld [vmem:[%s227 + $0x10] sm:$0xf]
      %v329 = vld [vmem:[%s227 + $0x18] sm:$0xf]
      %v330 = vld [vmem:[%s227 + $0x1c] sm:$0xf]
      %v331 = vld [vmem:[%s227 + $0x24] sm:$0xf]
      %v332 = vld [vmem:[%s227 + $0x28] sm:$0xf]
      %v333 = vld [vmem:[%s227 + $0x30] sm:$0xf]
      %v334 = vld [vmem:[%s227 + $0x34] sm:$0xf]
      %v335 = vld [vmem:[%s227 + $0x3c] sm:$0xf]
      %v336 = vld [vmem:[%s227 + $0x40] sm:$0xf]
      %v337 = vld [vmem:[%s227 + $0x48] sm:$0xf]
      %v338 = vld [vmem:[%s227 + $0x4c] sm:$0xf]
      %v339 = vld [vmem:[%s227 + $0x54] sm:$0xf]
      %v340 = vld [vmem:[%s227 + $0x58] sm:$0xf]
      %v341 = vld [vmem:[%s227 + $0x60] sm:$0xf]
      %v342 = vld [vmem:[%s227 + $0x64] sm:$0xf]
      %v343 = vld [vmem:[%s227 + $0x6c] sm:$0xf]
      %v344 = vld [vmem:[%s227 + $0x70] sm:$0xf]
      %v345 = vld [vmem:[%s227 + $0x78] sm:$0xf]
      %v346 = vld [vmem:[%s227 + $0x7c] sm:$0xf]
      %v347 = vld [vmem:[%s227 + $0x84] sm:$0xf]
      %v348 = vld [vmem:[%s227 + $0x88] sm:$0xf]
      %v349 = vld [vmem:[%s227 + $0x90] sm:$0xf]
      %v350 = vld [vmem:[%s227 + $0x94] sm:$0xf]
      %v351 = vld [vmem:[%s227 + $0x9c] sm:$0xf]
      %v352 = vld [vmem:[%s227 + $0xa0] sm:$0xf]
      %v353 = vld [vmem:[%s227 + $0xa8] sm:$0xf]
      %v354 = vld [vmem:[%s227 + $0xac] sm:$0xf]
      %v355 = vld [vmem:[%s227 + $0xb4] sm:$0xf]
      %v356 = vld [vmem:[%s227 + $0xb8] sm:$0xf]
      %v357 = vld [vmem:[%s240] sm:$0xf]
      %v358 = vld [vmem:[%s240 + $0x4] sm:$0xf]
      %v359 = vld [vmem:[%s240 + $0x8] sm:$0xf]
      %v360 = vld [vmem:[%s240 + $0xc] sm:$0xf]
      %v361 = vld [vmem:[%s240 + $0x10] sm:$0xf]
      %v362 = vld [vmem:[%s240 + $0x14] sm:$0xf]
      %v363 = vld [vmem:[%s240 + $0x18] sm:$0xf]
      %v364 = vld [vmem:[%s240 + $0x1c] sm:$0xf]
      %v365 = vld [vmem:[%s240 + $0x20] sm:$0xf]
      %v366 = vld [vmem:[%s240 + $0x24] sm:$0xf]
      %v367 = vld [vmem:[%s240 + $0x28] sm:$0xf]
      %v368 = vld [vmem:[%s240 + $0x2c] sm:$0xf]
      %v369 = vld [vmem:[%s240 + $0x30] sm:$0xf]
      %v370 = vld [vmem:[%s240 + $0x34] sm:$0xf]
      %v371 = vld [vmem:[%s240 + $0x38] sm:$0xf]
      %v372 = vld [vmem:[%s240 + $0x3c] sm:$0xf]
      %v405 = vunpack.c.l.b16 %v325
      %v406 = vunpack.c.l.b16 %v326
      %v407 = vunpack.c.l.b16 %v327
      %v408 = vunpack.c.l.b16 %v328
      %v409 = vunpack.c.l.b16 %v329
      %v410 = vunpack.c.l.b16 %v330
      %v411 = vunpack.c.l.b16 %v331
      %v412 = vunpack.c.l.b16 %v332
      %v413 = vunpack.c.l.b16 %v333
      %v414 = vunpack.c.l.b16 %v334
      %v415 = vunpack.c.l.b16 %v335
      %v416 = vunpack.c.l.b16 %v336
      %v417 = vunpack.c.l.b16 %v337
      %v418 = vunpack.c.l.b16 %v338
      %v419 = vunpack.c.l.b16 %v339
      %v420 = vunpack.c.l.b16 %v340
      %v421 = vunpack.c.l.b16 %v341
      %v422 = vunpack.c.l.b16 %v342
      %v423 = vunpack.c.l.b16 %v343
      %v424 = vunpack.c.l.b16 %v344
      %v425 = vunpack.c.l.b16 %v345
      %v426 = vunpack.c.l.b16 %v346
      %v427 = vunpack.c.l.b16 %v347
      %v428 = vunpack.c.l.b16 %v348
      %v429 = vunpack.c.l.b16 %v349
      %v430 = vunpack.c.l.b16 %v350
      %v431 = vunpack.c.l.b16 %v351
      %v432 = vunpack.c.l.b16 %v352
      %v433 = vunpack.c.l.b16 %v353
      %v434 = vunpack.c.l.b16 %v354
      %v435 = vunpack.c.l.b16 %v355
      %v436 = vunpack.c.l.b16 %v356
      %v437 = vpack.c.b16 %v406, %v405
      %v438 = vpack.c.b16 %v408, %v407
      %v439 = vpack.c.b16 %v410, %v409
      %v440 = vpack.c.b16 %v412, %v411
      %v441 = vpack.c.b16 %v414, %v413
      %v442 = vpack.c.b16 %v416, %v415
      %v443 = vpack.c.b16 %v418, %v417
      %v444 = vpack.c.b16 %v420, %v419
      %v445 = vpack.c.b16 %v422, %v421
      %v446 = vpack.c.b16 %v424, %v423
      %v447 = vpack.c.b16 %v426, %v425
      %v448 = vpack.c.b16 %v428, %v427
      %v449 = vpack.c.b16 %v430, %v429
      %v450 = vpack.c.b16 %v432, %v431
      %v451 = vpack.c.b16 %v434, %v433
      %v452 = vpack.c.b16 %v436, %v435
      %v485 = vunpack.c.l.b16 %v357
      %v486 = vunpack.c.l.b16 %v358
      %v487 = vunpack.c.l.b16 %v359
      %v488 = vunpack.c.l.b16 %v360
      %v489 = vunpack.c.l.b16 %v361
      %v490 = vunpack.c.l.b16 %v362
      %v491 = vunpack.c.l.b16 %v363
      %v492 = vunpack.c.l.b16 %v364
      %v493 = vunpack.c.l.b16 %v365
      %v494 = vunpack.c.l.b16 %v366
      %v495 = vunpack.c.l.b16 %v367
      %v496 = vunpack.c.l.b16 %v368
      %v497 = vunpack.c.l.b16 %v369
      %v498 = vunpack.c.l.b16 %v370
      %v499 = vunpack.c.l.b16 %v371
      %v500 = vunpack.c.l.b16 %v372
      %v501 = vpack.c.b16 %v486, %v485
      %v502 = vpack.c.b16 %v488, %v487
      %v503 = vpack.c.b16 %v490, %v489
      %v504 = vpack.c.b16 %v492, %v491
      %v505 = vpack.c.b16 %v494, %v493
      %v506 = vpack.c.b16 %v496, %v495
      %v507 = vpack.c.b16 %v498, %v497
      %v508 = vpack.c.b16 %v500, %v499
      %517 = vmatprep.subr.bf16.mxu0 0
      %518 = vmatpush1.bf16.msra.mxu0 %v501
      %519 = vmatprep.subr.bf16.mxu0 0
      %520 = vmatpush1.bf16.msra.mxu0 %v502
      %521 = vmatprep.subr.bf16.mxu0 0
      %522 = vmatpush1.bf16.msra.mxu0 %v503
      %523 = vmatprep.subr.bf16.mxu0 0
      %524 = vmatpush1.bf16.msra.mxu0 %v504
      %525 = vmatprep.subr.bf16.mxu0 0
      %526 = vmatpush1.bf16.msra.mxu0 %v505
      %527 = vmatprep.subr.bf16.mxu0 0
      %528 = vmatpush1.bf16.msra.mxu0 %v506
      %529 = vmatprep.subr.bf16.mxu0 0
      %530 = vmatpush1.bf16.msra.mxu0 %v507
      %531 = vmatprep.subr.bf16.mxu0 0
      %532 = vmatpush1.bf16.msra.mxu0 %v508
      %533 = vmatprep.subr.bf16.mxu0 0
      %534 = vmatpush1.bf16.msra.mxu0 0
      %535 = vmatprep.subr.bf16.mxu0 0
      %536 = vmatpush1.bf16.msra.mxu0 0
      %537 = vmatprep.subr.bf16.mxu0 0
      %538 = vmatpush1.bf16.msra.mxu0 0
      %539 = vmatprep.subr.bf16.mxu0 0
      %540 = vmatpush1.bf16.msra.mxu0 0
      %541 = vmatprep.subr.bf16.mxu0 0
      %542 = vmatpush1.bf16.msra.mxu0 0
      %543 = vmatprep.subr.bf16.mxu0 0
      %544 = vmatpush1.bf16.msra.mxu0 0
      %545 = vmatprep.subr.bf16.mxu0 0
      %546 = vmatpush1.bf16.msra.mxu0 0
      %547 = vmatprep.subr.bf16.mxu0 0
      %548 = vmatpush1.bf16.msra.mxu0 0
      %549 = vmatprep.mubr.bf16.mxu0 0
      %550 = vmatmul.mubr.bf16.gmra.mrb[0].mxu0 %v437
      %v551 = vpop.f32.mrb[0].mxu0
      %v552 = vadd.f32 0.0, %v551
      %v553 = vpop.f32.mrb[0].mxu0
      %v554 = vpop.f32.mrb[0].mxu0
      %v555 = vadd.f32 0.0, %v554
      %v556 = vpop.f32.mrb[0].mxu0
      %557 = vmatprep.mubr.bf16.mxu0 0
      %558 = vmatmul.mubr.bf16.gmra.mrb[0].mxu0 %v438
      %v559 = vpop.f32.mrb[0].mxu0
      %v560 = vadd.f32 0.0, %v559
      %v561 = vpop.f32.mrb[0].mxu0
      %v562 = vpop.f32.mrb[0].mxu0
      %v563 = vadd.f32 0.0, %v562
      %v564 = vpop.f32.mrb[0].mxu0
      %565 = vmatprep.mubr.bf16.mxu0 0
      %566 = vmatmul.mubr.bf16.gmra.mrb[0].mxu0 %v439
      %v567 = vpop.f32.mrb[0].mxu0
      %v568 = vadd.f32 0.0, %v567
      %v569 = vpop.f32.mrb[0].mxu0
      %v570 = vpop.f32.mrb[0].mxu0
      %v571 = vadd.f32 0.0, %v570
      %v572 = vpop.f32.mrb[0].mxu0
      %573 = vmatprep.mubr.bf16.mxu0 0
      %574 = vmatmul.mubr.bf16.gmra.mrb[0].mxu0 %v440
      %v575 = vpop.f32.mrb[0].mxu0
      %v576 = vadd.f32 0.0, %v575
      %v577 = vpop.f32.mrb[0].mxu0
      %v578 = vpop.f32.mrb[0].mxu0
      %v579 = vadd.f32 0.0, %v578
      %v580 = vpop.f32.mrb[0].mxu0
      %581 = vmatprep.mubr.bf16.mxu0 0
      %582 = vmatmul.mubr.bf16.gmra.mrb[0].mxu0 %v441
      %v583 = vpop.f32.mrb[0].mxu0
      %v584 = vadd.f32 0.0, %v583
      %v585 = vpop.f32.mrb[0].mxu0
      %v586 = vpop.f32.mrb[0].mxu0
      %v587 = vadd.f32 0.0, %v586
      %v588 = vpop.f32.mrb[0].mxu0
      %589 = vmatprep.mubr.bf16.mxu0 0
      %590 = vmatmul.mubr.bf16.gmra.mrb[0].mxu0 %v442
      %v591 = vpop.f32.mrb[0].mxu0
      %v592 = vadd.f32 0.0, %v591
      %v593 = vpop.f32.mrb[0].mxu0
      %v594 = vpop.f32.mrb[0].mxu0
      %v595 = vadd.f32 0.0, %v594
      %v596 = vpop.f32.mrb[0].mxu0
      %597 = vmatprep.mubr.bf16.mxu0 0
      %598 = vmatmul.mubr.bf16.gmra.mrb[0].mxu0 %v443
      %v599 = vpop.f32.mrb[0].mxu0
      %v600 = vadd.f32 0.0, %v599
      %v601 = vpop.f32.mrb[0].mxu0
      %v602 = vpop.f32.mrb[0].mxu0
      %v603 = vadd.f32 0.0, %v602
      %v604 = vpop.f32.mrb[0].mxu0
      %605 = vmatprep.mubr.bf16.mxu0 0
      %606 = vmatmul.mubr.bf16.gmra.mrb[0].mxu0 %v444
      %v607 = vpop.f32.mrb[0].mxu0
      %v608 = vadd.f32 0.0, %v607
      %v609 = vpop.f32.mrb[0].mxu0
      %v610 = vpop.f32.mrb[0].mxu0
      %v611 = vadd.f32 0.0, %v610
      %v612 = vpop.f32.mrb[0].mxu0
      %613 = vmatprep.mubr.bf16.mxu0 0
      %614 = vmatmul.mubr.bf16.gmra.mrb[0].mxu0 %v445
      %v615 = vpop.f32.mrb[0].mxu0
      %v616 = vadd.f32 0.0, %v615
      %v617 = vpop.f32.mrb[0].mxu0
      %v618 = vpop.f32.mrb[0].mxu0
      %v619 = vadd.f32 0.0, %v618
      %v620 = vpop.f32.mrb[0].mxu0
      %621 = vmatprep.mubr.bf16.mxu0 0
      %622 = vmatmul.mubr.bf16.gmra.mrb[0].mxu0 %v446
      %v623 = vpop.f32.mrb[0].mxu0
      %v624 = vadd.f32 0.0, %v623
      %v625 = vpop.f32.mrb[0].mxu0
      %v626 = vpop.f32.mrb[0].mxu0
      %v627 = vadd.f32 0.0, %v626
      %v628 = vpop.f32.mrb[0].mxu0
      %629 = vmatprep.mubr.bf16.mxu0 0
      %630 = vmatmul.mubr.bf16.gmra.mrb[0].mxu0 %v447
      %v631 = vpop.f32.mrb[0].mxu0
      %v632 = vadd.f32 0.0, %v631
      %v633 = vpop.f32.mrb[0].mxu0
      %v634 = vpop.f32.mrb[0].mxu0
      %v635 = vadd.f32 0.0, %v634
      %v636 = vpop.f32.mrb[0].mxu0
      %637 = vmatprep.mubr.bf16.mxu0 0
      %638 = vmatmul.mubr.bf16.gmra.mrb[0].mxu0 %v448
      %v639 = vpop.f32.mrb[0].mxu0
      %v640 = vadd.f32 0.0, %v639
      %v641 = vpop.f32.mrb[0].mxu0
      %v642 = vpop.f32.mrb[0].mxu0
      %v643 = vadd.f32 0.0, %v642
      %v644 = vpop.f32.mrb[0].mxu0
      %645 = vmatprep.mubr.bf16.mxu0 0
      %646 = vmatmul.mubr.bf16.gmra.mrb[0].mxu0 %v449
      %v647 = vpop.f32.mrb[0].mxu0
      %v648 = vadd.f32 0.0, %v647
      %v649 = vpop.f32.mrb[0].mxu0
      %v650 = vpop.f32.mrb[0].mxu0
      %v651 = vadd.f32 0.0, %v650
      %v652 = vpop.f32.mrb[0].mxu0
      %653 = vmatprep.mubr.bf16.mxu0 0
      %654 = vmatmul.mubr.bf16.gmra.mrb[0].mxu0 %v450
      %v655 = vpop.f32.mrb[0].mxu0
      %v656 = vadd.f32 0.0, %v655
      %v657 = vpop.f32.mrb[0].mxu0
      %v658 = vpop.f32.mrb[0].mxu0
      %v659 = vadd.f32 0.0, %v658
      %v660 = vpop.f32.mrb[0].mxu0
      %661 = vmatprep.mubr.bf16.mxu0 0
      %662 = vmatmul.mubr.bf16.gmra.mrb[0].mxu0 %v451
      %v663 = vpop.f32.mrb[0].mxu0
      %v664 = vadd.f32 0.0, %v663
      %v665 = vpop.f32.mrb[0].mxu0
      %v666 = vpop.f32.mrb[0].mxu0
      %v667 = vadd.f32 0.0, %v666
      %v668 = vpop.f32.mrb[0].mxu0
      %669 = vmatprep.mubr.bf16.mxu0 0
      %670 = vmatmul.mubr.bf16.gmra.mrb[0].mxu0 %v452
      %v671 = vpop.f32.mrb[0].mxu0
      %v672 = vadd.f32 0.0, %v671
      %v673 = vpop.f32.mrb[0].mxu0
      %v674 = vpop.f32.mrb[0].mxu0
      %v675 = vadd.f32 0.0, %v674
      %v676 = vpop.f32.mrb[0].mxu0
      %677 = vdwg.mxu0
      %v678 = vadd.f32 %v293, %v552
      %v679 = vadd.f32 %v294, %v555
      %v680 = vadd.f32 %v295, %v560
      %v681 = vadd.f32 %v296, %v563
      %v682 = vadd.f32 %v297, %v568
      %v683 = vadd.f32 %v298, %v571
      %v684 = vadd.f32 %v299, %v576
      %v685 = vadd.f32 %v300, %v579
      %v686 = vadd.f32 %v301, %v584
      %v687 = vadd.f32 %v302, %v587
      %v688 = vadd.f32 %v303, %v592
      %v689 = vadd.f32 %v304, %v595
      %v690 = vadd.f32 %v305, %v600
      %v691 = vadd.f32 %v306, %v603
      %v692 = vadd.f32 %v307, %v608
      %v693 = vadd.f32 %v308, %v611
      %v694 = vadd.f32 %v309, %v616
      %v695 = vadd.f32 %v310, %v619
      %v696 = vadd.f32 %v311, %v624
      %v697 = vadd.f32 %v312, %v627
      %v698 = vadd.f32 %v313, %v632
      %v699 = vadd.f32 %v314, %v635
      %v700 = vadd.f32 %v315, %v640
      %v701 = vadd.f32 %v316, %v643
      %v702 = vadd.f32 %v317, %v648
      %v703 = vadd.f32 %v318, %v651
      %v704 = vadd.f32 %v319, %v656
      %v705 = vadd.f32 %v320, %v659
      %v706 = vadd.f32 %v321, %v664
      %v707 = vadd.f32 %v322, %v667
      %v708 = vadd.f32 %v323, %v672
      %v709 = vadd.f32 %v324, %v675
      %v710 = vld [vmem:[%s227] sm:$0xf]
      %v711 = vld [vmem:[%s227 + $0x4] sm:$0xf]
      %v712 = vld [vmem:[%s227 + $0x8] sm:$0x1]
      %v713 = vld [vmem:[%s227 + $0xc] sm:$0xf]
      %v714 = vld [vmem:[%s227 + $0x10] sm:$0xf]
      %v715 = vld [vmem:[%s227 + $0x14] sm:$0x1]
      %v716 = vld [vmem:[%s227 + $0x18] sm:$0xf]
      %v717 = vld [vmem:[%s227 + $0x1c] sm:$0xf]
      %v718 = vld [vmem:[%s227 + $0x20] sm:$0x1]
      %v719 = vld [vmem:[%s227 + $0x24] sm:$0xf]
      %v720 = vld [vmem:[%s227 + $0x28] sm:$0xf]
      %v721 = vld [vmem:[%s227 + $0x2c] sm:$0x1]
      %v722 = vld [vmem:[%s227 + $0x30] sm:$0xf]
      %v723 = vld [vmem:[%s227 + $0x34] sm:$0xf]
      %v724 = vld [vmem:[%s227 + $0x38] sm:$0x1]
      %v725 = vld [vmem:[%s227 + $0x3c] sm:$0xf]
      %v726 = vld [vmem:[%s227 + $0x40] sm:$0xf]
      %v727 = vld [vmem:[%s227 + $0x44] sm:$0x1]
      %v728 = vld [vmem:[%s227 + $0x48] sm:$0xf]
      %v729 = vld [vmem:[%s227 + $0x4c] sm:$0xf]
      %v730 = vld [vmem:[%s227 + $0x50] sm:$0x1]
      %v731 = vld [vmem:[%s227 + $0x54] sm:$0xf]
      %v732 = vld [vmem:[%s227 + $0x58] sm:$0xf]
      %v733 = vld [vmem:[%s227 + $0x5c] sm:$0x1]
      %v734 = vld [vmem:[%s227 + $0x60] sm:$0xf]
      %v735 = vld [vmem:[%s227 + $0x64] sm:$0xf]
      %v736 = vld [vmem:[%s227 + $0x68] sm:$0x1]
      %v737 = vld [vmem:[%s227 + $0x6c] sm:$0xf]
      %v738 = vld [vmem:[%s227 + $0x70] sm:$0xf]
      %v739 = vld [vmem:[%s227 + $0x74] sm:$0x1]
      %v740 = vld [vmem:[%s227 + $0x78] sm:$0xf]
      %v741 = vld [vmem:[%s227 + $0x7c] sm:$0xf]
      %v742 = vld [vmem:[%s227 + $0x80] sm:$0x1]
      %v743 = vld [vmem:[%s227 + $0x84] sm:$0xf]
      %v744 = vld [vmem:[%s227 + $0x88] sm:$0xf]
      %v745 = vld [vmem:[%s227 + $0x8c] sm:$0x1]
      %v746 = vld [vmem:[%s227 + $0x90] sm:$0xf]
      %v747 = vld [vmem:[%s227 + $0x94] sm:$0xf]
      %v748 = vld [vmem:[%s227 + $0x98] sm:$0x1]
      %v749 = vld [vmem:[%s227 + $0x9c] sm:$0xf]
      %v750 = vld [vmem:[%s227 + $0xa0] sm:$0xf]
      %v751 = vld [vmem:[%s227 + $0xa4] sm:$0x1]
      %v752 = vld [vmem:[%s227 + $0xa8] sm:$0xf]
      %v753 = vld [vmem:[%s227 + $0xac] sm:$0xf]
      %v754 = vld [vmem:[%s227 + $0xb0] sm:$0x1]
      %v755 = vld [vmem:[%s227 + $0xb4] sm:$0xf]
      %v756 = vld [vmem:[%s227 + $0xb8] sm:$0xf]
      %v757 = vld [vmem:[%s227 + $0xbc] sm:$0x1]
      %vm758 = vsmask.f32 3328
      %vm759 = vsmask.f32 7440
      %vm760 = vmor %vm758, %vm759
      %v762 = vshrl.u32 %v710, 16
      %v764 = vrot.slane %v762, 4
      %v765 = vshll.u32 %v710, 16
      %v767 = vrot.slane %v765, 5
      %v768 = vor.u32 %v764, %v767
      %v769 = vrot.slane %v768, 4
      %v771 = vshll.u32 %v711, 16
      %v773 = vrot.slane %v771, 5
      %v774 = vsel %vm760, %v769, %v773
      %v775 = vshrl.u32 %v711, 16
      %v777 = vrot.slane %v775, 4
      %v778 = vor.u32 %v777, %v773
      %v779 = vrot.slane %v778, 4
      %v781 = vshll.u32 %v712, 16
      %v783 = vrot.slane %v781, 5
      %v784 = vsel %vm760, %v779, %v783
      %v786 = vshrl.u32 %v713, 16
      %v788 = vrot.slane %v786, 4
      %v789 = vshll.u32 %v713, 16
      %v791 = vrot.slane %v789, 5
      %v792 = vor.u32 %v788, %v791
      %v793 = vrot.slane %v792, 4
      %v795 = vshll.u32 %v714, 16
      %v797 = vrot.slane %v795, 5
      %v798 = vsel %vm760, %v793, %v797
      %v799 = vshrl.u32 %v714, 16
      %v801 = vrot.slane %v799, 4
      %v802 = vor.u32 %v801, %v797
      %v803 = vrot.slane %v802, 4
      %v805 = vshll.u32 %v715, 16
      %v807 = vrot.slane %v805, 5
      %v808 = vsel %vm760, %v803, %v807
      %v810 = vshrl.u32 %v716, 16
      %v812 = vrot.slane %v810, 4
      %v813 = vshll.u32 %v716, 16
      %v815 = vrot.slane %v813, 5
      %v816 = vor.u32 %v812, %v815
      %v817 = vrot.slane %v816, 4
      %v819 = vshll.u32 %v717, 16
      %v821 = vrot.slane %v819, 5
      %v822 = vsel %vm760, %v817, %v821
      %v823 = vshrl.u32 %v717, 16
      %v825 = vrot.slane %v823, 4
      %v826 = vor.u32 %v825, %v821
      %v827 = vrot.slane %v826, 4
      %v829 = vshll.u32 %v718, 16
      %v831 = vrot.slane %v829, 5
      %v832 = vsel %vm760, %v827, %v831
      %v834 = vshrl.u32 %v719, 16
      %v836 = vrot.slane %v834, 4
      %v837 = vshll.u32 %v719, 16
      %v839 = vrot.slane %v837, 5
      %v840 = vor.u32 %v836, %v839
      %v841 = vrot.slane %v840, 4
      %v843 = vshll.u32 %v720, 16
      %v845 = vrot.slane %v843, 5
      %v846 = vsel %vm760, %v841, %v845
      %v847 = vshrl.u32 %v720, 16
      %v849 = vrot.slane %v847, 4
      %v850 = vor.u32 %v849, %v845
      %v851 = vrot.slane %v850, 4
      %v853 = vshll.u32 %v721, 16
      %v855 = vrot.slane %v853, 5
      %v856 = vsel %vm760, %v851, %v855
      %v858 = vshrl.u32 %v722, 16
      %v860 = vrot.slane %v858, 4
      %v861 = vshll.u32 %v722, 16
      %v863 = vrot.slane %v861, 5
      %v864 = vor.u32 %v860, %v863
      %v865 = vrot.slane %v864, 4
      %v867 = vshll.u32 %v723, 16
      %v869 = vrot.slane %v867, 5
      %v870 = vsel %vm760, %v865, %v869
      %v871 = vshrl.u32 %v723, 16
      %v873 = vrot.slane %v871, 4
      %v874 = vor.u32 %v873, %v869
      %v875 = vrot.slane %v874, 4
      %v877 = vshll.u32 %v724, 16
      %v879 = vrot.slane %v877, 5
      %v880 = vsel %vm760, %v875, %v879
      %v882 = vshrl.u32 %v725, 16
      %v884 = vrot.slane %v882, 4
      %v885 = vshll.u32 %v725, 16
      %v887 = vrot.slane %v885, 5
      %v888 = vor.u32 %v884, %v887
      %v889 = vrot.slane %v888, 4
      %v891 = vshll.u32 %v726, 16
      %v893 = vrot.slane %v891, 5
      %v894 = vsel %vm760, %v889, %v893
      %v895 = vshrl.u32 %v726, 16
      %v897 = vrot.slane %v895, 4
      %v898 = vor.u32 %v897, %v893
      %v899 = vrot.slane %v898, 4
      %v901 = vshll.u32 %v727, 16
      %v903 = vrot.slane %v901, 5
      %v904 = vsel %vm760, %v899, %v903
      %v906 = vshrl.u32 %v728, 16
      %v908 = vrot.slane %v906, 4
      %v909 = vshll.u32 %v728, 16
      %v911 = vrot.slane %v909, 5
      %v912 = vor.u32 %v908, %v911
      %v913 = vrot.slane %v912, 4
      %v915 = vshll.u32 %v729, 16
      %v917 = vrot.slane %v915, 5
      %v918 = vsel %vm760, %v913, %v917
      %v919 = vshrl.u32 %v729, 16
      %v921 = vrot.slane %v919, 4
      %v922 = vor.u32 %v921, %v917
      %v923 = vrot.slane %v922, 4
      %v925 = vshll.u32 %v730, 16
      %v927 = vrot.slane %v925, 5
      %v928 = vsel %vm760, %v923, %v927
      %v930 = vshrl.u32 %v731, 16
      %v932 = vrot.slane %v930, 4
      %v933 = vshll.u32 %v731, 16
      %v935 = vrot.slane %v933, 5
      %v936 = vor.u32 %v932, %v935
      %v937 = vrot.slane %v936, 4
      %v939 = vshll.u32 %v732, 16
      %v941 = vrot.slane %v939, 5
      %v942 = vsel %vm760, %v937, %v941
      %v943 = vshrl.u32 %v732, 16
      %v945 = vrot.slane %v943, 4
      %v946 = vor.u32 %v945, %v941
      %v947 = vrot.slane %v946, 4
      %v949 = vshll.u32 %v733, 16
      %v951 = vrot.slane %v949, 5
      %v952 = vsel %vm760, %v947, %v951
      %v954 = vshrl.u32 %v734, 16
      %v956 = vrot.slane %v954, 4
      %v957 = vshll.u32 %v734, 16
      %v959 = vrot.slane %v957, 5
      %v960 = vor.u32 %v956, %v959
      %v961 = vrot.slane %v960, 4
      %v963 = vshll.u32 %v735, 16
      %v965 = vrot.slane %v963, 5
      %v966 = vsel %vm760, %v961, %v965
      %v967 = vshrl.u32 %v735, 16
      %v969 = vrot.slane %v967, 4
      %v970 = vor.u32 %v969, %v965
      %v971 = vrot.slane %v970, 4
      %v973 = vshll.u32 %v736, 16
      %v975 = vrot.slane %v973, 5
      %v976 = vsel %vm760, %v971, %v975
      %v978 = vshrl.u32 %v737, 16
      %v980 = vrot.slane %v978, 4
      %v981 = vshll.u32 %v737, 16
      %v983 = vrot.slane %v981, 5
      %v984 = vor.u32 %v980, %v983
      %v985 = vrot.slane %v984, 4
      %v987 = vshll.u32 %v738, 16
      %v989 = vrot.slane %v987, 5
      %v990 = vsel %vm760, %v985, %v989
      %v991 = vshrl.u32 %v738, 16
      %v993 = vrot.slane %v991, 4
      %v994 = vor.u32 %v993, %v989
      %v995 = vrot.slane %v994, 4
      %v997 = vshll.u32 %v739, 16
      %v999 = vrot.slane %v997, 5
      %v1000 = vsel %vm760, %v995, %v999
      %v1002 = vshrl.u32 %v740, 16
      %v1004 = vrot.slane %v1002, 4
      %v1005 = vshll.u32 %v740, 16
      %v1007 = vrot.slane %v1005, 5
      %v1008 = vor.u32 %v1004, %v1007
      %v1009 = vrot.slane %v1008, 4
      %v1011 = vshll.u32 %v741, 16
      %v1013 = vrot.slane %v1011, 5
      %v1014 = vsel %vm760, %v1009, %v1013
      %v1015 = vshrl.u32 %v741, 16
      %v1017 = vrot.slane %v1015, 4
      %v1018 = vor.u32 %v1017, %v1013
      %v1019 = vrot.slane %v1018, 4
      %v1021 = vshll.u32 %v742, 16
      %v1023 = vrot.slane %v1021, 5
      %v1024 = vsel %vm760, %v1019, %v1023
      %v1026 = vshrl.u32 %v743, 16
      %v1028 = vrot.slane %v1026, 4
      %v1029 = vshll.u32 %v743, 16
      %v1031 = vrot.slane %v1029, 5
      %v1032 = vor.u32 %v1028, %v1031
      %v1033 = vrot.slane %v1032, 4
      %v1035 = vshll.u32 %v744, 16
      %v1037 = vrot.slane %v1035, 5
      %v1038 = vsel %vm760, %v1033, %v1037
      %v1039 = vshrl.u32 %v744, 16
      %v1041 = vrot.slane %v1039, 4
      %v1042 = vor.u32 %v1041, %v1037
      %v1043 = vrot.slane %v1042, 4
      %v1045 = vshll.u32 %v745, 16
      %v1047 = vrot.slane %v1045, 5
      %v1048 = vsel %vm760, %v1043, %v1047
      %v1050 = vshrl.u32 %v746, 16
      %v1052 = vrot.slane %v1050, 4
      %v1053 = vshll.u32 %v746, 16
      %v1055 = vrot.slane %v1053, 5
      %v1056 = vor.u32 %v1052, %v1055
      %v1057 = vrot.slane %v1056, 4
      %v1059 = vshll.u32 %v747, 16
      %v1061 = vrot.slane %v1059, 5
      %v1062 = vsel %vm760, %v1057, %v1061
      %v1063 = vshrl.u32 %v747, 16
      %v1065 = vrot.slane %v1063, 4
      %v1066 = vor.u32 %v1065, %v1061
      %v1067 = vrot.slane %v1066, 4
      %v1069 = vshll.u32 %v748, 16
      %v1071 = vrot.slane %v1069, 5
      %v1072 = vsel %vm760, %v1067, %v1071
      %v1074 = vshrl.u32 %v749, 16
      %v1076 = vrot.slane %v1074, 4
      %v1077 = vshll.u32 %v749, 16
      %v1079 = vrot.slane %v1077, 5
      %v1080 = vor.u32 %v1076, %v1079
      %v1081 = vrot.slane %v1080, 4
      %v1083 = vshll.u32 %v750, 16
      %v1085 = vrot.slane %v1083, 5
      %v1086 = vsel %vm760, %v1081, %v1085
      %v1087 = vshrl.u32 %v750, 16
      %v1089 = vrot.slane %v1087, 4
      %v1090 = vor.u32 %v1089, %v1085
      %v1091 = vrot.slane %v1090, 4
      %v1093 = vshll.u32 %v751, 16
      %v1095 = vrot.slane %v1093, 5
      %v1096 = vsel %vm760, %v1091, %v1095
      %v1098 = vshrl.u32 %v752, 16
      %v1100 = vrot.slane %v1098, 4
      %v1101 = vshll.u32 %v752, 16
      %v1103 = vrot.slane %v1101, 5
      %v1104 = vor.u32 %v1100, %v1103
      %v1105 = vrot.slane %v1104, 4
      %v1107 = vshll.u32 %v753, 16
      %v1109 = vrot.slane %v1107, 5
      %v1110 = vsel %vm760, %v1105, %v1109
      %v1111 = vshrl.u32 %v753, 16
      %v1113 = vrot.slane %v1111, 4
      %v1114 = vor.u32 %v1113, %v1109
      %v1115 = vrot.slane %v1114, 4
      %v1117 = vshll.u32 %v754, 16
      %v1119 = vrot.slane %v1117, 5
      %v1120 = vsel %vm760, %v1115, %v1119
      %v1122 = vshrl.u32 %v755, 16
      %v1124 = vrot.slane %v1122, 4
      %v1125 = vshll.u32 %v755, 16
      %v1127 = vrot.slane %v1125, 5
      %v1128 = vor.u32 %v1124, %v1127
      %v1129 = vrot.slane %v1128, 4
      %v1131 = vshll.u32 %v756, 16
      %v1133 = vrot.slane %v1131, 5
      %v1134 = vsel %vm760, %v1129, %v1133
      %v1135 = vshrl.u32 %v756, 16
      %v1137 = vrot.slane %v1135, 4
      %v1138 = vor.u32 %v1137, %v1133
      %v1139 = vrot.slane %v1138, 4
      %v1141 = vshll.u32 %v757, 16
      %v1143 = vrot.slane %v1141, 5
      %v1144 = vsel %vm760, %v1139, %v1143
      %s1145 = scalar_lea.vmem %s240, 64
      %v1146 = vld [vmem:[%s1145] sm:$0xf]
      %v1147 = vld [vmem:[%s1145 + $0x4] sm:$0xf]
      %v1148 = vld [vmem:[%s1145 + $0x8] sm:$0xf]
      %v1149 = vld [vmem:[%s1145 + $0xc] sm:$0xf]
      %v1150 = vld [vmem:[%s1145 + $0x10] sm:$0xf]
      %v1151 = vld [vmem:[%s1145 + $0x14] sm:$0xf]
      %v1152 = vld [vmem:[%s1145 + $0x18] sm:$0xf]
      %v1153 = vld [vmem:[%s1145 + $0x1c] sm:$0xf]
      %v1154 = vld [vmem:[%s1145 + $0x20] sm:$0xf]
      %v1155 = vld [vmem:[%s1145 + $0x24] sm:$0xf]
      %v1156 = vld [vmem:[%s1145 + $0x28] sm:$0xf]
      %v1157 = vld [vmem:[%s1145 + $0x2c] sm:$0xf]
      %v1158 = vld [vmem:[%s1145 + $0x30] sm:$0xf]
      %v1159 = vld [vmem:[%s1145 + $0x34] sm:$0xf]
      %v1160 = vld [vmem:[%s1145 + $0x38] sm:$0xf]
      %v1161 = vld [vmem:[%s1145 + $0x3c] sm:$0xf]
      %v1162 = vunpack.c.l.b16 %v774
      %v1163 = vunpack.c.l.b16 %v784
      %v1164 = vunpack.c.l.b16 %v798
      %v1165 = vunpack.c.l.b16 %v808
      %v1166 = vunpack.c.l.b16 %v822
      %v1167 = vunpack.c.l.b16 %v832
      %v1168 = vunpack.c.l.b16 %v846
      %v1169 = vunpack.c.l.b16 %v856
      %v1170 = vunpack.c.l.b16 %v870
      %v1171 = vunpack.c.l.b16 %v880
      %v1172 = vunpack.c.l.b16 %v894
      %v1173 = vunpack.c.l.b16 %v904
      %v1174 = vunpack.c.l.b16 %v918
      %v1175 = vunpack.c.l.b16 %v928
      %v1176 = vunpack.c.l.b16 %v942
      %v1177 = vunpack.c.l.b16 %v952
      %v1178 = vunpack.c.l.b16 %v966
      %v1179 = vunpack.c.l.b16 %v976
      %v1180 = vunpack.c.l.b16 %v990
      %v1181 = vunpack.c.l.b16 %v1000
      %v1182 = vunpack.c.l.b16 %v1014
      %v1183 = vunpack.c.l.b16 %v1024
      %v1184 = vunpack.c.l.b16 %v1038
      %v1185 = vunpack.c.l.b16 %v1048
      %v1186 = vunpack.c.l.b16 %v1062
      %v1187 = vunpack.c.l.b16 %v1072
      %v1188 = vunpack.c.l.b16 %v1086
      %v1189 = vunpack.c.l.b16 %v1096
      %v1190 = vunpack.c.l.b16 %v1110
      %v1191 = vunpack.c.l.b16 %v1120
      %v1192 = vunpack.c.l.b16 %v1134
      %v1193 = vunpack.c.l.b16 %v1144
      %v1194 = vpack.c.b16 %v1163, %v1162
      %v1195 = vpack.c.b16 %v1165, %v1164
      %v1196 = vpack.c.b16 %v1167, %v1166
      %v1197 = vpack.c.b16 %v1169, %v1168
      %v1198 = vpack.c.b16 %v1171, %v1170
      %v1199 = vpack.c.b16 %v1173, %v1172
      %v1200 = vpack.c.b16 %v1175, %v1174
      %v1201 = vpack.c.b16 %v1177, %v1176
      %v1202 = vpack.c.b16 %v1179, %v1178
      %v1203 = vpack.c.b16 %v1181, %v1180
      %v1204 = vpack.c.b16 %v1183, %v1182
      %v1205 = vpack.c.b16 %v1185, %v1184
      %v1206 = vpack.c.b16 %v1187, %v1186
      %v1207 = vpack.c.b16 %v1189, %v1188
      %v1208 = vpack.c.b16 %v1191, %v1190
      %v1209 = vpack.c.b16 %v1193, %v1192
      %v1242 = vunpack.c.l.b16 %v1146
      %v1243 = vunpack.c.l.b16 %v1147
      %v1244 = vunpack.c.l.b16 %v1148
      %v1245 = vunpack.c.l.b16 %v1149
      %v1246 = vunpack.c.l.b16 %v1150
      %v1247 = vunpack.c.l.b16 %v1151
      %v1248 = vunpack.c.l.b16 %v1152
      %v1249 = vunpack.c.l.b16 %v1153
      %v1250 = vunpack.c.l.b16 %v1154
      %v1251 = vunpack.c.l.b16 %v1155
      %v1252 = vunpack.c.l.b16 %v1156
      %v1253 = vunpack.c.l.b16 %v1157
      %v1254 = vunpack.c.l.b16 %v1158
      %v1255 = vunpack.c.l.b16 %v1159
      %v1256 = vunpack.c.l.b16 %v1160
      %v1257 = vunpack.c.l.b16 %v1161
      %v1258 = vpack.c.b16 %v1243, %v1242
      %v1259 = vpack.c.b16 %v1245, %v1244
      %v1260 = vpack.c.b16 %v1247, %v1246
      %v1261 = vpack.c.b16 %v1249, %v1248
      %v1262 = vpack.c.b16 %v1251, %v1250
      %v1263 = vpack.c.b16 %v1253, %v1252
      %v1264 = vpack.c.b16 %v1255, %v1254
      %v1265 = vpack.c.b16 %v1257, %v1256
      %1274 = vmatprep.subr.bf16.mxu0 0
      %1275 = vmatpush1.bf16.msra.mxu0 %v1258
      %1276 = vmatprep.subr.bf16.mxu0 0
      %1277 = vmatpush1.bf16.msra.mxu0 %v1259
      %1278 = vmatprep.subr.bf16.mxu0 0
      %1279 = vmatpush1.bf16.msra.mxu0 %v1260
      %1280 = vmatprep.subr.bf16.mxu0 0
      %1281 = vmatpush1.bf16.msra.mxu0 %v1261
      %1282 = vmatprep.subr.bf16.mxu0 0
      %1283 = vmatpush1.bf16.msra.mxu0 %v1262
      %1284 = vmatprep.subr.bf16.mxu0 0
      %1285 = vmatpush1.bf16.msra.mxu0 %v1263
      %1286 = vmatprep.subr.bf16.mxu0 0
      %1287 = vmatpush1.bf16.msra.mxu0 %v1264
      %1288 = vmatprep.subr.bf16.mxu0 0
      %1289 = vmatpush1.bf16.msra.mxu0 %v1265
      %1290 = vmatprep.subr.bf16.mxu0 0
      %1291 = vmatpush1.bf16.msra.mxu0 0
      %1292 = vmatprep.subr.bf16.mxu0 0
      %1293 = vmatpush1.bf16.msra.mxu0 0
      %1294 = vmatprep.subr.bf16.mxu0 0
      %1295 = vmatpush1.bf16.msra.mxu0 0
      %1296 = vmatprep.subr.bf16.mxu0 0
      %1297 = vmatpush1.bf16.msra.mxu0 0
      %1298 = vmatprep.subr.bf16.mxu0 0
      %1299 = vmatpush1.bf16.msra.mxu0 0
      %1300 = vmatprep.subr.bf16.mxu0 0
      %1301 = vmatpush1.bf16.msra.mxu0 0
      %1302 = vmatprep.subr.bf16.mxu0 0
      %1303 = vmatpush1.bf16.msra.mxu0 0
      %1304 = vmatprep.subr.bf16.mxu0 0
      %1305 = vmatpush1.bf16.msra.mxu0 0
      %1306 = vmatprep.mubr.bf16.mxu0 0
      %1307 = vmatmul.mubr.bf16.gmra.mrb[0].mxu0 %v1194
      %v1308 = vpop.f32.mrb[0].mxu0
      %v1309 = vadd.f32 0.0, %v1308
      %v1310 = vpop.f32.mrb[0].mxu0
      %v1311 = vpop.f32.mrb[0].mxu0
      %v1312 = vadd.f32 0.0, %v1311
      %v1313 = vpop.f32.mrb[0].mxu0
      %1314 = vmatprep.mubr.bf16.mxu0 0
      %1315 = vmatmul.mubr.bf16.gmra.mrb[0].mxu0 %v1195
      %v1316 = vpop.f32.mrb[0].mxu0
      %v1317 = vadd.f32 0.0, %v1316
      %v1318 = vpop.f32.mrb[0].mxu0
      %v1319 = vpop.f32.mrb[0].mxu0
      %v1320 = vadd.f32 0.0, %v1319
      %v1321 = vpop.f32.mrb[0].mxu0
      %1322 = vmatprep.mubr.bf16.mxu0 0
      %1323 = vmatmul.mubr.bf16.gmra.mrb[0].mxu0 %v1196
      %v1324 = vpop.f32.mrb[0].mxu0
      %v1325 = vadd.f32 0.0, %v1324
      %v1326 = vpop.f32.mrb[0].mxu0
      %v1327 = vpop.f32.mrb[0].mxu0
      %v1328 = vadd.f32 0.0, %v1327
      %v1329 = vpop.f32.mrb[0].mxu0
      %1330 = vmatprep.mubr.bf16.mxu0 0
      %1331 = vmatmul.mubr.bf16.gmra.mrb[0].mxu0 %v1197
      %v1332 = vpop.f32.mrb[0].mxu0
      %v1333 = vadd.f32 0.0, %v1332
      %v1334 = vpop.f32.mrb[0].mxu0
      %v1335 = vpop.f32.mrb[0].mxu0
      %v1336 = vadd.f32 0.0, %v1335
      %v1337 = vpop.f32.mrb[0].mxu0
      %1338 = vmatprep.mubr.bf16.mxu0 0
      %1339 = vmatmul.mubr.bf16.gmra.mrb[0].mxu0 %v1198
      %v1340 = vpop.f32.mrb[0].mxu0
      %v1341 = vadd.f32 0.0, %v1340
      %v1342 = vpop.f32.mrb[0].mxu0
      %v1343 = vpop.f32.mrb[0].mxu0
      %v1344 = vadd.f32 0.0, %v1343
      %v1345 = vpop.f32.mrb[0].mxu0
      %1346 = vmatprep.mubr.bf16.mxu0 0
      %1347 = vmatmul.mubr.bf16.gmra.mrb[0].mxu0 %v1199
      %v1348 = vpop.f32.mrb[0].mxu0
      %v1349 = vadd.f32 0.0, %v1348
      %v1350 = vpop.f32.mrb[0].mxu0
      %v1351 = vpop.f32.mrb[0].mxu0
      %v1352 = vadd.f32 0.0, %v1351
      %v1353 = vpop.f32.mrb[0].mxu0
      %1354 = vmatprep.mubr.bf16.mxu0 0
      %1355 = vmatmul.mubr.bf16.gmra.mrb[0].mxu0 %v1200
      %v1356 = vpop.f32.mrb[0].mxu0
      %v1357 = vadd.f32 0.0, %v1356
      %v1358 = vpop.f32.mrb[0].mxu0
      %v1359 = vpop.f32.mrb[0].mxu0
      %v1360 = vadd.f32 0.0, %v1359
      %v1361 = vpop.f32.mrb[0].mxu0
      %1362 = vmatprep.mubr.bf16.mxu0 0
      %1363 = vmatmul.mubr.bf16.gmra.mrb[0].mxu0 %v1201
      %v1364 = vpop.f32.mrb[0].mxu0
      %v1365 = vadd.f32 0.0, %v1364
      %v1366 = vpop.f32.mrb[0].mxu0
      %v1367 = vpop.f32.mrb[0].mxu0
      %v1368 = vadd.f32 0.0, %v1367
      %v1369 = vpop.f32.mrb[0].mxu0
      %1370 = vmatprep.mubr.bf16.mxu0 0
      %1371 = vmatmul.mubr.bf16.gmra.mrb[0].mxu0 %v1202
      %v1372 = vpop.f32.mrb[0].mxu0
      %v1373 = vadd.f32 0.0, %v1372
      %v1374 = vpop.f32.mrb[0].mxu0
      %v1375 = vpop.f32.mrb[0].mxu0
      %v1376 = vadd.f32 0.0, %v1375
      %v1377 = vpop.f32.mrb[0].mxu0
      %1378 = vmatprep.mubr.bf16.mxu0 0
      %1379 = vmatmul.mubr.bf16.gmra.mrb[0].mxu0 %v1203
      %v1380 = vpop.f32.mrb[0].mxu0
      %v1381 = vadd.f32 0.0, %v1380
      %v1382 = vpop.f32.mrb[0].mxu0
      %v1383 = vpop.f32.mrb[0].mxu0
      %v1384 = vadd.f32 0.0, %v1383
      %v1385 = vpop.f32.mrb[0].mxu0
      %1386 = vmatprep.mubr.bf16.mxu0 0
      %1387 = vmatmul.mubr.bf16.gmra.mrb[0].mxu0 %v1204
      %v1388 = vpop.f32.mrb[0].mxu0
      %v1389 = vadd.f32 0.0, %v1388
      %v1390 = vpop.f32.mrb[0].mxu0
      %v1391 = vpop.f32.mrb[0].mxu0
      %v1392 = vadd.f32 0.0, %v1391
      %v1393 = vpop.f32.mrb[0].mxu0
      %1394 = vmatprep.mubr.bf16.mxu0 0
      %1395 = vmatmul.mubr.bf16.gmra.mrb[0].mxu0 %v1205
      %v1396 = vpop.f32.mrb[0].mxu0
      %v1397 = vadd.f32 0.0, %v1396
      %v1398 = vpop.f32.mrb[0].mxu0
      %v1399 = vpop.f32.mrb[0].mxu0
      %v1400 = vadd.f32 0.0, %v1399
      %v1401 = vpop.f32.mrb[0].mxu0
      %1402 = vmatprep.mubr.bf16.mxu0 0
      %1403 = vmatmul.mubr.bf16.gmra.mrb[0].mxu0 %v1206
      %v1404 = vpop.f32.mrb[0].mxu0
      %v1405 = vadd.f32 0.0, %v1404
      %v1406 = vpop.f32.mrb[0].mxu0
      %v1407 = vpop.f32.mrb[0].mxu0
      %v1408 = vadd.f32 0.0, %v1407
      %v1409 = vpop.f32.mrb[0].mxu0
      %1410 = vmatprep.mubr.bf16.mxu0 0
      %1411 = vmatmul.mubr.bf16.gmra.mrb[0].mxu0 %v1207
      %v1412 = vpop.f32.mrb[0].mxu0
      %v1413 = vadd.f32 0.0, %v1412
      %v1414 = vpop.f32.mrb[0].mxu0
      %v1415 = vpop.f32.mrb[0].mxu0
      %v1416 = vadd.f32 0.0, %v1415
      %v1417 = vpop.f32.mrb[0].mxu0
      %1418 = vmatprep.mubr.bf16.mxu0 0
      %1419 = vmatmul.mubr.bf16.gmra.mrb[0].mxu0 %v1208
      %v1420 = vpop.f32.mrb[0].mxu0
      %v1421 = vadd.f32 0.0, %v1420
      %v1422 = vpop.f32.mrb[0].mxu0
      %v1423 = vpop.f32.mrb[0].mxu0
      %v1424 = vadd.f32 0.0, %v1423
      %v1425 = vpop.f32.mrb[0].mxu0
      %1426 = vmatprep.mubr.bf16.mxu0 0
      %1427 = vmatmul.mubr.bf16.gmra.mrb[0].mxu0 %v1209
      %v1428 = vpop.f32.mrb[0].mxu0
      %v1429 = vadd.f32 0.0, %v1428
      %v1430 = vpop.f32.mrb[0].mxu0
      %v1431 = vpop.f32.mrb[0].mxu0
      %v1432 = vadd.f32 0.0, %v1431
      %v1433 = vpop.f32.mrb[0].mxu0
      %1434 = vdwg.mxu0
      %v1435 = vadd.f32 %v678, %v1309
      %v1436 = vadd.f32 %v679, %v1312
      %v1437 = vadd.f32 %v680, %v1317
      %v1438 = vadd.f32 %v681, %v1320
      %v1439 = vadd.f32 %v682, %v1325
      %v1440 = vadd.f32 %v683, %v1328
      %v1441 = vadd.f32 %v684, %v1333
      %v1442 = vadd.f32 %v685, %v1336
      %v1443 = vadd.f32 %v686, %v1341
      %v1444 = vadd.f32 %v687, %v1344
      %v1445 = vadd.f32 %v688, %v1349
      %v1446 = vadd.f32 %v689, %v1352
      %v1447 = vadd.f32 %v690, %v1357
      %v1448 = vadd.f32 %v691, %v1360
      %v1449 = vadd.f32 %v692, %v1365
      %v1450 = vadd.f32 %v693, %v1368
      %v1451 = vadd.f32 %v694, %v1373
      %v1452 = vadd.f32 %v695, %v1376
      %v1453 = vadd.f32 %v696, %v1381
      %v1454 = vadd.f32 %v697, %v1384
      %v1455 = vadd.f32 %v698, %v1389
      %v1456 = vadd.f32 %v699, %v1392
      %v1457 = vadd.f32 %v700, %v1397
      %v1458 = vadd.f32 %v701, %v1400
      %v1459 = vadd.f32 %v702, %v1405
      %v1460 = vadd.f32 %v703, %v1408
      %v1461 = vadd.f32 %v704, %v1413
      %v1462 = vadd.f32 %v705, %v1416
      %v1463 = vadd.f32 %v706, %v1421
      %v1464 = vadd.f32 %v707, %v1424
      %v1465 = vadd.f32 %v708, %v1429
      %v1466 = vadd.f32 %v709, %v1432
      %v1467 = vld [vmem:[%s227] sm:$0xe]
      %v1468 = vld [vmem:[%s227 + $0xc] sm:$0xe]
      %v1469 = vld [vmem:[%s227 + $0x18] sm:$0xe]
      %v1470 = vld [vmem:[%s227 + $0x24] sm:$0xe]
      %v1471 = vld [vmem:[%s227 + $0x30] sm:$0xe]
      %v1472 = vld [vmem:[%s227 + $0x3c] sm:$0xe]
      %v1473 = vld [vmem:[%s227 + $0x48] sm:$0xe]
      %v1474 = vld [vmem:[%s227 + $0x54] sm:$0xe]
      %v1475 = vld [vmem:[%s227 + $0x60] sm:$0xe]
      %v1476 = vld [vmem:[%s227 + $0x6c] sm:$0xe]
      %v1477 = vld [vmem:[%s227 + $0x78] sm:$0xe]
      %v1478 = vld [vmem:[%s227 + $0x84] sm:$0xe]
      %v1479 = vld [vmem:[%s227 + $0x90] sm:$0xe]
      %v1480 = vld [vmem:[%s227 + $0x9c] sm:$0xe]
      %v1481 = vld [vmem:[%s227 + $0xa8] sm:$0xe]
      %v1482 = vld [vmem:[%s227 + $0xb4] sm:$0xe]
      %vm1531 = vcmask 1042432
      %vm1532 = vcmask 1046532
      %vm1533 = vmor %vm1531, %vm1532
      %v1534 = vrot.slane %v1467, 5
      %v1535 = vrot.slane %v1534, 4
      %v1536 = vrot.slane %v711, 5
      %v1537 = vsel %vm1533, %v1535, %v1536
      %v1538 = vrot.slane %v1536, 4
      %v1539 = vrot.slane %v712, 5
      %v1540 = vsel %vm1533, %v1538, %v1539
      %v1541 = vrot.slane %v1468, 5
      %v1542 = vrot.slane %v1541, 4
      %v1543 = vrot.slane %v714, 5
      %v1544 = vsel %vm1533, %v1542, %v1543
      %v1545 = vrot.slane %v1543, 4
      %v1546 = vrot.slane %v715, 5
      %v1547 = vsel %vm1533, %v1545, %v1546
      %v1548 = vrot.slane %v1469, 5
      %v1549 = vrot.slane %v1548, 4
      %v1550 = vrot.slane %v717, 5
      %v1551 = vsel %vm1533, %v1549, %v1550
      %v1552 = vrot.slane %v1550, 4
      %v1553 = vrot.slane %v718, 5
      %v1554 = vsel %vm1533, %v1552, %v1553
      %v1555 = vrot.slane %v1470, 5
      %v1556 = vrot.slane %v1555, 4
      %v1557 = vrot.slane %v720, 5
      %v1558 = vsel %vm1533, %v1556, %v1557
      %v1559 = vrot.slane %v1557, 4
      %v1560 = vrot.slane %v721, 5
      %v1561 = vsel %vm1533, %v1559, %v1560
      %v1562 = vrot.slane %v1471, 5
      %v1563 = vrot.slane %v1562, 4
      %v1564 = vrot.slane %v723, 5
      %v1565 = vsel %vm1533, %v1563, %v1564
      %v1566 = vrot.slane %v1564, 4
      %v1567 = vrot.slane %v724, 5
      %v1568 = vsel %vm1533, %v1566, %v1567
      %v1569 = vrot.slane %v1472, 5
      %v1570 = vrot.slane %v1569, 4
      %v1571 = vrot.slane %v726, 5
      %v1572 = vsel %vm1533, %v1570, %v1571
      %v1573 = vrot.slane %v1571, 4
      %v1574 = vrot.slane %v727, 5
      %v1575 = vsel %vm1533, %v1573, %v1574
      %v1576 = vrot.slane %v1473, 5
      %v1577 = vrot.slane %v1576, 4
      %v1578 = vrot.slane %v729, 5
      %v1579 = vsel %vm1533, %v1577, %v1578
      %v1580 = vrot.slane %v1578, 4
      %v1581 = vrot.slane %v730, 5
      %v1582 = vsel %vm1533, %v1580, %v1581
      %v1583 = vrot.slane %v1474, 5
      %v1584 = vrot.slane %v1583, 4
      %v1585 = vrot.slane %v732, 5
      %v1586 = vsel %vm1533, %v1584, %v1585
      %v1587 = vrot.slane %v1585, 4
      %v1588 = vrot.slane %v733, 5
      %v1589 = vsel %vm1533, %v1587, %v1588
      %v1590 = vrot.slane %v1475, 5
      %v1591 = vrot.slane %v1590, 4
      %v1592 = vrot.slane %v735, 5
      %v1593 = vsel %vm1533, %v1591, %v1592
      %v1594 = vrot.slane %v1592, 4
      %v1595 = vrot.slane %v736, 5
      %v1596 = vsel %vm1533, %v1594, %v1595
      %v1597 = vrot.slane %v1476, 5
      %v1598 = vrot.slane %v1597, 4
      %v1599 = vrot.slane %v738, 5
      %v1600 = vsel %vm1533, %v1598, %v1599
      %v1601 = vrot.slane %v1599, 4
      %v1602 = vrot.slane %v739, 5
      %v1603 = vsel %vm1533, %v1601, %v1602
      %v1604 = vrot.slane %v1477, 5
      %v1605 = vrot.slane %v1604, 4
      %v1606 = vrot.slane %v741, 5
      %v1607 = vsel %vm1533, %v1605, %v1606
      %v1608 = vrot.slane %v1606, 4
      %v1609 = vrot.slane %v742, 5
      %v1610 = vsel %vm1533, %v1608, %v1609
      %v1611 = vrot.slane %v1478, 5
      %v1612 = vrot.slane %v1611, 4
      %v1613 = vrot.slane %v744, 5
      %v1614 = vsel %vm1533, %v1612, %v1613
      %v1615 = vrot.slane %v1613, 4
      %v1616 = vrot.slane %v745, 5
      %v1617 = vsel %vm1533, %v1615, %v1616
      %v1618 = vrot.slane %v1479, 5
      %v1619 = vrot.slane %v1618, 4
      %v1620 = vrot.slane %v747, 5
      %v1621 = vsel %vm1533, %v1619, %v1620
      %v1622 = vrot.slane %v1620, 4
      %v1623 = vrot.slane %v748, 5
      %v1624 = vsel %vm1533, %v1622, %v1623
      %v1625 = vrot.slane %v1480, 5
      %v1626 = vrot.slane %v1625, 4
      %v1627 = vrot.slane %v750, 5
      %v1628 = vsel %vm1533, %v1626, %v1627
      %v1629 = vrot.slane %v1627, 4
      %v1630 = vrot.slane %v751, 5
      %v1631 = vsel %vm1533, %v1629, %v1630
      %v1632 = vrot.slane %v1481, 5
      %v1633 = vrot.slane %v1632, 4
      %v1634 = vrot.slane %v753, 5
      %v1635 = vsel %vm1533, %v1633, %v1634
      %v1636 = vrot.slane %v1634, 4
      %v1637 = vrot.slane %v754, 5
      %v1638 = vsel %vm1533, %v1636, %v1637
      %v1639 = vrot.slane %v1482, 5
      %v1640 = vrot.slane %v1639, 4
      %v1641 = vrot.slane %v756, 5
      %v1642 = vsel %vm1533, %v1640, %v1641
      %v1643 = vrot.slane %v1641, 4
      %v1644 = vrot.slane %v757, 5
      %v1645 = vsel %vm1533, %v1643, %v1644
      %s1646 = scalar_lea.vmem %s240, 128
      %v1647 = vld [vmem:[%s1646] sm:$0xf]
      %v1648 = vld [vmem:[%s1646 + $0x4] sm:$0xf]
      %v1649 = vld [vmem:[%s1646 + $0x8] sm:$0xf]
      %v1650 = vld [vmem:[%s1646 + $0xc] sm:$0xf]
      %v1651 = vld [vmem:[%s1646 + $0x10] sm:$0xf]
      %v1652 = vld [vmem:[%s1646 + $0x14] sm:$0xf]
      %v1653 = vld [vmem:[%s1646 + $0x18] sm:$0xf]
      %v1654 = vld [vmem:[%s1646 + $0x1c] sm:$0xf]
      %v1655 = vld [vmem:[%s1646 + $0x20] sm:$0xf]
      %v1656 = vld [vmem:[%s1646 + $0x24] sm:$0xf]
      %v1657 = vld [vmem:[%s1646 + $0x28] sm:$0xf]
      %v1658 = vld [vmem:[%s1646 + $0x2c] sm:$0xf]
      %v1659 = vld [vmem:[%s1646 + $0x30] sm:$0xf]
      %v1660 = vld [vmem:[%s1646 + $0x34] sm:$0xf]
      %v1661 = vld [vmem:[%s1646 + $0x38] sm:$0xf]
      %v1662 = vld [vmem:[%s1646 + $0x3c] sm:$0xf]
      %v1663 = vunpack.c.l.b16 %v1537
      %v1664 = vunpack.c.l.b16 %v1540
      %v1665 = vunpack.c.l.b16 %v1544
      %v1666 = vunpack.c.l.b16 %v1547
      %v1667 = vunpack.c.l.b16 %v1551
      %v1668 = vunpack.c.l.b16 %v1554
      %v1669 = vunpack.c.l.b16 %v1558
      %v1670 = vunpack.c.l.b16 %v1561
      %v1671 = vunpack.c.l.b16 %v1565
      %v1672 = vunpack.c.l.b16 %v1568
      %v1673 = vunpack.c.l.b16 %v1572
      %v1674 = vunpack.c.l.b16 %v1575
      %v1675 = vunpack.c.l.b16 %v1579
      %v1676 = vunpack.c.l.b16 %v1582
      %v1677 = vunpack.c.l.b16 %v1586
      %v1678 = vunpack.c.l.b16 %v1589
      %v1679 = vunpack.c.l.b16 %v1593
      %v1680 = vunpack.c.l.b16 %v1596
      %v1681 = vunpack.c.l.b16 %v1600
      %v1682 = vunpack.c.l.b16 %v1603
      %v1683 = vunpack.c.l.b16 %v1607
      %v1684 = vunpack.c.l.b16 %v1610
      %v1685 = vunpack.c.l.b16 %v1614
      %v1686 = vunpack.c.l.b16 %v1617
      %v1687 = vunpack.c.l.b16 %v1621
      %v1688 = vunpack.c.l.b16 %v1624
      %v1689 = vunpack.c.l.b16 %v1628
      %v1690 = vunpack.c.l.b16 %v1631
      %v1691 = vunpack.c.l.b16 %v1635
      %v1692 = vunpack.c.l.b16 %v1638
      %v1693 = vunpack.c.l.b16 %v1642
      %v1694 = vunpack.c.l.b16 %v1645
      %v1695 = vpack.c.b16 %v1664, %v1663
      %v1696 = vpack.c.b16 %v1666, %v1665
      %v1697 = vpack.c.b16 %v1668, %v1667
      %v1698 = vpack.c.b16 %v1670, %v1669
      %v1699 = vpack.c.b16 %v1672, %v1671
      %v1700 = vpack.c.b16 %v1674, %v1673
      %v1701 = vpack.c.b16 %v1676, %v1675
      %v1702 = vpack.c.b16 %v1678, %v1677
      %v1703 = vpack.c.b16 %v1680, %v1679
      %v1704 = vpack.c.b16 %v1682, %v1681
      %v1705 = vpack.c.b16 %v1684, %v1683
      %v1706 = vpack.c.b16 %v1686, %v1685
      %v1707 = vpack.c.b16 %v1688, %v1687
      %v1708 = vpack.c.b16 %v1690, %v1689
      %v1709 = vpack.c.b16 %v1692, %v1691
      %v1710 = vpack.c.b16 %v1694, %v1693
      %v1743 = vunpack.c.l.b16 %v1647
      %v1744 = vunpack.c.l.b16 %v1648
      %v1745 = vunpack.c.l.b16 %v1649
      %v1746 = vunpack.c.l.b16 %v1650
      %v1747 = vunpack.c.l.b16 %v1651
      %v1748 = vunpack.c.l.b16 %v1652
      %v1749 = vunpack.c.l.b16 %v1653
      %v1750 = vunpack.c.l.b16 %v1654
      %v1751 = vunpack.c.l.b16 %v1655
      %v1752 = vunpack.c.l.b16 %v1656
      %v1753 = vunpack.c.l.b16 %v1657
      %v1754 = vunpack.c.l.b16 %v1658
      %v1755 = vunpack.c.l.b16 %v1659
      %v1756 = vunpack.c.l.b16 %v1660
      %v1757 = vunpack.c.l.b16 %v1661
      %v1758 = vunpack.c.l.b16 %v1662
      %v1759 = vpack.c.b16 %v1744, %v1743
      %v1760 = vpack.c.b16 %v1746, %v1745
      %v1761 = vpack.c.b16 %v1748, %v1747
      %v1762 = vpack.c.b16 %v1750, %v1749
      %v1763 = vpack.c.b16 %v1752, %v1751
      %v1764 = vpack.c.b16 %v1754, %v1753
      %v1765 = vpack.c.b16 %v1756, %v1755
      %v1766 = vpack.c.b16 %v1758, %v1757
      %1775 = vmatprep.subr.bf16.mxu0 0
      %1776 = vmatpush1.bf16.msra.mxu0 %v1759
      %1777 = vmatprep.subr.bf16.mxu0 0
      %1778 = vmatpush1.bf16.msra.mxu0 %v1760
      %1779 = vmatprep.subr.bf16.mxu0 0
      %1780 = vmatpush1.bf16.msra.mxu0 %v1761
      %1781 = vmatprep.subr.bf16.mxu0 0
      %1782 = vmatpush1.bf16.msra.mxu0 %v1762
      %1783 = vmatprep.subr.bf16.mxu0 0
      %1784 = vmatpush1.bf16.msra.mxu0 %v1763
      %1785 = vmatprep.subr.bf16.mxu0 0
      %1786 = vmatpush1.bf16.msra.mxu0 %v1764
      %1787 = vmatprep.subr.bf16.mxu0 0
      %1788 = vmatpush1.bf16.msra.mxu0 %v1765
      %1789 = vmatprep.subr.bf16.mxu0 0
      %1790 = vmatpush1.bf16.msra.mxu0 %v1766
      %1791 = vmatprep.subr.bf16.mxu0 0
      %1792 = vmatpush1.bf16.msra.mxu0 0
      %1793 = vmatprep.subr.bf16.mxu0 0
      %1794 = vmatpush1.bf16.msra.mxu0 0
      %1795 = vmatprep.subr.bf16.mxu0 0
      %1796 = vmatpush1.bf16.msra.mxu0 0
      %1797 = vmatprep.subr.bf16.mxu0 0
      %1798 = vmatpush1.bf16.msra.mxu0 0
      %1799 = vmatprep.subr.bf16.mxu0 0
      %1800 = vmatpush1.bf16.msra.mxu0 0
      %1801 = vmatprep.subr.bf16.mxu0 0
      %1802 = vmatpush1.bf16.msra.mxu0 0
      %1803 = vmatprep.subr.bf16.mxu0 0
      %1804 = vmatpush1.bf16.msra.mxu0 0
      %1805 = vmatprep.subr.bf16.mxu0 0
      %1806 = vmatpush1.bf16.msra.mxu0 0
      %1807 = vmatprep.mubr.bf16.mxu0 0
      %1808 = vmatmul.mubr.bf16.gmra.mrb[0].mxu0 %v1695
      %v1809 = vpop.f32.mrb[0].mxu0
      %v1810 = vadd.f32 0.0, %v1809
      %v1811 = vpop.f32.mrb[0].mxu0
      %v1812 = vpop.f32.mrb[0].mxu0
      %v1813 = vadd.f32 0.0, %v1812
      %v1814 = vpop.f32.mrb[0].mxu0
      %1815 = vmatprep.mubr.bf16.mxu0 0
      %1816 = vmatmul.mubr.bf16.gmra.mrb[0].mxu0 %v1696
      %v1817 = vpop.f32.mrb[0].mxu0
      %v1818 = vadd.f32 0.0, %v1817
      %v1819 = vpop.f32.mrb[0].mxu0
      %v1820 = vpop.f32.mrb[0].mxu0
      %v1821 = vadd.f32 0.0, %v1820
      %v1822 = vpop.f32.mrb[0].mxu0
      %1823 = vmatprep.mubr.bf16.mxu0 0
      %1824 = vmatmul.mubr.bf16.gmra.mrb[0].mxu0 %v1697
      %v1825 = vpop.f32.mrb[0].mxu0
      %v1826 = vadd.f32 0.0, %v1825
      %v1827 = vpop.f32.mrb[0].mxu0
      %v1828 = vpop.f32.mrb[0].mxu0
      %v1829 = vadd.f32 0.0, %v1828
      %v1830 = vpop.f32.mrb[0].mxu0
      %1831 = vmatprep.mubr.bf16.mxu0 0
      %1832 = vmatmul.mubr.bf16.gmra.mrb[0].mxu0 %v1698
      %v1833 = vpop.f32.mrb[0].mxu0
      %v1834 = vadd.f32 0.0, %v1833
      %v1835 = vpop.f32.mrb[0].mxu0
      %v1836 = vpop.f32.mrb[0].mxu0
      %v1837 = vadd.f32 0.0, %v1836
      %v1838 = vpop.f32.mrb[0].mxu0
      %1839 = vmatprep.mubr.bf16.mxu0 0
      %1840 = vmatmul.mubr.bf16.gmra.mrb[0].mxu0 %v1699
      %v1841 = vpop.f32.mrb[0].mxu0
      %v1842 = vadd.f32 0.0, %v1841
      %v1843 = vpop.f32.mrb[0].mxu0
      %v1844 = vpop.f32.mrb[0].mxu0
      %v1845 = vadd.f32 0.0, %v1844
      %v1846 = vpop.f32.mrb[0].mxu0
      %1847 = vmatprep.mubr.bf16.mxu0 0
      %1848 = vmatmul.mubr.bf16.gmra.mrb[0].mxu0 %v1700
      %v1849 = vpop.f32.mrb[0].mxu0
      %v1850 = vadd.f32 0.0, %v1849
      %v1851 = vpop.f32.mrb[0].mxu0
      %v1852 = vpop.f32.mrb[0].mxu0
      %v1853 = vadd.f32 0.0, %v1852
      %v1854 = vpop.f32.mrb[0].mxu0
      %1855 = vmatprep.mubr.bf16.mxu0 0
      %1856 = vmatmul.mubr.bf16.gmra.mrb[0].mxu0 %v1701
      %v1857 = vpop.f32.mrb[0].mxu0
      %v1858 = vadd.f32 0.0, %v1857
      %v1859 = vpop.f32.mrb[0].mxu0
      %v1860 = vpop.f32.mrb[0].mxu0
      %v1861 = vadd.f32 0.0, %v1860
      %v1862 = vpop.f32.mrb[0].mxu0
      %1863 = vmatprep.mubr.bf16.mxu0 0
      %1864 = vmatmul.mubr.bf16.gmra.mrb[0].mxu0 %v1702
      %v1865 = vpop.f32.mrb[0].mxu0
      %v1866 = vadd.f32 0.0, %v1865
      %v1867 = vpop.f32.mrb[0].mxu0
      %v1868 = vpop.f32.mrb[0].mxu0
      %v1869 = vadd.f32 0.0, %v1868
      %v1870 = vpop.f32.mrb[0].mxu0
      %1871 = vmatprep.mubr.bf16.mxu0 0
      %1872 = vmatmul.mubr.bf16.gmra.mrb[0].mxu0 %v1703
      %v1873 = vpop.f32.mrb[0].mxu0
      %v1874 = vadd.f32 0.0, %v1873
      %v1875 = vpop.f32.mrb[0].mxu0
      %v1876 = vpop.f32.mrb[0].mxu0
      %v1877 = vadd.f32 0.0, %v1876
      %v1878 = vpop.f32.mrb[0].mxu0
      %1879 = vmatprep.mubr.bf16.mxu0 0
      %1880 = vmatmul.mubr.bf16.gmra.mrb[0].mxu0 %v1704
      %v1881 = vpop.f32.mrb[0].mxu0
      %v1882 = vadd.f32 0.0, %v1881
      %v1883 = vpop.f32.mrb[0].mxu0
      %v1884 = vpop.f32.mrb[0].mxu0
      %v1885 = vadd.f32 0.0, %v1884
      %v1886 = vpop.f32.mrb[0].mxu0
      %1887 = vmatprep.mubr.bf16.mxu0 0
      %1888 = vmatmul.mubr.bf16.gmra.mrb[0].mxu0 %v1705
      %v1889 = vpop.f32.mrb[0].mxu0
      %v1890 = vadd.f32 0.0, %v1889
      %v1891 = vpop.f32.mrb[0].mxu0
      %v1892 = vpop.f32.mrb[0].mxu0
      %v1893 = vadd.f32 0.0, %v1892
      %v1894 = vpop.f32.mrb[0].mxu0
      %1895 = vmatprep.mubr.bf16.mxu0 0
      %1896 = vmatmul.mubr.bf16.gmra.mrb[0].mxu0 %v1706
      %v1897 = vpop.f32.mrb[0].mxu0
      %v1898 = vadd.f32 0.0, %v1897
      %v1899 = vpop.f32.mrb[0].mxu0
      %v1900 = vpop.f32.mrb[0].mxu0
      %v1901 = vadd.f32 0.0, %v1900
      %v1902 = vpop.f32.mrb[0].mxu0
      %1903 = vmatprep.mubr.bf16.mxu0 0
      %1904 = vmatmul.mubr.bf16.gmra.mrb[0].mxu0 %v1707
      %v1905 = vpop.f32.mrb[0].mxu0
      %v1906 = vadd.f32 0.0, %v1905
      %v1907 = vpop.f32.mrb[0].mxu0
      %v1908 = vpop.f32.mrb[0].mxu0
      %v1909 = vadd.f32 0.0, %v1908
      %v1910 = vpop.f32.mrb[0].mxu0
      %1911 = vmatprep.mubr.bf16.mxu0 0
      %1912 = vmatmul.mubr.bf16.gmra.mrb[0].mxu0 %v1708
      %v1913 = vpop.f32.mrb[0].mxu0
      %v1914 = vadd.f32 0.0, %v1913
      %v1915 = vpop.f32.mrb[0].mxu0
      %v1916 = vpop.f32.mrb[0].mxu0
      %v1917 = vadd.f32 0.0, %v1916
      %v1918 = vpop.f32.mrb[0].mxu0
      %1919 = vmatprep.mubr.bf16.mxu0 0
      %1920 = vmatmul.mubr.bf16.gmra.mrb[0].mxu0 %v1709
      %v1921 = vpop.f32.mrb[0].mxu0
      %v1922 = vadd.f32 0.0, %v1921
      %v1923 = vpop.f32.mrb[0].mxu0
      %v1924 = vpop.f32.mrb[0].mxu0
      %v1925 = vadd.f32 0.0, %v1924
      %v1926 = vpop.f32.mrb[0].mxu0
      %1927 = vmatprep.mubr.bf16.mxu0 0
      %1928 = vmatmul.mubr.bf16.gmra.mrb[0].mxu0 %v1710
      %v1929 = vpop.f32.mrb[0].mxu0
      %v1930 = vadd.f32 0.0, %v1929
      %v1931 = vpop.f32.mrb[0].mxu0
      %v1932 = vpop.f32.mrb[0].mxu0
      %v1933 = vadd.f32 0.0, %v1932
      %v1934 = vpop.f32.mrb[0].mxu0
      %1935 = vdwg.mxu0
      %v1936 = vadd.f32 %v1435, %v1810
      %v1937 = vadd.f32 %v1436, %v1813
      %v1938 = vadd.f32 %v1437, %v1818
      %v1939 = vadd.f32 %v1438, %v1821
      %v1940 = vadd.f32 %v1439, %v1826
      %v1941 = vadd.f32 %v1440, %v1829
      %v1942 = vadd.f32 %v1441, %v1834
      %v1943 = vadd.f32 %v1442, %v1837
      %v1944 = vadd.f32 %v1443, %v1842
      %v1945 = vadd.f32 %v1444, %v1845
      %v1946 = vadd.f32 %v1445, %v1850
      %v1947 = vadd.f32 %v1446, %v1853
      %v1948 = vadd.f32 %v1447, %v1858
      %v1949 = vadd.f32 %v1448, %v1861
      %v1950 = vadd.f32 %v1449, %v1866
      %v1951 = vadd.f32 %v1450, %v1869
      %v1952 = vadd.f32 %v1451, %v1874
      %v1953 = vadd.f32 %v1452, %v1877
      %v1954 = vadd.f32 %v1453, %v1882
      %v1955 = vadd.f32 %v1454, %v1885
      %v1956 = vadd.f32 %v1455, %v1890
      %v1957 = vadd.f32 %v1456, %v1893
      %v1958 = vadd.f32 %v1457, %v1898
      %v1959 = vadd.f32 %v1458, %v1901
      %v1960 = vadd.f32 %v1459, %v1906
      %v1961 = vadd.f32 %v1460, %v1909
      %v1962 = vadd.f32 %v1461, %v1914
      %v1963 = vadd.f32 %v1462, %v1917
      %v1964 = vadd.f32 %v1463, %v1922
      %v1965 = vadd.f32 %v1464, %v1925
      %v1966 = vadd.f32 %v1465, %v1930
      %v1967 = vadd.f32 %v1466, %v1933
      %s1968 = scalar_lea.vmem %s227, 12
      %v1969 = vld [vmem:[%s1968] sm:$0xf]
      %v1970 = vld [vmem:[%s1968 + $0x4] sm:$0xf]
      %v1971 = vld [vmem:[%s1968 + $0xc] sm:$0xf]
      %v1972 = vld [vmem:[%s1968 + $0x10] sm:$0xf]
      %v1973 = vld [vmem:[%s1968 + $0x18] sm:$0xf]
      %v1974 = vld [vmem:[%s1968 + $0x1c] sm:$0xf]
      %v1975 = vld [vmem:[%s1968 + $0x24] sm:$0xf]
      %v1976 = vld [vmem:[%s1968 + $0x28] sm:$0xf]
      %v1977 = vld [vmem:[%s1968 + $0x30] sm:$0xf]
      %v1978 = vld [vmem:[%s1968 + $0x34] sm:$0xf]
      %v1979 = vld [vmem:[%s1968 + $0x3c] sm:$0xf]
      %v1980 = vld [vmem:[%s1968 + $0x40] sm:$0xf]
      %v1981 = vld [vmem:[%s1968 + $0x48] sm:$0xf]
      %v1982 = vld [vmem:[%s1968 + $0x4c] sm:$0xf]
      %v1983 = vld [vmem:[%s1968 + $0x54] sm:$0xf]
      %v1984 = vld [vmem:[%s1968 + $0x58] sm:$0xf]
      %v1985 = vld [vmem:[%s1968 + $0x60] sm:$0xf]
      %v1986 = vld [vmem:[%s1968 + $0x64] sm:$0xf]
      %v1987 = vld [vmem:[%s1968 + $0x6c] sm:$0xf]
      %v1988 = vld [vmem:[%s1968 + $0x70] sm:$0xf]
      %v1989 = vld [vmem:[%s1968 + $0x78] sm:$0xf]
      %v1990 = vld [vmem:[%s1968 + $0x7c] sm:$0xf]
      %v1991 = vld [vmem:[%s1968 + $0x84] sm:$0xf]
      %v1992 = vld [vmem:[%s1968 + $0x88] sm:$0xf]
      %v1993 = vld [vmem:[%s1968 + $0x90] sm:$0xf]
      %v1994 = vld [vmem:[%s1968 + $0x94] sm:$0xf]
      %v1995 = vld [vmem:[%s1968 + $0x9c] sm:$0xf]
      %v1996 = vld [vmem:[%s1968 + $0xa0] sm:$0xf]
      %v1997 = vld [vmem:[%s1968 + $0xa8] sm:$0xf]
      %v1998 = vld [vmem:[%s1968 + $0xac] sm:$0xf]
      %v1999 = vld [vmem:[%s1968 + $0xb4] sm:$0xf]
      %v2000 = vld [vmem:[%s1968 + $0xb8] sm:$0xf]
      %s2001 = scalar_lea.vmem %s240, 192
      %v2002 = vld [vmem:[%s2001] sm:$0xf]
      %v2003 = vld [vmem:[%s2001 + $0x4] sm:$0xf]
      %v2004 = vld [vmem:[%s2001 + $0x8] sm:$0xf]
      %v2005 = vld [vmem:[%s2001 + $0xc] sm:$0xf]
      %v2006 = vld [vmem:[%s2001 + $0x10] sm:$0xf]
      %v2007 = vld [vmem:[%s2001 + $0x14] sm:$0xf]
      %v2008 = vld [vmem:[%s2001 + $0x18] sm:$0xf]
      %v2009 = vld [vmem:[%s2001 + $0x1c] sm:$0xf]
      %v2010 = vld [vmem:[%s2001 + $0x20] sm:$0xf]
      %v2011 = vld [vmem:[%s2001 + $0x24] sm:$0xf]
      %v2012 = vld [vmem:[%s2001 + $0x28] sm:$0xf]
      %v2013 = vld [vmem:[%s2001 + $0x2c] sm:$0xf]
      %v2014 = vld [vmem:[%s2001 + $0x30] sm:$0xf]
      %v2015 = vld [vmem:[%s2001 + $0x34] sm:$0xf]
      %v2016 = vld [vmem:[%s2001 + $0x38] sm:$0xf]
      %v2017 = vld [vmem:[%s2001 + $0x3c] sm:$0xf]
      %v2050 = vunpack.c.l.b16 %v1969
      %v2051 = vunpack.c.l.b16 %v1970
      %v2052 = vunpack.c.l.b16 %v1971
      %v2053 = vunpack.c.l.b16 %v1972
      %v2054 = vunpack.c.l.b16 %v1973
      %v2055 = vunpack.c.l.b16 %v1974
      %v2056 = vunpack.c.l.b16 %v1975
      %v2057 = vunpack.c.l.b16 %v1976
      %v2058 = vunpack.c.l.b16 %v1977
      %v2059 = vunpack.c.l.b16 %v1978
      %v2060 = vunpack.c.l.b16 %v1979
      %v2061 = vunpack.c.l.b16 %v1980
      %v2062 = vunpack.c.l.b16 %v1981
      %v2063 = vunpack.c.l.b16 %v1982
      %v2064 = vunpack.c.l.b16 %v1983
      %v2065 = vunpack.c.l.b16 %v1984
      %v2066 = vunpack.c.l.b16 %v1985
      %v2067 = vunpack.c.l.b16 %v1986
      %v2068 = vunpack.c.l.b16 %v1987
      %v2069 = vunpack.c.l.b16 %v1988
      %v2070 = vunpack.c.l.b16 %v1989
      %v2071 = vunpack.c.l.b16 %v1990
      %v2072 = vunpack.c.l.b16 %v1991
      %v2073 = vunpack.c.l.b16 %v1992
      %v2074 = vunpack.c.l.b16 %v1993
      %v2075 = vunpack.c.l.b16 %v1994
      %v2076 = vunpack.c.l.b16 %v1995
      %v2077 = vunpack.c.l.b16 %v1996
      %v2078 = vunpack.c.l.b16 %v1997
      %v2079 = vunpack.c.l.b16 %v1998
      %v2080 = vunpack.c.l.b16 %v1999
      %v2081 = vunpack.c.l.b16 %v2000
      %v2082 = vpack.c.b16 %v2051, %v2050
      %v2083 = vpack.c.b16 %v2053, %v2052
      %v2084 = vpack.c.b16 %v2055, %v2054
      %v2085 = vpack.c.b16 %v2057, %v2056
      %v2086 = vpack.c.b16 %v2059, %v2058
      %v2087 = vpack.c.b16 %v2061, %v2060
      %v2088 = vpack.c.b16 %v2063, %v2062
      %v2089 = vpack.c.b16 %v2065, %v2064
      %v2090 = vpack.c.b16 %v2067, %v2066
      %v2091 = vpack.c.b16 %v2069, %v2068
      %v2092 = vpack.c.b16 %v2071, %v2070
      %v2093 = vpack.c.b16 %v2073, %v2072
      %v2094 = vpack.c.b16 %v2075, %v2074
      %v2095 = vpack.c.b16 %v2077, %v2076
      %v2096 = vpack.c.b16 %v2079, %v2078
      %v2097 = vpack.c.b16 %v2081, %v2080
      %v2130 = vunpack.c.l.b16 %v2002
      %v2131 = vunpack.c.l.b16 %v2003
      %v2132 = vunpack.c.l.b16 %v2004
      %v2133 = vunpack.c.l.b16 %v2005
      %v2134 = vunpack.c.l.b16 %v2006
      %v2135 = vunpack.c.l.b16 %v2007
      %v2136 = vunpack.c.l.b16 %v2008
      %v2137 = vunpack.c.l.b16 %v2009
      %v2138 = vunpack.c.l.b16 %v2010
      %v2139 = vunpack.c.l.b16 %v2011
      %v2140 = vunpack.c.l.b16 %v2012
      %v2141 = vunpack.c.l.b16 %v2013
      %v2142 = vunpack.c.l.b16 %v2014
      %v2143 = vunpack.c.l.b16 %v2015
      %v2144 = vunpack.c.l.b16 %v2016
      %v2145 = vunpack.c.l.b16 %v2017
      %v2146 = vpack.c.b16 %v2131, %v2130
      %v2147 = vpack.c.b16 %v2133, %v2132
      %v2148 = vpack.c.b16 %v2135, %v2134
      %v2149 = vpack.c.b16 %v2137, %v2136
      %v2150 = vpack.c.b16 %v2139, %v2138
      %v2151 = vpack.c.b16 %v2141, %v2140
      %v2152 = vpack.c.b16 %v2143, %v2142
      %v2153 = vpack.c.b16 %v2145, %v2144
      %2162 = vmatprep.subr.bf16.mxu0 0
      %2163 = vmatpush1.bf16.msra.mxu0 %v2146
      %2164 = vmatprep.subr.bf16.mxu0 0
      %2165 = vmatpush1.bf16.msra.mxu0 %v2147
      %2166 = vmatprep.subr.bf16.mxu0 0
      %2167 = vmatpush1.bf16.msra.mxu0 %v2148
      %2168 = vmatprep.subr.bf16.mxu0 0
      %2169 = vmatpush1.bf16.msra.mxu0 %v2149
      %2170 = vmatprep.subr.bf16.mxu0 0
      %2171 = vmatpush1.bf16.msra.mxu0 %v2150
      %2172 = vmatprep.subr.bf16.mxu0 0
      %2173 = vmatpush1.bf16.msra.mxu0 %v2151
      %2174 = vmatprep.subr.bf16.mxu0 0
      %2175 = vmatpush1.bf16.msra.mxu0 %v2152
      %2176 = vmatprep.subr.bf16.mxu0 0
      %2177 = vmatpush1.bf16.msra.mxu0 %v2153
      %2178 = vmatprep.subr.bf16.mxu0 0
      %2179 = vmatpush1.bf16.msra.mxu0 0
      %2180 = vmatprep.subr.bf16.mxu0 0
      %2181 = vmatpush1.bf16.msra.mxu0 0
      %2182 = vmatprep.subr.bf16.mxu0 0
      %2183 = vmatpush1.bf16.msra.mxu0 0
      %2184 = vmatprep.subr.bf16.mxu0 0
      %2185 = vmatpush1.bf16.msra.mxu0 0
      %2186 = vmatprep.subr.bf16.mxu0 0
      %2187 = vmatpush1.bf16.msra.mxu0 0
      %2188 = vmatprep.subr.bf16.mxu0 0
      %2189 = vmatpush1.bf16.msra.mxu0 0
      %2190 = vmatprep.subr.bf16.mxu0 0
      %2191 = vmatpush1.bf16.msra.mxu0 0
      %2192 = vmatprep.subr.bf16.mxu0 0
      %2193 = vmatpush1.bf16.msra.mxu0 0
      %2194 = vmatprep.mubr.bf16.mxu0 0
      %2195 = vmatmul.mubr.bf16.gmra.mrb[0].mxu0 %v2082
      %v2196 = vpop.f32.mrb[0].mxu0
      %v2197 = vadd.f32 0.0, %v2196
      %v2198 = vpop.f32.mrb[0].mxu0
      %v2199 = vpop.f32.mrb[0].mxu0
      %v2200 = vadd.f32 0.0, %v2199
      %v2201 = vpop.f32.mrb[0].mxu0
      %2202 = vmatprep.mubr.bf16.mxu0 0
      %2203 = vmatmul.mubr.bf16.gmra.mrb[0].mxu0 %v2083
      %v2204 = vpop.f32.mrb[0].mxu0
      %v2205 = vadd.f32 0.0, %v2204
      %v2206 = vpop.f32.mrb[0].mxu0
      %v2207 = vpop.f32.mrb[0].mxu0
      %v2208 = vadd.f32 0.0, %v2207
      %v2209 = vpop.f32.mrb[0].mxu0
      %2210 = vmatprep.mubr.bf16.mxu0 0
      %2211 = vmatmul.mubr.bf16.gmra.mrb[0].mxu0 %v2084
      %v2212 = vpop.f32.mrb[0].mxu0
      %v2213 = vadd.f32 0.0, %v2212
      %v2214 = vpop.f32.mrb[0].mxu0
      %v2215 = vpop.f32.mrb[0].mxu0
      %v2216 = vadd.f32 0.0, %v2215
      %v2217 = vpop.f32.mrb[0].mxu0
      %2218 = vmatprep.mubr.bf16.mxu0 0
      %2219 = vmatmul.mubr.bf16.gmra.mrb[0].mxu0 %v2085
      %v2220 = vpop.f32.mrb[0].mxu0
      %v2221 = vadd.f32 0.0, %v2220
      %v2222 = vpop.f32.mrb[0].mxu0
      %v2223 = vpop.f32.mrb[0].mxu0
      %v2224 = vadd.f32 0.0, %v2223
      %v2225 = vpop.f32.mrb[0].mxu0
      %2226 = vmatprep.mubr.bf16.mxu0 0
      %2227 = vmatmul.mubr.bf16.gmra.mrb[0].mxu0 %v2086
      %v2228 = vpop.f32.mrb[0].mxu0
      %v2229 = vadd.f32 0.0, %v2228
      %v2230 = vpop.f32.mrb[0].mxu0
      %v2231 = vpop.f32.mrb[0].mxu0
      %v2232 = vadd.f32 0.0, %v2231
      %v2233 = vpop.f32.mrb[0].mxu0
      %2234 = vmatprep.mubr.bf16.mxu0 0
      %2235 = vmatmul.mubr.bf16.gmra.mrb[0].mxu0 %v2087
      %v2236 = vpop.f32.mrb[0].mxu0
      %v2237 = vadd.f32 0.0, %v2236
      %v2238 = vpop.f32.mrb[0].mxu0
      %v2239 = vpop.f32.mrb[0].mxu0
      %v2240 = vadd.f32 0.0, %v2239
      %v2241 = vpop.f32.mrb[0].mxu0
      %2242 = vmatprep.mubr.bf16.mxu0 0
      %2243 = vmatmul.mubr.bf16.gmra.mrb[0].mxu0 %v2088
      %v2244 = vpop.f32.mrb[0].mxu0
      %v2245 = vadd.f32 0.0, %v2244
      %v2246 = vpop.f32.mrb[0].mxu0
      %v2247 = vpop.f32.mrb[0].mxu0
      %v2248 = vadd.f32 0.0, %v2247
      %v2249 = vpop.f32.mrb[0].mxu0
      %2250 = vmatprep.mubr.bf16.mxu0 0
      %2251 = vmatmul.mubr.bf16.gmra.mrb[0].mxu0 %v2089
      %v2252 = vpop.f32.mrb[0].mxu0
      %v2253 = vadd.f32 0.0, %v2252
      %v2254 = vpop.f32.mrb[0].mxu0
      %v2255 = vpop.f32.mrb[0].mxu0
      %v2256 = vadd.f32 0.0, %v2255
      %v2257 = vpop.f32.mrb[0].mxu0
      %2258 = vmatprep.mubr.bf16.mxu0 0
      %2259 = vmatmul.mubr.bf16.gmra.mrb[0].mxu0 %v2090
      %v2260 = vpop.f32.mrb[0].mxu0
      %v2261 = vadd.f32 0.0, %v2260
      %v2262 = vpop.f32.mrb[0].mxu0
      %v2263 = vpop.f32.mrb[0].mxu0
      %v2264 = vadd.f32 0.0, %v2263
      %v2265 = vpop.f32.mrb[0].mxu0
      %2266 = vmatprep.mubr.bf16.mxu0 0
      %2267 = vmatmul.mubr.bf16.gmra.mrb[0].mxu0 %v2091
      %v2268 = vpop.f32.mrb[0].mxu0
      %v2269 = vadd.f32 0.0, %v2268
      %v2270 = vpop.f32.mrb[0].mxu0
      %v2271 = vpop.f32.mrb[0].mxu0
      %v2272 = vadd.f32 0.0, %v2271
      %v2273 = vpop.f32.mrb[0].mxu0
      %2274 = vmatprep.mubr.bf16.mxu0 0
      %2275 = vmatmul.mubr.bf16.gmra.mrb[0].mxu0 %v2092
      %v2276 = vpop.f32.mrb[0].mxu0
      %v2277 = vadd.f32 0.0, %v2276
      %v2278 = vpop.f32.mrb[0].mxu0
      %v2279 = vpop.f32.mrb[0].mxu0
      %v2280 = vadd.f32 0.0, %v2279
      %v2281 = vpop.f32.mrb[0].mxu0
      %2282 = vmatprep.mubr.bf16.mxu0 0
      %2283 = vmatmul.mubr.bf16.gmra.mrb[0].mxu0 %v2093
      %v2284 = vpop.f32.mrb[0].mxu0
      %v2285 = vadd.f32 0.0, %v2284
      %v2286 = vpop.f32.mrb[0].mxu0
      %v2287 = vpop.f32.mrb[0].mxu0
      %v2288 = vadd.f32 0.0, %v2287
      %v2289 = vpop.f32.mrb[0].mxu0
      %2290 = vmatprep.mubr.bf16.mxu0 0
      %2291 = vmatmul.mubr.bf16.gmra.mrb[0].mxu0 %v2094
      %v2292 = vpop.f32.mrb[0].mxu0
      %v2293 = vadd.f32 0.0, %v2292
      %v2294 = vpop.f32.mrb[0].mxu0
      %v2295 = vpop.f32.mrb[0].mxu0
      %v2296 = vadd.f32 0.0, %v2295
      %v2297 = vpop.f32.mrb[0].mxu0
      %2298 = vmatprep.mubr.bf16.mxu0 0
      %2299 = vmatmul.mubr.bf16.gmra.mrb[0].mxu0 %v2095
      %v2300 = vpop.f32.mrb[0].mxu0
      %v2301 = vadd.f32 0.0, %v2300
      %v2302 = vpop.f32.mrb[0].mxu0
      %v2303 = vpop.f32.mrb[0].mxu0
      %v2304 = vadd.f32 0.0, %v2303
      %v2305 = vpop.f32.mrb[0].mxu0
      %2306 = vmatprep.mubr.bf16.mxu0 0
      %2307 = vmatmul.mubr.bf16.gmra.mrb[0].mxu0 %v2096
      %v2308 = vpop.f32.mrb[0].mxu0
      %v2309 = vadd.f32 0.0, %v2308
      %v2310 = vpop.f32.mrb[0].mxu0
      %v2311 = vpop.f32.mrb[0].mxu0
      %v2312 = vadd.f32 0.0, %v2311
      %v2313 = vpop.f32.mrb[0].mxu0
      %2314 = vmatprep.mubr.bf16.mxu0 0
      %2315 = vmatmul.mubr.bf16.gmra.mrb[0].mxu0 %v2097
      %v2316 = vpop.f32.mrb[0].mxu0
      %v2317 = vadd.f32 0.0, %v2316
      %v2318 = vpop.f32.mrb[0].mxu0
      %v2319 = vpop.f32.mrb[0].mxu0
      %v2320 = vadd.f32 0.0, %v2319
      %v2321 = vpop.f32.mrb[0].mxu0
      %2322 = vdwg.mxu0
      %v2323 = vadd.f32 %v1936, %v2197
      %v2324 = vadd.f32 %v1937, %v2200
      %v2325 = vadd.f32 %v1938, %v2205
      %v2326 = vadd.f32 %v1939, %v2208
      %v2327 = vadd.f32 %v1940, %v2213
      %v2328 = vadd.f32 %v1941, %v2216
      %v2329 = vadd.f32 %v1942, %v2221
      %v2330 = vadd.f32 %v1943, %v2224
      %v2331 = vadd.f32 %v1944, %v2229
      %v2332 = vadd.f32 %v1945, %v2232
      %v2333 = vadd.f32 %v1946, %v2237
      %v2334 = vadd.f32 %v1947, %v2240
      %v2335 = vadd.f32 %v1948, %v2245
      %v2336 = vadd.f32 %v1949, %v2248
      %v2337 = vadd.f32 %v1950, %v2253
      %v2338 = vadd.f32 %v1951, %v2256
      %v2339 = vadd.f32 %v1952, %v2261
      %v2340 = vadd.f32 %v1953, %v2264
      %v2341 = vadd.f32 %v1954, %v2269
      %v2342 = vadd.f32 %v1955, %v2272
      %v2343 = vadd.f32 %v1956, %v2277
      %v2344 = vadd.f32 %v1957, %v2280
      %v2345 = vadd.f32 %v1958, %v2285
      %v2346 = vadd.f32 %v1959, %v2288
      %v2347 = vadd.f32 %v1960, %v2293
      %v2348 = vadd.f32 %v1961, %v2296
      %v2349 = vadd.f32 %v1962, %v2301
      %v2350 = vadd.f32 %v1963, %v2304
      %v2351 = vadd.f32 %v1964, %v2309
      %v2352 = vadd.f32 %v1965, %v2312
      %v2353 = vadd.f32 %v1966, %v2317
      %v2354 = vadd.f32 %v1967, %v2320
      %v2355 = vld [vmem:[%s1968] sm:$0xf]
      %v2356 = vld [vmem:[%s1968 + $0x4] sm:$0xf]
      %v2357 = vld [vmem:[%s1968 + $0x8] sm:$0x1]
      %v2358 = vld [vmem:[%s1968 + $0xc] sm:$0xf]
      %v2359 = vld [vmem:[%s1968 + $0x10] sm:$0xf]
      %v2360 = vld [vmem:[%s1968 + $0x14] sm:$0x1]
      %v2361 = vld [vmem:[%s1968 + $0x18] sm:$0xf]
      %v2362 = vld [vmem:[%s1968 + $0x1c] sm:$0xf]
      %v2363 = vld [vmem:[%s1968 + $0x20] sm:$0x1]
      %v2364 = vld [vmem:[%s1968 + $0x24] sm:$0xf]
      %v2365 = vld [vmem:[%s1968 + $0x28] sm:$0xf]
      %v2366 = vld [vmem:[%s1968 + $0x2c] sm:$0x1]
      %v2367 = vld [vmem:[%s1968 + $0x30] sm:$0xf]
      %v2368 = vld [vmem:[%s1968 + $0x34] sm:$0xf]
      %v2369 = vld [vmem:[%s1968 + $0x38] sm:$0x1]
      %v2370 = vld [vmem:[%s1968 + $0x3c] sm:$0xf]
      %v2371 = vld [vmem:[%s1968 + $0x40] sm:$0xf]
      %v2372 = vld [vmem:[%s1968 + $0x44] sm:$0x1]
      %v2373 = vld [vmem:[%s1968 + $0x48] sm:$0xf]
      %v2374 = vld [vmem:[%s1968 + $0x4c] sm:$0xf]
      %v2375 = vld [vmem:[%s1968 + $0x50] sm:$0x1]
      %v2376 = vld [vmem:[%s1968 + $0x54] sm:$0xf]
      %v2377 = vld [vmem:[%s1968 + $0x58] sm:$0xf]
      %v2378 = vld [vmem:[%s1968 + $0x5c] sm:$0x1]
      %v2379 = vld [vmem:[%s1968 + $0x60] sm:$0xf]
      %v2380 = vld [vmem:[%s1968 + $0x64] sm:$0xf]
      %v2381 = vld [vmem:[%s1968 + $0x68] sm:$0x1]
      %v2382 = vld [vmem:[%s1968 + $0x6c] sm:$0xf]
      %v2383 = vld [vmem:[%s1968 + $0x70] sm:$0xf]
      %v2384 = vld [vmem:[%s1968 + $0x74] sm:$0x1]
      %v2385 = vld [vmem:[%s1968 + $0x78] sm:$0xf]
      %v2386 = vld [vmem:[%s1968 + $0x7c] sm:$0xf]
      %v2387 = vld [vmem:[%s1968 + $0x80] sm:$0x1]
      %v2388 = vld [vmem:[%s1968 + $0x84] sm:$0xf]
      %v2389 = vld [vmem:[%s1968 + $0x88] sm:$0xf]
      %v2390 = vld [vmem:[%s1968 + $0x8c] sm:$0x1]
      %v2391 = vld [vmem:[%s1968 + $0x90] sm:$0xf]
      %v2392 = vld [vmem:[%s1968 + $0x94] sm:$0xf]
      %v2393 = vld [vmem:[%s1968 + $0x98] sm:$0x1]
      %v2394 = vld [vmem:[%s1968 + $0x9c] sm:$0xf]
      %v2395 = vld [vmem:[%s1968 + $0xa0] sm:$0xf]
      %v2396 = vld [vmem:[%s1968 + $0xa4] sm:$0x1]
      %v2397 = vld [vmem:[%s1968 + $0xa8] sm:$0xf]
      %v2398 = vld [vmem:[%s1968 + $0xac] sm:$0xf]
      %v2399 = vld [vmem:[%s1968 + $0xb0] sm:$0x1]
      %v2400 = vld [vmem:[%s1968 + $0xb4] sm:$0xf]
      %v2401 = vld [vmem:[%s1968 + $0xb8] sm:$0xf]
      %v2402 = vld [vmem:[%s1968 + $0xbc] sm:$0x1]
      %v2404 = vshrl.u32 %v2355, 16
      %v2406 = vrot.slane %v2404, 4
      %v2407 = vshll.u32 %v2355, 16
      %v2409 = vrot.slane %v2407, 5
      %v2410 = vor.u32 %v2406, %v2409
      %v2411 = vrot.slane %v2410, 4
      %v2413 = vshll.u32 %v2356, 16
      %v2415 = vrot.slane %v2413, 5
      %v2416 = vsel %vm760, %v2411, %v2415
      %v2417 = vshrl.u32 %v2356, 16
      %v2419 = vrot.slane %v2417, 4
      %v2420 = vor.u32 %v2419, %v2415
      %v2421 = vrot.slane %v2420, 4
      %v2423 = vshll.u32 %v2357, 16
      %v2425 = vrot.slane %v2423, 5
      %v2426 = vsel %vm760, %v2421, %v2425
      %v2428 = vshrl.u32 %v2358, 16
      %v2430 = vrot.slane %v2428, 4
      %v2431 = vshll.u32 %v2358, 16
      %v2433 = vrot.slane %v2431, 5
      %v2434 = vor.u32 %v2430, %v2433
      %v2435 = vrot.slane %v2434, 4
      %v2437 = vshll.u32 %v2359, 16
      %v2439 = vrot.slane %v2437, 5
      %v2440 = vsel %vm760, %v2435, %v2439
      %v2441 = vshrl.u32 %v2359, 16
      %v2443 = vrot.slane %v2441, 4
      %v2444 = vor.u32 %v2443, %v2439
      %v2445 = vrot.slane %v2444, 4
      %v2447 = vshll.u32 %v2360, 16
      %v2449 = vrot.slane %v2447, 5
      %v2450 = vsel %vm760, %v2445, %v2449
      %v2452 = vshrl.u32 %v2361, 16
      %v2454 = vrot.slane %v2452, 4
      %v2455 = vshll.u32 %v2361, 16
      %v2457 = vrot.slane %v2455, 5
      %v2458 = vor.u32 %v2454, %v2457
      %v2459 = vrot.slane %v2458, 4
      %v2461 = vshll.u32 %v2362, 16
      %v2463 = vrot.slane %v2461, 5
      %v2464 = vsel %vm760, %v2459, %v2463
      %v2465 = vshrl.u32 %v2362, 16
      %v2467 = vrot.slane %v2465, 4
      %v2468 = vor.u32 %v2467, %v2463
      %v2469 = vrot.slane %v2468, 4
      %v2471 = vshll.u32 %v2363, 16
      %v2473 = vrot.slane %v2471, 5
      %v2474 = vsel %vm760, %v2469, %v2473
      %v2476 = vshrl.u32 %v2364, 16
      %v2478 = vrot.slane %v2476, 4
      %v2479 = vshll.u32 %v2364, 16
      %v2481 = vrot.slane %v2479, 5
      %v2482 = vor.u32 %v2478, %v2481
      %v2483 = vrot.slane %v2482, 4
      %v2485 = vshll.u32 %v2365, 16
      %v2487 = vrot.slane %v2485, 5
      %v2488 = vsel %vm760, %v2483, %v2487
      %v2489 = vshrl.u32 %v2365, 16
      %v2491 = vrot.slane %v2489, 4
      %v2492 = vor.u32 %v2491, %v2487
      %v2493 = vrot.slane %v2492, 4
      %v2495 = vshll.u32 %v2366, 16
      %v2497 = vrot.slane %v2495, 5
      %v2498 = vsel %vm760, %v2493, %v2497
      %v2500 = vshrl.u32 %v2367, 16
      %v2502 = vrot.slane %v2500, 4
      %v2503 = vshll.u32 %v2367, 16
      %v2505 = vrot.slane %v2503, 5
      %v2506 = vor.u32 %v2502, %v2505
      %v2507 = vrot.slane %v2506, 4
      %v2509 = vshll.u32 %v2368, 16
      %v2511 = vrot.slane %v2509, 5
      %v2512 = vsel %vm760, %v2507, %v2511
      %v2513 = vshrl.u32 %v2368, 16
      %v2515 = vrot.slane %v2513, 4
      %v2516 = vor.u32 %v2515, %v2511
      %v2517 = vrot.slane %v2516, 4
      %v2519 = vshll.u32 %v2369, 16
      %v2521 = vrot.slane %v2519, 5
      %v2522 = vsel %vm760, %v2517, %v2521
      %v2524 = vshrl.u32 %v2370, 16
      %v2526 = vrot.slane %v2524, 4
      %v2527 = vshll.u32 %v2370, 16
      %v2529 = vrot.slane %v2527, 5
      %v2530 = vor.u32 %v2526, %v2529
      %v2531 = vrot.slane %v2530, 4
      %v2533 = vshll.u32 %v2371, 16
      %v2535 = vrot.slane %v2533, 5
      %v2536 = vsel %vm760, %v2531, %v2535
      %v2537 = vshrl.u32 %v2371, 16
      %v2539 = vrot.slane %v2537, 4
      %v2540 = vor.u32 %v2539, %v2535
      %v2541 = vrot.slane %v2540, 4
      %v2543 = vshll.u32 %v2372, 16
      %v2545 = vrot.slane %v2543, 5
      %v2546 = vsel %vm760, %v2541, %v2545
      %v2548 = vshrl.u32 %v2373, 16
      %v2550 = vrot.slane %v2548, 4
      %v2551 = vshll.u32 %v2373, 16
      %v2553 = vrot.slane %v2551, 5
      %v2554 = vor.u32 %v2550, %v2553
      %v2555 = vrot.slane %v2554, 4
      %v2557 = vshll.u32 %v2374, 16
      %v2559 = vrot.slane %v2557, 5
      %v2560 = vsel %vm760, %v2555, %v2559
      %v2561 = vshrl.u32 %v2374, 16
      %v2563 = vrot.slane %v2561, 4
      %v2564 = vor.u32 %v2563, %v2559
      %v2565 = vrot.slane %v2564, 4
      %v2567 = vshll.u32 %v2375, 16
      %v2569 = vrot.slane %v2567, 5
      %v2570 = vsel %vm760, %v2565, %v2569
      %v2572 = vshrl.u32 %v2376, 16
      %v2574 = vrot.slane %v2572, 4
      %v2575 = vshll.u32 %v2376, 16
      %v2577 = vrot.slane %v2575, 5
      %v2578 = vor.u32 %v2574, %v2577
      %v2579 = vrot.slane %v2578, 4
      %v2581 = vshll.u32 %v2377, 16
      %v2583 = vrot.slane %v2581, 5
      %v2584 = vsel %vm760, %v2579, %v2583
      %v2585 = vshrl.u32 %v2377, 16
      %v2587 = vrot.slane %v2585, 4
      %v2588 = vor.u32 %v2587, %v2583
      %v2589 = vrot.slane %v2588, 4
      %v2591 = vshll.u32 %v2378, 16
      %v2593 = vrot.slane %v2591, 5
      %v2594 = vsel %vm760, %v2589, %v2593
      %v2596 = vshrl.u32 %v2379, 16
      %v2598 = vrot.slane %v2596, 4
      %v2599 = vshll.u32 %v2379, 16
      %v2601 = vrot.slane %v2599, 5
      %v2602 = vor.u32 %v2598, %v2601
      %v2603 = vrot.slane %v2602, 4
      %v2605 = vshll.u32 %v2380, 16
      %v2607 = vrot.slane %v2605, 5
      %v2608 = vsel %vm760, %v2603, %v2607
      %v2609 = vshrl.u32 %v2380, 16
      %v2611 = vrot.slane %v2609, 4
      %v2612 = vor.u32 %v2611, %v2607
      %v2613 = vrot.slane %v2612, 4
      %v2615 = vshll.u32 %v2381, 16
      %v2617 = vrot.slane %v2615, 5
      %v2618 = vsel %vm760, %v2613, %v2617
      %v2620 = vshrl.u32 %v2382, 16
      %v2622 = vrot.slane %v2620, 4
      %v2623 = vshll.u32 %v2382, 16
      %v2625 = vrot.slane %v2623, 5
      %v2626 = vor.u32 %v2622, %v2625
      %v2627 = vrot.slane %v2626, 4
      %v2629 = vshll.u32 %v2383, 16
      %v2631 = vrot.slane %v2629, 5
      %v2632 = vsel %vm760, %v2627, %v2631
      %v2633 = vshrl.u32 %v2383, 16
      %v2635 = vrot.slane %v2633, 4
      %v2636 = vor.u32 %v2635, %v2631
      %v2637 = vrot.slane %v2636, 4
      %v2639 = vshll.u32 %v2384, 16
      %v2641 = vrot.slane %v2639, 5
      %v2642 = vsel %vm760, %v2637, %v2641
      %v2644 = vshrl.u32 %v2385, 16
      %v2646 = vrot.slane %v2644, 4
      %v2647 = vshll.u32 %v2385, 16
      %v2649 = vrot.slane %v2647, 5
      %v2650 = vor.u32 %v2646, %v2649
      %v2651 = vrot.slane %v2650, 4
      %v2653 = vshll.u32 %v2386, 16
      %v2655 = vrot.slane %v2653, 5
      %v2656 = vsel %vm760, %v2651, %v2655
      %v2657 = vshrl.u32 %v2386, 16
      %v2659 = vrot.slane %v2657, 4
      %v2660 = vor.u32 %v2659, %v2655
      %v2661 = vrot.slane %v2660, 4
      %v2663 = vshll.u32 %v2387, 16
      %v2665 = vrot.slane %v2663, 5
      %v2666 = vsel %vm760, %v2661, %v2665
      %v2668 = vshrl.u32 %v2388, 16
      %v2670 = vrot.slane %v2668, 4
      %v2671 = vshll.u32 %v2388, 16
      %v2673 = vrot.slane %v2671, 5
      %v2674 = vor.u32 %v2670, %v2673
      %v2675 = vrot.slane %v2674, 4
      %v2677 = vshll.u32 %v2389, 16
      %v2679 = vrot.slane %v2677, 5
      %v2680 = vsel %vm760, %v2675, %v2679
      %v2681 = vshrl.u32 %v2389, 16
      %v2683 = vrot.slane %v2681, 4
      %v2684 = vor.u32 %v2683, %v2679
      %v2685 = vrot.slane %v2684, 4
      %v2687 = vshll.u32 %v2390, 16
      %v2689 = vrot.slane %v2687, 5
      %v2690 = vsel %vm760, %v2685, %v2689
      %v2692 = vshrl.u32 %v2391, 16
      %v2694 = vrot.slane %v2692, 4
      %v2695 = vshll.u32 %v2391, 16
      %v2697 = vrot.slane %v2695, 5
      %v2698 = vor.u32 %v2694, %v2697
      %v2699 = vrot.slane %v2698, 4
      %v2701 = vshll.u32 %v2392, 16
      %v2703 = vrot.slane %v2701, 5
      %v2704 = vsel %vm760, %v2699, %v2703
      %v2705 = vshrl.u32 %v2392, 16
      %v2707 = vrot.slane %v2705, 4
      %v2708 = vor.u32 %v2707, %v2703
      %v2709 = vrot.slane %v2708, 4
      %v2711 = vshll.u32 %v2393, 16
      %v2713 = vrot.slane %v2711, 5
      %v2714 = vsel %vm760, %v2709, %v2713
      %v2716 = vshrl.u32 %v2394, 16
      %v2718 = vrot.slane %v2716, 4
      %v2719 = vshll.u32 %v2394, 16
      %v2721 = vrot.slane %v2719, 5
      %v2722 = vor.u32 %v2718, %v2721
      %v2723 = vrot.slane %v2722, 4
      %v2725 = vshll.u32 %v2395, 16
      %v2727 = vrot.slane %v2725, 5
      %v2728 = vsel %vm760, %v2723, %v2727
      %v2729 = vshrl.u32 %v2395, 16
      %v2731 = vrot.slane %v2729, 4
      %v2732 = vor.u32 %v2731, %v2727
      %v2733 = vrot.slane %v2732, 4
      %v2735 = vshll.u32 %v2396, 16
      %v2737 = vrot.slane %v2735, 5
      %v2738 = vsel %vm760, %v2733, %v2737
      %v2740 = vshrl.u32 %v2397, 16
      %v2742 = vrot.slane %v2740, 4
      %v2743 = vshll.u32 %v2397, 16
      %v2745 = vrot.slane %v2743, 5
      %v2746 = vor.u32 %v2742, %v2745
      %v2747 = vrot.slane %v2746, 4
      %v2749 = vshll.u32 %v2398, 16
      %v2751 = vrot.slane %v2749, 5
      %v2752 = vsel %vm760, %v2747, %v2751
      %v2753 = vshrl.u32 %v2398, 16
      %v2755 = vrot.slane %v2753, 4
      %v2756 = vor.u32 %v2755, %v2751
      %v2757 = vrot.slane %v2756, 4
      %v2759 = vshll.u32 %v2399, 16
      %v2761 = vrot.slane %v2759, 5
      %v2762 = vsel %vm760, %v2757, %v2761
      %v2764 = vshrl.u32 %v2400, 16
      %v2766 = vrot.slane %v2764, 4
      %v2767 = vshll.u32 %v2400, 16
      %v2769 = vrot.slane %v2767, 5
      %v2770 = vor.u32 %v2766, %v2769
      %v2771 = vrot.slane %v2770, 4
      %v2773 = vshll.u32 %v2401, 16
      %v2775 = vrot.slane %v2773, 5
      %v2776 = vsel %vm760, %v2771, %v2775
      %v2777 = vshrl.u32 %v2401, 16
      %v2779 = vrot.slane %v2777, 4
      %v2780 = vor.u32 %v2779, %v2775
      %v2781 = vrot.slane %v2780, 4
      %v2783 = vshll.u32 %v2402, 16
      %v2785 = vrot.slane %v2783, 5
      %v2786 = vsel %vm760, %v2781, %v2785
      %s2787 = scalar_lea.vmem %s240, 256
      %v2788 = vld [vmem:[%s2787] sm:$0xf]
      %v2789 = vld [vmem:[%s2787 + $0x4] sm:$0xf]
      %v2790 = vld [vmem:[%s2787 + $0x8] sm:$0xf]
      %v2791 = vld [vmem:[%s2787 + $0xc] sm:$0xf]
      %v2792 = vld [vmem:[%s2787 + $0x10] sm:$0xf]
      %v2793 = vld [vmem:[%s2787 + $0x14] sm:$0xf]
      %v2794 = vld [vmem:[%s2787 + $0x18] sm:$0xf]
      %v2795 = vld [vmem:[%s2787 + $0x1c] sm:$0xf]
      %v2796 = vld [vmem:[%s2787 + $0x20] sm:$0xf]
      %v2797 = vld [vmem:[%s2787 + $0x24] sm:$0xf]
      %v2798 = vld [vmem:[%s2787 + $0x28] sm:$0xf]
      %v2799 = vld [vmem:[%s2787 + $0x2c] sm:$0xf]
      %v2800 = vld [vmem:[%s2787 + $0x30] sm:$0xf]
      %v2801 = vld [vmem:[%s2787 + $0x34] sm:$0xf]
      %v2802 = vld [vmem:[%s2787 + $0x38] sm:$0xf]
      %v2803 = vld [vmem:[%s2787 + $0x3c] sm:$0xf]
      %v2804 = vunpack.c.l.b16 %v2416
      %v2805 = vunpack.c.l.b16 %v2426
      %v2806 = vunpack.c.l.b16 %v2440
      %v2807 = vunpack.c.l.b16 %v2450
      %v2808 = vunpack.c.l.b16 %v2464
      %v2809 = vunpack.c.l.b16 %v2474
      %v2810 = vunpack.c.l.b16 %v2488
      %v2811 = vunpack.c.l.b16 %v2498
      %v2812 = vunpack.c.l.b16 %v2512
      %v2813 = vunpack.c.l.b16 %v2522
      %v2814 = vunpack.c.l.b16 %v2536
      %v2815 = vunpack.c.l.b16 %v2546
      %v2816 = vunpack.c.l.b16 %v2560
      %v2817 = vunpack.c.l.b16 %v2570
      %v2818 = vunpack.c.l.b16 %v2584
      %v2819 = vunpack.c.l.b16 %v2594
      %v2820 = vunpack.c.l.b16 %v2608
      %v2821 = vunpack.c.l.b16 %v2618
      %v2822 = vunpack.c.l.b16 %v2632
      %v2823 = vunpack.c.l.b16 %v2642
      %v2824 = vunpack.c.l.b16 %v2656
      %v2825 = vunpack.c.l.b16 %v2666
      %v2826 = vunpack.c.l.b16 %v2680
      %v2827 = vunpack.c.l.b16 %v2690
      %v2828 = vunpack.c.l.b16 %v2704
      %v2829 = vunpack.c.l.b16 %v2714
      %v2830 = vunpack.c.l.b16 %v2728
      %v2831 = vunpack.c.l.b16 %v2738
      %v2832 = vunpack.c.l.b16 %v2752
      %v2833 = vunpack.c.l.b16 %v2762
      %v2834 = vunpack.c.l.b16 %v2776
      %v2835 = vunpack.c.l.b16 %v2786
      %v2836 = vpack.c.b16 %v2805, %v2804
      %v2837 = vpack.c.b16 %v2807, %v2806
      %v2838 = vpack.c.b16 %v2809, %v2808
      %v2839 = vpack.c.b16 %v2811, %v2810
      %v2840 = vpack.c.b16 %v2813, %v2812
      %v2841 = vpack.c.b16 %v2815, %v2814
      %v2842 = vpack.c.b16 %v2817, %v2816
      %v2843 = vpack.c.b16 %v2819, %v2818
      %v2844 = vpack.c.b16 %v2821, %v2820
      %v2845 = vpack.c.b16 %v2823, %v2822
      %v2846 = vpack.c.b16 %v2825, %v2824
      %v2847 = vpack.c.b16 %v2827, %v2826
      %v2848 = vpack.c.b16 %v2829, %v2828
      %v2849 = vpack.c.b16 %v2831, %v2830
      %v2850 = vpack.c.b16 %v2833, %v2832
      %v2851 = vpack.c.b16 %v2835, %v2834
      %v2884 = vunpack.c.l.b16 %v2788
      %v2885 = vunpack.c.l.b16 %v2789
      %v2886 = vunpack.c.l.b16 %v2790
      %v2887 = vunpack.c.l.b16 %v2791
      %v2888 = vunpack.c.l.b16 %v2792
      %v2889 = vunpack.c.l.b16 %v2793
      %v2890 = vunpack.c.l.b16 %v2794
      %v2891 = vunpack.c.l.b16 %v2795
      %v2892 = vunpack.c.l.b16 %v2796
      %v2893 = vunpack.c.l.b16 %v2797
      %v2894 = vunpack.c.l.b16 %v2798
      %v2895 = vunpack.c.l.b16 %v2799
      %v2896 = vunpack.c.l.b16 %v2800
      %v2897 = vunpack.c.l.b16 %v2801
      %v2898 = vunpack.c.l.b16 %v2802
      %v2899 = vunpack.c.l.b16 %v2803
      %v2900 = vpack.c.b16 %v2885, %v2884
      %v2901 = vpack.c.b16 %v2887, %v2886
      %v2902 = vpack.c.b16 %v2889, %v2888
      %v2903 = vpack.c.b16 %v2891, %v2890
      %v2904 = vpack.c.b16 %v2893, %v2892
      %v2905 = vpack.c.b16 %v2895, %v2894
      %v2906 = vpack.c.b16 %v2897, %v2896
      %v2907 = vpack.c.b16 %v2899, %v2898
      %2916 = vmatprep.subr.bf16.mxu0 0
      %2917 = vmatpush1.bf16.msra.mxu0 %v2900
      %2918 = vmatprep.subr.bf16.mxu0 0
      %2919 = vmatpush1.bf16.msra.mxu0 %v2901
      %2920 = vmatprep.subr.bf16.mxu0 0
      %2921 = vmatpush1.bf16.msra.mxu0 %v2902
      %2922 = vmatprep.subr.bf16.mxu0 0
      %2923 = vmatpush1.bf16.msra.mxu0 %v2903
      %2924 = vmatprep.subr.bf16.mxu0 0
      %2925 = vmatpush1.bf16.msra.mxu0 %v2904
      %2926 = vmatprep.subr.bf16.mxu0 0
      %2927 = vmatpush1.bf16.msra.mxu0 %v2905
      %2928 = vmatprep.subr.bf16.mxu0 0
      %2929 = vmatpush1.bf16.msra.mxu0 %v2906
      %2930 = vmatprep.subr.bf16.mxu0 0
      %2931 = vmatpush1.bf16.msra.mxu0 %v2907
      %2932 = vmatprep.subr.bf16.mxu0 0
      %2933 = vmatpush1.bf16.msra.mxu0 0
      %2934 = vmatprep.subr.bf16.mxu0 0
      %2935 = vmatpush1.bf16.msra.mxu0 0
      %2936 = vmatprep.subr.bf16.mxu0 0
      %2937 = vmatpush1.bf16.msra.mxu0 0
      %2938 = vmatprep.subr.bf16.mxu0 0
      %2939 = vmatpush1.bf16.msra.mxu0 0
      %2940 = vmatprep.subr.bf16.mxu0 0
      %2941 = vmatpush1.bf16.msra.mxu0 0
      %2942 = vmatprep.subr.bf16.mxu0 0
      %2943 = vmatpush1.bf16.msra.mxu0 0
      %2944 = vmatprep.subr.bf16.mxu0 0
      %2945 = vmatpush1.bf16.msra.mxu0 0
      %2946 = vmatprep.subr.bf16.mxu0 0
      %2947 = vmatpush1.bf16.msra.mxu0 0
      %2948 = vmatprep.mubr.bf16.mxu0 0
      %2949 = vmatmul.mubr.bf16.gmra.mrb[0].mxu0 %v2836
      %v2950 = vpop.f32.mrb[0].mxu0
      %v2951 = vadd.f32 0.0, %v2950
      %v2952 = vpop.f32.mrb[0].mxu0
      %v2953 = vpop.f32.mrb[0].mxu0
      %v2954 = vadd.f32 0.0, %v2953
      %v2955 = vpop.f32.mrb[0].mxu0
      %2956 = vmatprep.mubr.bf16.mxu0 0
      %2957 = vmatmul.mubr.bf16.gmra.mrb[0].mxu0 %v2837
      %v2958 = vpop.f32.mrb[0].mxu0
      %v2959 = vadd.f32 0.0, %v2958
      %v2960 = vpop.f32.mrb[0].mxu0
      %v2961 = vpop.f32.mrb[0].mxu0
      %v2962 = vadd.f32 0.0, %v2961
      %v2963 = vpop.f32.mrb[0].mxu0
      %2964 = vmatprep.mubr.bf16.mxu0 0
      %2965 = vmatmul.mubr.bf16.gmra.mrb[0].mxu0 %v2838
      %v2966 = vpop.f32.mrb[0].mxu0
      %v2967 = vadd.f32 0.0, %v2966
      %v2968 = vpop.f32.mrb[0].mxu0
      %v2969 = vpop.f32.mrb[0].mxu0
      %v2970 = vadd.f32 0.0, %v2969
      %v2971 = vpop.f32.mrb[0].mxu0
      %2972 = vmatprep.mubr.bf16.mxu0 0
      %2973 = vmatmul.mubr.bf16.gmra.mrb[0].mxu0 %v2839
      %v2974 = vpop.f32.mrb[0].mxu0
      %v2975 = vadd.f32 0.0, %v2974
      %v2976 = vpop.f32.mrb[0].mxu0
      %v2977 = vpop.f32.mrb[0].mxu0
      %v2978 = vadd.f32 0.0, %v2977
      %v2979 = vpop.f32.mrb[0].mxu0
      %2980 = vmatprep.mubr.bf16.mxu0 0
      %2981 = vmatmul.mubr.bf16.gmra.mrb[0].mxu0 %v2840
      %v2982 = vpop.f32.mrb[0].mxu0
      %v2983 = vadd.f32 0.0, %v2982
      %v2984 = vpop.f32.mrb[0].mxu0
      %v2985 = vpop.f32.mrb[0].mxu0
      %v2986 = vadd.f32 0.0, %v2985
      %v2987 = vpop.f32.mrb[0].mxu0
      %2988 = vmatprep.mubr.bf16.mxu0 0
      %2989 = vmatmul.mubr.bf16.gmra.mrb[0].mxu0 %v2841
      %v2990 = vpop.f32.mrb[0].mxu0
      %v2991 = vadd.f32 0.0, %v2990
      %v2992 = vpop.f32.mrb[0].mxu0
      %v2993 = vpop.f32.mrb[0].mxu0
      %v2994 = vadd.f32 0.0, %v2993
      %v2995 = vpop.f32.mrb[0].mxu0
      %2996 = vmatprep.mubr.bf16.mxu0 0
      %2997 = vmatmul.mubr.bf16.gmra.mrb[0].mxu0 %v2842
      %v2998 = vpop.f32.mrb[0].mxu0
      %v2999 = vadd.f32 0.0, %v2998
      %v3000 = vpop.f32.mrb[0].mxu0
      %v3001 = vpop.f32.mrb[0].mxu0
      %v3002 = vadd.f32 0.0, %v3001
      %v3003 = vpop.f32.mrb[0].mxu0
      %3004 = vmatprep.mubr.bf16.mxu0 0
      %3005 = vmatmul.mubr.bf16.gmra.mrb[0].mxu0 %v2843
      %v3006 = vpop.f32.mrb[0].mxu0
      %v3007 = vadd.f32 0.0, %v3006
      %v3008 = vpop.f32.mrb[0].mxu0
      %v3009 = vpop.f32.mrb[0].mxu0
      %v3010 = vadd.f32 0.0, %v3009
      %v3011 = vpop.f32.mrb[0].mxu0
      %3012 = vmatprep.mubr.bf16.mxu0 0
      %3013 = vmatmul.mubr.bf16.gmra.mrb[0].mxu0 %v2844
      %v3014 = vpop.f32.mrb[0].mxu0
      %v3015 = vadd.f32 0.0, %v3014
      %v3016 = vpop.f32.mrb[0].mxu0
      %v3017 = vpop.f32.mrb[0].mxu0
      %v3018 = vadd.f32 0.0, %v3017
      %v3019 = vpop.f32.mrb[0].mxu0
      %3020 = vmatprep.mubr.bf16.mxu0 0
      %3021 = vmatmul.mubr.bf16.gmra.mrb[0].mxu0 %v2845
      %v3022 = vpop.f32.mrb[0].mxu0
      %v3023 = vadd.f32 0.0, %v3022
      %v3024 = vpop.f32.mrb[0].mxu0
      %v3025 = vpop.f32.mrb[0].mxu0
      %v3026 = vadd.f32 0.0, %v3025
      %v3027 = vpop.f32.mrb[0].mxu0
      %3028 = vmatprep.mubr.bf16.mxu0 0
      %3029 = vmatmul.mubr.bf16.gmra.mrb[0].mxu0 %v2846
      %v3030 = vpop.f32.mrb[0].mxu0
      %v3031 = vadd.f32 0.0, %v3030
      %v3032 = vpop.f32.mrb[0].mxu0
      %v3033 = vpop.f32.mrb[0].mxu0
      %v3034 = vadd.f32 0.0, %v3033
      %v3035 = vpop.f32.mrb[0].mxu0
      %3036 = vmatprep.mubr.bf16.mxu0 0
      %3037 = vmatmul.mubr.bf16.gmra.mrb[0].mxu0 %v2847
      %v3038 = vpop.f32.mrb[0].mxu0
      %v3039 = vadd.f32 0.0, %v3038
      %v3040 = vpop.f32.mrb[0].mxu0
      %v3041 = vpop.f32.mrb[0].mxu0
      %v3042 = vadd.f32 0.0, %v3041
      %v3043 = vpop.f32.mrb[0].mxu0
      %3044 = vmatprep.mubr.bf16.mxu0 0
      %3045 = vmatmul.mubr.bf16.gmra.mrb[0].mxu0 %v2848
      %v3046 = vpop.f32.mrb[0].mxu0
      %v3047 = vadd.f32 0.0, %v3046
      %v3048 = vpop.f32.mrb[0].mxu0
      %v3049 = vpop.f32.mrb[0].mxu0
      %v3050 = vadd.f32 0.0, %v3049
      %v3051 = vpop.f32.mrb[0].mxu0
      %3052 = vmatprep.mubr.bf16.mxu0 0
      %3053 = vmatmul.mubr.bf16.gmra.mrb[0].mxu0 %v2849
      %v3054 = vpop.f32.mrb[0].mxu0
      %v3055 = vadd.f32 0.0, %v3054
      %v3056 = vpop.f32.mrb[0].mxu0
      %v3057 = vpop.f32.mrb[0].mxu0
      %v3058 = vadd.f32 0.0, %v3057
      %v3059 = vpop.f32.mrb[0].mxu0
      %3060 = vmatprep.mubr.bf16.mxu0 0
      %3061 = vmatmul.mubr.bf16.gmra.mrb[0].mxu0 %v2850
      %v3062 = vpop.f32.mrb[0].mxu0
      %v3063 = vadd.f32 0.0, %v3062
      %v3064 = vpop.f32.mrb[0].mxu0
      %v3065 = vpop.f32.mrb[0].mxu0
      %v3066 = vadd.f32 0.0, %v3065
      %v3067 = vpop.f32.mrb[0].mxu0
      %3068 = vmatprep.mubr.bf16.mxu0 0
      %3069 = vmatmul.mubr.bf16.gmra.mrb[0].mxu0 %v2851
      %v3070 = vpop.f32.mrb[0].mxu0
      %v3071 = vadd.f32 0.0, %v3070
      %v3072 = vpop.f32.mrb[0].mxu0
      %v3073 = vpop.f32.mrb[0].mxu0
      %v3074 = vadd.f32 0.0, %v3073
      %v3075 = vpop.f32.mrb[0].mxu0
      %3076 = vdwg.mxu0
      %v3077 = vadd.f32 %v2323, %v2951
      %v3078 = vadd.f32 %v2324, %v2954
      %v3079 = vadd.f32 %v2325, %v2959
      %v3080 = vadd.f32 %v2326, %v2962
      %v3081 = vadd.f32 %v2327, %v2967
      %v3082 = vadd.f32 %v2328, %v2970
      %v3083 = vadd.f32 %v2329, %v2975
      %v3084 = vadd.f32 %v2330, %v2978
      %v3085 = vadd.f32 %v2331, %v2983
      %v3086 = vadd.f32 %v2332, %v2986
      %v3087 = vadd.f32 %v2333, %v2991
      %v3088 = vadd.f32 %v2334, %v2994
      %v3089 = vadd.f32 %v2335, %v2999
      %v3090 = vadd.f32 %v2336, %v3002
      %v3091 = vadd.f32 %v2337, %v3007
      %v3092 = vadd.f32 %v2338, %v3010
      %v3093 = vadd.f32 %v2339, %v3015
      %v3094 = vadd.f32 %v2340, %v3018
      %v3095 = vadd.f32 %v2341, %v3023
      %v3096 = vadd.f32 %v2342, %v3026
      %v3097 = vadd.f32 %v2343, %v3031
      %v3098 = vadd.f32 %v2344, %v3034
      %v3099 = vadd.f32 %v2345, %v3039
      %v3100 = vadd.f32 %v2346, %v3042
      %v3101 = vadd.f32 %v2347, %v3047
      %v3102 = vadd.f32 %v2348, %v3050
      %v3103 = vadd.f32 %v2349, %v3055
      %v3104 = vadd.f32 %v2350, %v3058
      %v3105 = vadd.f32 %v2351, %v3063
      %v3106 = vadd.f32 %v2352, %v3066
      %v3107 = vadd.f32 %v2353, %v3071
      %v3108 = vadd.f32 %v2354, %v3074
      %v3109 = vld [vmem:[%s1968] sm:$0xe]
      %v3110 = vld [vmem:[%s1968 + $0xc] sm:$0xe]
      %v3111 = vld [vmem:[%s1968 + $0x18] sm:$0xe]
      %v3112 = vld [vmem:[%s1968 + $0x24] sm:$0xe]
      %v3113 = vld [vmem:[%s1968 + $0x30] sm:$0xe]
      %v3114 = vld [vmem:[%s1968 + $0x3c] sm:$0xe]
      %v3115 = vld [vmem:[%s1968 + $0x48] sm:$0xe]
      %v3116 = vld [vmem:[%s1968 + $0x54] sm:$0xe]
      %v3117 = vld [vmem:[%s1968 + $0x60] sm:$0xe]
      %v3118 = vld [vmem:[%s1968 + $0x6c] sm:$0xe]
      %v3119 = vld [vmem:[%s1968 + $0x78] sm:$0xe]
      %v3120 = vld [vmem:[%s1968 + $0x84] sm:$0xe]
      %v3121 = vld [vmem:[%s1968 + $0x90] sm:$0xe]
      %v3122 = vld [vmem:[%s1968 + $0x9c] sm:$0xe]
      %v3123 = vld [vmem:[%s1968 + $0xa8] sm:$0xe]
      %v3124 = vld [vmem:[%s1968 + $0xb4] sm:$0xe]
      %v3173 = vrot.slane %v3109, 5
      %v3174 = vrot.slane %v3173, 4
      %v3175 = vrot.slane %v2356, 5
      %v3176 = vsel %vm1533, %v3174, %v3175
      %v3177 = vrot.slane %v3175, 4
      %v3178 = vrot.slane %v2357, 5
      %v3179 = vsel %vm1533, %v3177, %v3178
      %v3180 = vrot.slane %v3110, 5
      %v3181 = vrot.slane %v3180, 4
      %v3182 = vrot.slane %v2359, 5
      %v3183 = vsel %vm1533, %v3181, %v3182
      %v3184 = vrot.slane %v3182, 4
      %v3185 = vrot.slane %v2360, 5
      %v3186 = vsel %vm1533, %v3184, %v3185
      %v3187 = vrot.slane %v3111, 5
      %v3188 = vrot.slane %v3187, 4
      %v3189 = vrot.slane %v2362, 5
      %v3190 = vsel %vm1533, %v3188, %v3189
      %v3191 = vrot.slane %v3189, 4
      %v3192 = vrot.slane %v2363, 5
      %v3193 = vsel %vm1533, %v3191, %v3192
      %v3194 = vrot.slane %v3112, 5
      %v3195 = vrot.slane %v3194, 4
      %v3196 = vrot.slane %v2365, 5
      %v3197 = vsel %vm1533, %v3195, %v3196
      %v3198 = vrot.slane %v3196, 4
      %v3199 = vrot.slane %v2366, 5
      %v3200 = vsel %vm1533, %v3198, %v3199
      %v3201 = vrot.slane %v3113, 5
      %v3202 = vrot.slane %v3201, 4
      %v3203 = vrot.slane %v2368, 5
      %v3204 = vsel %vm1533, %v3202, %v3203
      %v3205 = vrot.slane %v3203, 4
      %v3206 = vrot.slane %v2369, 5
      %v3207 = vsel %vm1533, %v3205, %v3206
      %v3208 = vrot.slane %v3114, 5
      %v3209 = vrot.slane %v3208, 4
      %v3210 = vrot.slane %v2371, 5
      %v3211 = vsel %vm1533, %v3209, %v3210
      %v3212 = vrot.slane %v3210, 4
      %v3213 = vrot.slane %v2372, 5
      %v3214 = vsel %vm1533, %v3212, %v3213
      %v3215 = vrot.slane %v3115, 5
      %v3216 = vrot.slane %v3215, 4
      %v3217 = vrot.slane %v2374, 5
      %v3218 = vsel %vm1533, %v3216, %v3217
      %v3219 = vrot.slane %v3217, 4
      %v3220 = vrot.slane %v2375, 5
      %v3221 = vsel %vm1533, %v3219, %v3220
      %v3222 = vrot.slane %v3116, 5
      %v3223 = vrot.slane %v3222, 4
      %v3224 = vrot.slane %v2377, 5
      %v3225 = vsel %vm1533, %v3223, %v3224
      %v3226 = vrot.slane %v3224, 4
      %v3227 = vrot.slane %v2378, 5
      %v3228 = vsel %vm1533, %v3226, %v3227
      %v3229 = vrot.slane %v3117, 5
      %v3230 = vrot.slane %v3229, 4
      %v3231 = vrot.slane %v2380, 5
      %v3232 = vsel %vm1533, %v3230, %v3231
      %v3233 = vrot.slane %v3231, 4
      %v3234 = vrot.slane %v2381, 5
      %v3235 = vsel %vm1533, %v3233, %v3234
      %v3236 = vrot.slane %v3118, 5
      %v3237 = vrot.slane %v3236, 4
      %v3238 = vrot.slane %v2383, 5
      %v3239 = vsel %vm1533, %v3237, %v3238
      %v3240 = vrot.slane %v3238, 4
      %v3241 = vrot.slane %v2384, 5
      %v3242 = vsel %vm1533, %v3240, %v3241
      %v3243 = vrot.slane %v3119, 5
      %v3244 = vrot.slane %v3243, 4
      %v3245 = vrot.slane %v2386, 5
      %v3246 = vsel %vm1533, %v3244, %v3245
      %v3247 = vrot.slane %v3245, 4
      %v3248 = vrot.slane %v2387, 5
      %v3249 = vsel %vm1533, %v3247, %v3248
      %v3250 = vrot.slane %v3120, 5
      %v3251 = vrot.slane %v3250, 4
      %v3252 = vrot.slane %v2389, 5
      %v3253 = vsel %vm1533, %v3251, %v3252
      %v3254 = vrot.slane %v3252, 4
      %v3255 = vrot.slane %v2390, 5
      %v3256 = vsel %vm1533, %v3254, %v3255
      %v3257 = vrot.slane %v3121, 5
      %v3258 = vrot.slane %v3257, 4
      %v3259 = vrot.slane %v2392, 5
      %v3260 = vsel %vm1533, %v3258, %v3259
      %v3261 = vrot.slane %v3259, 4
      %v3262 = vrot.slane %v2393, 5
      %v3263 = vsel %vm1533, %v3261, %v3262
      %v3264 = vrot.slane %v3122, 5
      %v3265 = vrot.slane %v3264, 4
      %v3266 = vrot.slane %v2395, 5
      %v3267 = vsel %vm1533, %v3265, %v3266
      %v3268 = vrot.slane %v3266, 4
      %v3269 = vrot.slane %v2396, 5
      %v3270 = vsel %vm1533, %v3268, %v3269
      %v3271 = vrot.slane %v3123, 5
      %v3272 = vrot.slane %v3271, 4
      %v3273 = vrot.slane %v2398, 5
      %v3274 = vsel %vm1533, %v3272, %v3273
      %v3275 = vrot.slane %v3273, 4
      %v3276 = vrot.slane %v2399, 5
      %v3277 = vsel %vm1533, %v3275, %v3276
      %v3278 = vrot.slane %v3124, 5
      %v3279 = vrot.slane %v3278, 4
      %v3280 = vrot.slane %v2401, 5
      %v3281 = vsel %vm1533, %v3279, %v3280
      %v3282 = vrot.slane %v3280, 4
      %v3283 = vrot.slane %v2402, 5
      %v3284 = vsel %vm1533, %v3282, %v3283
      %s3285 = scalar_lea.vmem %s240, 320
      %v3286 = vld [vmem:[%s3285] sm:$0xf]
      %v3287 = vld [vmem:[%s3285 + $0x4] sm:$0xf]
      %v3288 = vld [vmem:[%s3285 + $0x8] sm:$0xf]
      %v3289 = vld [vmem:[%s3285 + $0xc] sm:$0xf]
      %v3290 = vld [vmem:[%s3285 + $0x10] sm:$0xf]
      %v3291 = vld [vmem:[%s3285 + $0x14] sm:$0xf]
      %v3292 = vld [vmem:[%s3285 + $0x18] sm:$0xf]
      %v3293 = vld [vmem:[%s3285 + $0x1c] sm:$0xf]
      %v3294 = vld [vmem:[%s3285 + $0x20] sm:$0xf]
      %v3295 = vld [vmem:[%s3285 + $0x24] sm:$0xf]
      %v3296 = vld [vmem:[%s3285 + $0x28] sm:$0xf]
      %v3297 = vld [vmem:[%s3285 + $0x2c] sm:$0xf]
      %v3298 = vld [vmem:[%s3285 + $0x30] sm:$0xf]
      %v3299 = vld [vmem:[%s3285 + $0x34] sm:$0xf]
      %v3300 = vld [vmem:[%s3285 + $0x38] sm:$0xf]
      %v3301 = vld [vmem:[%s3285 + $0x3c] sm:$0xf]
      %v3302 = vunpack.c.l.b16 %v3176
      %v3303 = vunpack.c.l.b16 %v3179
      %v3304 = vunpack.c.l.b16 %v3183
      %v3305 = vunpack.c.l.b16 %v3186
      %v3306 = vunpack.c.l.b16 %v3190
      %v3307 = vunpack.c.l.b16 %v3193
      %v3308 = vunpack.c.l.b16 %v3197
      %v3309 = vunpack.c.l.b16 %v3200
      %v3310 = vunpack.c.l.b16 %v3204
      %v3311 = vunpack.c.l.b16 %v3207
      %v3312 = vunpack.c.l.b16 %v3211
      %v3313 = vunpack.c.l.b16 %v3214
      %v3314 = vunpack.c.l.b16 %v3218
      %v3315 = vunpack.c.l.b16 %v3221
      %v3316 = vunpack.c.l.b16 %v3225
      %v3317 = vunpack.c.l.b16 %v3228
      %v3318 = vunpack.c.l.b16 %v3232
      %v3319 = vunpack.c.l.b16 %v3235
      %v3320 = vunpack.c.l.b16 %v3239
      %v3321 = vunpack.c.l.b16 %v3242
      %v3322 = vunpack.c.l.b16 %v3246
      %v3323 = vunpack.c.l.b16 %v3249
      %v3324 = vunpack.c.l.b16 %v3253
      %v3325 = vunpack.c.l.b16 %v3256
      %v3326 = vunpack.c.l.b16 %v3260
      %v3327 = vunpack.c.l.b16 %v3263
      %v3328 = vunpack.c.l.b16 %v3267
      %v3329 = vunpack.c.l.b16 %v3270
      %v3330 = vunpack.c.l.b16 %v3274
      %v3331 = vunpack.c.l.b16 %v3277
      %v3332 = vunpack.c.l.b16 %v3281
      %v3333 = vunpack.c.l.b16 %v3284
      %v3334 = vpack.c.b16 %v3303, %v3302
      %v3335 = vpack.c.b16 %v3305, %v3304
      %v3336 = vpack.c.b16 %v3307, %v3306
      %v3337 = vpack.c.b16 %v3309, %v3308
      %v3338 = vpack.c.b16 %v3311, %v3310
      %v3339 = vpack.c.b16 %v3313, %v3312
      %v3340 = vpack.c.b16 %v3315, %v3314
      %v3341 = vpack.c.b16 %v3317, %v3316
      %v3342 = vpack.c.b16 %v3319, %v3318
      %v3343 = vpack.c.b16 %v3321, %v3320
      %v3344 = vpack.c.b16 %v3323, %v3322
      %v3345 = vpack.c.b16 %v3325, %v3324
      %v3346 = vpack.c.b16 %v3327, %v3326
      %v3347 = vpack.c.b16 %v3329, %v3328
      %v3348 = vpack.c.b16 %v3331, %v3330
      %v3349 = vpack.c.b16 %v3333, %v3332
      %v3382 = vunpack.c.l.b16 %v3286
      %v3383 = vunpack.c.l.b16 %v3287
      %v3384 = vunpack.c.l.b16 %v3288
      %v3385 = vunpack.c.l.b16 %v3289
      %v3386 = vunpack.c.l.b16 %v3290
      %v3387 = vunpack.c.l.b16 %v3291
      %v3388 = vunpack.c.l.b16 %v3292
      %v3389 = vunpack.c.l.b16 %v3293
      %v3390 = vunpack.c.l.b16 %v3294
      %v3391 = vunpack.c.l.b16 %v3295
      %v3392 = vunpack.c.l.b16 %v3296
      %v3393 = vunpack.c.l.b16 %v3297
      %v3394 = vunpack.c.l.b16 %v3298
      %v3395 = vunpack.c.l.b16 %v3299
      %v3396 = vunpack.c.l.b16 %v3300
      %v3397 = vunpack.c.l.b16 %v3301
      %v3398 = vpack.c.b16 %v3383, %v3382
      %v3399 = vpack.c.b16 %v3385, %v3384
      %v3400 = vpack.c.b16 %v3387, %v3386
      %v3401 = vpack.c.b16 %v3389, %v3388
      %v3402 = vpack.c.b16 %v3391, %v3390
      %v3403 = vpack.c.b16 %v3393, %v3392
      %v3404 = vpack.c.b16 %v3395, %v3394
      %v3405 = vpack.c.b16 %v3397, %v3396
      %3414 = vmatprep.subr.bf16.mxu0 0
      %3415 = vmatpush1.bf16.msra.mxu0 %v3398
      %3416 = vmatprep.subr.bf16.mxu0 0
      %3417 = vmatpush1.bf16.msra.mxu0 %v3399
      %3418 = vmatprep.subr.bf16.mxu0 0
      %3419 = vmatpush1.bf16.msra.mxu0 %v3400
      %3420 = vmatprep.subr.bf16.mxu0 0
      %3421 = vmatpush1.bf16.msra.mxu0 %v3401
      %3422 = vmatprep.subr.bf16.mxu0 0
      %3423 = vmatpush1.bf16.msra.mxu0 %v3402
      %3424 = vmatprep.subr.bf16.mxu0 0
      %3425 = vmatpush1.bf16.msra.mxu0 %v3403
      %3426 = vmatprep.subr.bf16.mxu0 0
      %3427 = vmatpush1.bf16.msra.mxu0 %v3404
      %3428 = vmatprep.subr.bf16.mxu0 0
      %3429 = vmatpush1.bf16.msra.mxu0 %v3405
      %3430 = vmatprep.subr.bf16.mxu0 0
      %3431 = vmatpush1.bf16.msra.mxu0 0
      %3432 = vmatprep.subr.bf16.mxu0 0
      %3433 = vmatpush1.bf16.msra.mxu0 0
      %3434 = vmatprep.subr.bf16.mxu0 0
      %3435 = vmatpush1.bf16.msra.mxu0 0
      %3436 = vmatprep.subr.bf16.mxu0 0
      %3437 = vmatpush1.bf16.msra.mxu0 0
      %3438 = vmatprep.subr.bf16.mxu0 0
      %3439 = vmatpush1.bf16.msra.mxu0 0
      %3440 = vmatprep.subr.bf16.mxu0 0
      %3441 = vmatpush1.bf16.msra.mxu0 0
      %3442 = vmatprep.subr.bf16.mxu0 0
      %3443 = vmatpush1.bf16.msra.mxu0 0
      %3444 = vmatprep.subr.bf16.mxu0 0
      %3445 = vmatpush1.bf16.msra.mxu0 0
      %3446 = vmatprep.mubr.bf16.mxu0 0
      %3447 = vmatmul.mubr.bf16.gmra.mrb[0].mxu0 %v3334
      %v3448 = vpop.f32.mrb[0].mxu0
      %v3449 = vadd.f32 0.0, %v3448
      %v3450 = vpop.f32.mrb[0].mxu0
      %v3451 = vpop.f32.mrb[0].mxu0
      %v3452 = vadd.f32 0.0, %v3451
      %v3453 = vpop.f32.mrb[0].mxu0
      %3454 = vmatprep.mubr.bf16.mxu0 0
      %3455 = vmatmul.mubr.bf16.gmra.mrb[0].mxu0 %v3335
      %v3456 = vpop.f32.mrb[0].mxu0
      %v3457 = vadd.f32 0.0, %v3456
      %v3458 = vpop.f32.mrb[0].mxu0
      %v3459 = vpop.f32.mrb[0].mxu0
      %v3460 = vadd.f32 0.0, %v3459
      %v3461 = vpop.f32.mrb[0].mxu0
      %3462 = vmatprep.mubr.bf16.mxu0 0
      %3463 = vmatmul.mubr.bf16.gmra.mrb[0].mxu0 %v3336
      %v3464 = vpop.f32.mrb[0].mxu0
      %v3465 = vadd.f32 0.0, %v3464
      %v3466 = vpop.f32.mrb[0].mxu0
      %v3467 = vpop.f32.mrb[0].mxu0
      %v3468 = vadd.f32 0.0, %v3467
      %v3469 = vpop.f32.mrb[0].mxu0
      %3470 = vmatprep.mubr.bf16.mxu0 0
      %3471 = vmatmul.mubr.bf16.gmra.mrb[0].mxu0 %v3337
      %v3472 = vpop.f32.mrb[0].mxu0
      %v3473 = vadd.f32 0.0, %v3472
      %v3474 = vpop.f32.mrb[0].mxu0
      %v3475 = vpop.f32.mrb[0].mxu0
      %v3476 = vadd.f32 0.0, %v3475
      %v3477 = vpop.f32.mrb[0].mxu0
      %3478 = vmatprep.mubr.bf16.mxu0 0
      %3479 = vmatmul.mubr.bf16.gmra.mrb[0].mxu0 %v3338
      %v3480 = vpop.f32.mrb[0].mxu0
      %v3481 = vadd.f32 0.0, %v3480
      %v3482 = vpop.f32.mrb[0].mxu0
      %v3483 = vpop.f32.mrb[0].mxu0
      %v3484 = vadd.f32 0.0, %v3483
      %v3485 = vpop.f32.mrb[0].mxu0
      %3486 = vmatprep.mubr.bf16.mxu0 0
      %3487 = vmatmul.mubr.bf16.gmra.mrb[0].mxu0 %v3339
      %v3488 = vpop.f32.mrb[0].mxu0
      %v3489 = vadd.f32 0.0, %v3488
      %v3490 = vpop.f32.mrb[0].mxu0
      %v3491 = vpop.f32.mrb[0].mxu0
      %v3492 = vadd.f32 0.0, %v3491
      %v3493 = vpop.f32.mrb[0].mxu0
      %3494 = vmatprep.mubr.bf16.mxu0 0
      %3495 = vmatmul.mubr.bf16.gmra.mrb[0].mxu0 %v3340
      %v3496 = vpop.f32.mrb[0].mxu0
      %v3497 = vadd.f32 0.0, %v3496
      %v3498 = vpop.f32.mrb[0].mxu0
      %v3499 = vpop.f32.mrb[0].mxu0
      %v3500 = vadd.f32 0.0, %v3499
      %v3501 = vpop.f32.mrb[0].mxu0
      %3502 = vmatprep.mubr.bf16.mxu0 0
      %3503 = vmatmul.mubr.bf16.gmra.mrb[0].mxu0 %v3341
      %v3504 = vpop.f32.mrb[0].mxu0
      %v3505 = vadd.f32 0.0, %v3504
      %v3506 = vpop.f32.mrb[0].mxu0
      %v3507 = vpop.f32.mrb[0].mxu0
      %v3508 = vadd.f32 0.0, %v3507
      %v3509 = vpop.f32.mrb[0].mxu0
      %3510 = vmatprep.mubr.bf16.mxu0 0
      %3511 = vmatmul.mubr.bf16.gmra.mrb[0].mxu0 %v3342
      %v3512 = vpop.f32.mrb[0].mxu0
      %v3513 = vadd.f32 0.0, %v3512
      %v3514 = vpop.f32.mrb[0].mxu0
      %v3515 = vpop.f32.mrb[0].mxu0
      %v3516 = vadd.f32 0.0, %v3515
      %v3517 = vpop.f32.mrb[0].mxu0
      %3518 = vmatprep.mubr.bf16.mxu0 0
      %3519 = vmatmul.mubr.bf16.gmra.mrb[0].mxu0 %v3343
      %v3520 = vpop.f32.mrb[0].mxu0
      %v3521 = vadd.f32 0.0, %v3520
      %v3522 = vpop.f32.mrb[0].mxu0
      %v3523 = vpop.f32.mrb[0].mxu0
      %v3524 = vadd.f32 0.0, %v3523
      %v3525 = vpop.f32.mrb[0].mxu0
      %3526 = vmatprep.mubr.bf16.mxu0 0
      %3527 = vmatmul.mubr.bf16.gmra.mrb[0].mxu0 %v3344
      %v3528 = vpop.f32.mrb[0].mxu0
      %v3529 = vadd.f32 0.0, %v3528
      %v3530 = vpop.f32.mrb[0].mxu0
      %v3531 = vpop.f32.mrb[0].mxu0
      %v3532 = vadd.f32 0.0, %v3531
      %v3533 = vpop.f32.mrb[0].mxu0
      %3534 = vmatprep.mubr.bf16.mxu0 0
      %3535 = vmatmul.mubr.bf16.gmra.mrb[0].mxu0 %v3345
      %v3536 = vpop.f32.mrb[0].mxu0
      %v3537 = vadd.f32 0.0, %v3536
      %v3538 = vpop.f32.mrb[0].mxu0
      %v3539 = vpop.f32.mrb[0].mxu0
      %v3540 = vadd.f32 0.0, %v3539
      %v3541 = vpop.f32.mrb[0].mxu0
      %3542 = vmatprep.mubr.bf16.mxu0 0
      %3543 = vmatmul.mubr.bf16.gmra.mrb[0].mxu0 %v3346
      %v3544 = vpop.f32.mrb[0].mxu0
      %v3545 = vadd.f32 0.0, %v3544
      %v3546 = vpop.f32.mrb[0].mxu0
      %v3547 = vpop.f32.mrb[0].mxu0
      %v3548 = vadd.f32 0.0, %v3547
      %v3549 = vpop.f32.mrb[0].mxu0
      %3550 = vmatprep.mubr.bf16.mxu0 0
      %3551 = vmatmul.mubr.bf16.gmra.mrb[0].mxu0 %v3347
      %v3552 = vpop.f32.mrb[0].mxu0
      %v3553 = vadd.f32 0.0, %v3552
      %v3554 = vpop.f32.mrb[0].mxu0
      %v3555 = vpop.f32.mrb[0].mxu0
      %v3556 = vadd.f32 0.0, %v3555
      %v3557 = vpop.f32.mrb[0].mxu0
      %3558 = vmatprep.mubr.bf16.mxu0 0
      %3559 = vmatmul.mubr.bf16.gmra.mrb[0].mxu0 %v3348
      %v3560 = vpop.f32.mrb[0].mxu0
      %v3561 = vadd.f32 0.0, %v3560
      %v3562 = vpop.f32.mrb[0].mxu0
      %v3563 = vpop.f32.mrb[0].mxu0
      %v3564 = vadd.f32 0.0, %v3563
      %v3565 = vpop.f32.mrb[0].mxu0
      %3566 = vmatprep.mubr.bf16.mxu0 0
      %3567 = vmatmul.mubr.bf16.gmra.mrb[0].mxu0 %v3349
      %v3568 = vpop.f32.mrb[0].mxu0
      %v3569 = vadd.f32 0.0, %v3568
      %v3570 = vpop.f32.mrb[0].mxu0
      %v3571 = vpop.f32.mrb[0].mxu0
      %v3572 = vadd.f32 0.0, %v3571
      %v3573 = vpop.f32.mrb[0].mxu0
      %3574 = vdwg.mxu0
      %v3575 = vadd.f32 %v3077, %v3449
      %v3576 = vadd.f32 %v3078, %v3452
      %v3577 = vadd.f32 %v3079, %v3457
      %v3578 = vadd.f32 %v3080, %v3460
      %v3579 = vadd.f32 %v3081, %v3465
      %v3580 = vadd.f32 %v3082, %v3468
      %v3581 = vadd.f32 %v3083, %v3473
      %v3582 = vadd.f32 %v3084, %v3476
      %v3583 = vadd.f32 %v3085, %v3481
      %v3584 = vadd.f32 %v3086, %v3484
      %v3585 = vadd.f32 %v3087, %v3489
      %v3586 = vadd.f32 %v3088, %v3492
      %v3587 = vadd.f32 %v3089, %v3497
      %v3588 = vadd.f32 %v3090, %v3500
      %v3589 = vadd.f32 %v3091, %v3505
      %v3590 = vadd.f32 %v3092, %v3508
      %v3591 = vadd.f32 %v3093, %v3513
      %v3592 = vadd.f32 %v3094, %v3516
      %v3593 = vadd.f32 %v3095, %v3521
      %v3594 = vadd.f32 %v3096, %v3524
      %v3595 = vadd.f32 %v3097, %v3529
      %v3596 = vadd.f32 %v3098, %v3532
      %v3597 = vadd.f32 %v3099, %v3537
      %v3598 = vadd.f32 %v3100, %v3540
      %v3599 = vadd.f32 %v3101, %v3545
      %v3600 = vadd.f32 %v3102, %v3548
      %v3601 = vadd.f32 %v3103, %v3553
      %v3602 = vadd.f32 %v3104, %v3556
      %v3603 = vadd.f32 %v3105, %v3561
      %v3604 = vadd.f32 %v3106, %v3564
      %v3605 = vadd.f32 %v3107, %v3569
      %v3606 = vadd.f32 %v3108, %v3572
      %s3607 = scalar_lea.vmem %s227, 24
      %v3608 = vld [vmem:[%s3607] sm:$0xf]
      %v3609 = vld [vmem:[%s3607 + $0x4] sm:$0xf]
      %v3610 = vld [vmem:[%s3607 + $0xc] sm:$0xf]
      %v3611 = vld [vmem:[%s3607 + $0x10] sm:$0xf]
      %v3612 = vld [vmem:[%s3607 + $0x18] sm:$0xf]
      %v3613 = vld [vmem:[%s3607 + $0x1c] sm:$0xf]
      %v3614 = vld [vmem:[%s3607 + $0x24] sm:$0xf]
      %v3615 = vld [vmem:[%s3607 + $0x28] sm:$0xf]
      %v3616 = vld [vmem:[%s3607 + $0x30] sm:$0xf]
      %v3617 = vld [vmem:[%s3607 + $0x34] sm:$0xf]
      %v3618 = vld [vmem:[%s3607 + $0x3c] sm:$0xf]
      %v3619 = vld [vmem:[%s3607 + $0x40] sm:$0xf]
      %v3620 = vld [vmem:[%s3607 + $0x48] sm:$0xf]
      %v3621 = vld [vmem:[%s3607 + $0x4c] sm:$0xf]
      %v3622 = vld [vmem:[%s3607 + $0x54] sm:$0xf]
      %v3623 = vld [vmem:[%s3607 + $0x58] sm:$0xf]
      %v3624 = vld [vmem:[%s3607 + $0x60] sm:$0xf]
      %v3625 = vld [vmem:[%s3607 + $0x64] sm:$0xf]
      %v3626 = vld [vmem:[%s3607 + $0x6c] sm:$0xf]
      %v3627 = vld [vmem:[%s3607 + $0x70] sm:$0xf]
      %v3628 = vld [vmem:[%s3607 + $0x78] sm:$0xf]
      %v3629 = vld [vmem:[%s3607 + $0x7c] sm:$0xf]
      %v3630 = vld [vmem:[%s3607 + $0x84] sm:$0xf]
      %v3631 = vld [vmem:[%s3607 + $0x88] sm:$0xf]
      %v3632 = vld [vmem:[%s3607 + $0x90] sm:$0xf]
      %v3633 = vld [vmem:[%s3607 + $0x94] sm:$0xf]
      %v3634 = vld [vmem:[%s3607 + $0x9c] sm:$0xf]
      %v3635 = vld [vmem:[%s3607 + $0xa0] sm:$0xf]
      %v3636 = vld [vmem:[%s3607 + $0xa8] sm:$0xf]
      %v3637 = vld [vmem:[%s3607 + $0xac] sm:$0xf]
      %v3638 = vld [vmem:[%s3607 + $0xb4] sm:$0xf]
      %v3639 = vld [vmem:[%s3607 + $0xb8] sm:$0xf]
      %s3640 = scalar_lea.vmem %s240, 384
      %v3641 = vld [vmem:[%s3640] sm:$0xf]
      %v3642 = vld [vmem:[%s3640 + $0x4] sm:$0xf]
      %v3643 = vld [vmem:[%s3640 + $0x8] sm:$0xf]
      %v3644 = vld [vmem:[%s3640 + $0xc] sm:$0xf]
      %v3645 = vld [vmem:[%s3640 + $0x10] sm:$0xf]
      %v3646 = vld [vmem:[%s3640 + $0x14] sm:$0xf]
      %v3647 = vld [vmem:[%s3640 + $0x18] sm:$0xf]
      %v3648 = vld [vmem:[%s3640 + $0x1c] sm:$0xf]
      %v3649 = vld [vmem:[%s3640 + $0x20] sm:$0xf]
      %v3650 = vld [vmem:[%s3640 + $0x24] sm:$0xf]
      %v3651 = vld [vmem:[%s3640 + $0x28] sm:$0xf]
      %v3652 = vld [vmem:[%s3640 + $0x2c] sm:$0xf]
      %v3653 = vld [vmem:[%s3640 + $0x30] sm:$0xf]
      %v3654 = vld [vmem:[%s3640 + $0x34] sm:$0xf]
      %v3655 = vld [vmem:[%s3640 + $0x38] sm:$0xf]
      %v3656 = vld [vmem:[%s3640 + $0x3c] sm:$0xf]
      %v3689 = vunpack.c.l.b16 %v3608
      %v3690 = vunpack.c.l.b16 %v3609
      %v3691 = vunpack.c.l.b16 %v3610
      %v3692 = vunpack.c.l.b16 %v3611
      %v3693 = vunpack.c.l.b16 %v3612
      %v3694 = vunpack.c.l.b16 %v3613
      %v3695 = vunpack.c.l.b16 %v3614
      %v3696 = vunpack.c.l.b16 %v3615
      %v3697 = vunpack.c.l.b16 %v3616
      %v3698 = vunpack.c.l.b16 %v3617
      %v3699 = vunpack.c.l.b16 %v3618
      %v3700 = vunpack.c.l.b16 %v3619
      %v3701 = vunpack.c.l.b16 %v3620
      %v3702 = vunpack.c.l.b16 %v3621
      %v3703 = vunpack.c.l.b16 %v3622
      %v3704 = vunpack.c.l.b16 %v3623
      %v3705 = vunpack.c.l.b16 %v3624
      %v3706 = vunpack.c.l.b16 %v3625
      %v3707 = vunpack.c.l.b16 %v3626
      %v3708 = vunpack.c.l.b16 %v3627
      %v3709 = vunpack.c.l.b16 %v3628
      %v3710 = vunpack.c.l.b16 %v3629
      %v3711 = vunpack.c.l.b16 %v3630
      %v3712 = vunpack.c.l.b16 %v3631
      %v3713 = vunpack.c.l.b16 %v3632
      %v3714 = vunpack.c.l.b16 %v3633
      %v3715 = vunpack.c.l.b16 %v3634
      %v3716 = vunpack.c.l.b16 %v3635
      %v3717 = vunpack.c.l.b16 %v3636
      %v3718 = vunpack.c.l.b16 %v3637
      %v3719 = vunpack.c.l.b16 %v3638
      %v3720 = vunpack.c.l.b16 %v3639
      %v3721 = vpack.c.b16 %v3690, %v3689
      %v3722 = vpack.c.b16 %v3692, %v3691
      %v3723 = vpack.c.b16 %v3694, %v3693
      %v3724 = vpack.c.b16 %v3696, %v3695
      %v3725 = vpack.c.b16 %v3698, %v3697
      %v3726 = vpack.c.b16 %v3700, %v3699
      %v3727 = vpack.c.b16 %v3702, %v3701
      %v3728 = vpack.c.b16 %v3704, %v3703
      %v3729 = vpack.c.b16 %v3706, %v3705
      %v3730 = vpack.c.b16 %v3708, %v3707
      %v3731 = vpack.c.b16 %v3710, %v3709
      %v3732 = vpack.c.b16 %v3712, %v3711
      %v3733 = vpack.c.b16 %v3714, %v3713
      %v3734 = vpack.c.b16 %v3716, %v3715
      %v3735 = vpack.c.b16 %v3718, %v3717
      %v3736 = vpack.c.b16 %v3720, %v3719
      %v3769 = vunpack.c.l.b16 %v3641
      %v3770 = vunpack.c.l.b16 %v3642
      %v3771 = vunpack.c.l.b16 %v3643
      %v3772 = vunpack.c.l.b16 %v3644
      %v3773 = vunpack.c.l.b16 %v3645
      %v3774 = vunpack.c.l.b16 %v3646
      %v3775 = vunpack.c.l.b16 %v3647
      %v3776 = vunpack.c.l.b16 %v3648
      %v3777 = vunpack.c.l.b16 %v3649
      %v3778 = vunpack.c.l.b16 %v3650
      %v3779 = vunpack.c.l.b16 %v3651
      %v3780 = vunpack.c.l.b16 %v3652
      %v3781 = vunpack.c.l.b16 %v3653
      %v3782 = vunpack.c.l.b16 %v3654
      %v3783 = vunpack.c.l.b16 %v3655
      %v3784 = vunpack.c.l.b16 %v3656
      %v3785 = vpack.c.b16 %v3770, %v3769
      %v3786 = vpack.c.b16 %v3772, %v3771
      %v3787 = vpack.c.b16 %v3774, %v3773
      %v3788 = vpack.c.b16 %v3776, %v3775
      %v3789 = vpack.c.b16 %v3778, %v3777
      %v3790 = vpack.c.b16 %v3780, %v3779
      %v3791 = vpack.c.b16 %v3782, %v3781
      %v3792 = vpack.c.b16 %v3784, %v3783
      %3801 = vmatprep.subr.bf16.mxu0 0
      %3802 = vmatpush1.bf16.msra.mxu0 %v3785
      %3803 = vmatprep.subr.bf16.mxu0 0
      %3804 = vmatpush1.bf16.msra.mxu0 %v3786
      %3805 = vmatprep.subr.bf16.mxu0 0
      %3806 = vmatpush1.bf16.msra.mxu0 %v3787
      %3807 = vmatprep.subr.bf16.mxu0 0
      %3808 = vmatpush1.bf16.msra.mxu0 %v3788
      %3809 = vmatprep.subr.bf16.mxu0 0
      %3810 = vmatpush1.bf16.msra.mxu0 %v3789
      %3811 = vmatprep.subr.bf16.mxu0 0
      %3812 = vmatpush1.bf16.msra.mxu0 %v3790
      %3813 = vmatprep.subr.bf16.mxu0 0
      %3814 = vmatpush1.bf16.msra.mxu0 %v3791
      %3815 = vmatprep.subr.bf16.mxu0 0
      %3816 = vmatpush1.bf16.msra.mxu0 %v3792
      %3817 = vmatprep.subr.bf16.mxu0 0
      %3818 = vmatpush1.bf16.msra.mxu0 0
      %3819 = vmatprep.subr.bf16.mxu0 0
      %3820 = vmatpush1.bf16.msra.mxu0 0
      %3821 = vmatprep.subr.bf16.mxu0 0
      %3822 = vmatpush1.bf16.msra.mxu0 0
      %3823 = vmatprep.subr.bf16.mxu0 0
      %3824 = vmatpush1.bf16.msra.mxu0 0
      %3825 = vmatprep.subr.bf16.mxu0 0
      %3826 = vmatpush1.bf16.msra.mxu0 0
      %3827 = vmatprep.subr.bf16.mxu0 0
      %3828 = vmatpush1.bf16.msra.mxu0 0
      %3829 = vmatprep.subr.bf16.mxu0 0
      %3830 = vmatpush1.bf16.msra.mxu0 0
      %3831 = vmatprep.subr.bf16.mxu0 0
      %3832 = vmatpush1.bf16.msra.mxu0 0
      %3833 = vmatprep.mubr.bf16.mxu0 0
      %3834 = vmatmul.mubr.bf16.gmra.mrb[0].mxu0 %v3721
      %v3835 = vpop.f32.mrb[0].mxu0
      %v3836 = vadd.f32 0.0, %v3835
      %v3837 = vpop.f32.mrb[0].mxu0
      %v3838 = vpop.f32.mrb[0].mxu0
      %v3839 = vadd.f32 0.0, %v3838
      %v3840 = vpop.f32.mrb[0].mxu0
      %3841 = vmatprep.mubr.bf16.mxu0 0
      %3842 = vmatmul.mubr.bf16.gmra.mrb[0].mxu0 %v3722
      %v3843 = vpop.f32.mrb[0].mxu0
      %v3844 = vadd.f32 0.0, %v3843
      %v3845 = vpop.f32.mrb[0].mxu0
      %v3846 = vpop.f32.mrb[0].mxu0
      %v3847 = vadd.f32 0.0, %v3846
      %v3848 = vpop.f32.mrb[0].mxu0
      %3849 = vmatprep.mubr.bf16.mxu0 0
      %3850 = vmatmul.mubr.bf16.gmra.mrb[0].mxu0 %v3723
      %v3851 = vpop.f32.mrb[0].mxu0
      %v3852 = vadd.f32 0.0, %v3851
      %v3853 = vpop.f32.mrb[0].mxu0
      %v3854 = vpop.f32.mrb[0].mxu0
      %v3855 = vadd.f32 0.0, %v3854
      %v3856 = vpop.f32.mrb[0].mxu0
      %3857 = vmatprep.mubr.bf16.mxu0 0
      %3858 = vmatmul.mubr.bf16.gmra.mrb[0].mxu0 %v3724
      %v3859 = vpop.f32.mrb[0].mxu0
      %v3860 = vadd.f32 0.0, %v3859
      %v3861 = vpop.f32.mrb[0].mxu0
      %v3862 = vpop.f32.mrb[0].mxu0
      %v3863 = vadd.f32 0.0, %v3862
      %v3864 = vpop.f32.mrb[0].mxu0
      %3865 = vmatprep.mubr.bf16.mxu0 0
      %3866 = vmatmul.mubr.bf16.gmra.mrb[0].mxu0 %v3725
      %v3867 = vpop.f32.mrb[0].mxu0
      %v3868 = vadd.f32 0.0, %v3867
      %v3869 = vpop.f32.mrb[0].mxu0
      %v3870 = vpop.f32.mrb[0].mxu0
      %v3871 = vadd.f32 0.0, %v3870
      %v3872 = vpop.f32.mrb[0].mxu0
      %3873 = vmatprep.mubr.bf16.mxu0 0
      %3874 = vmatmul.mubr.bf16.gmra.mrb[0].mxu0 %v3726
      %v3875 = vpop.f32.mrb[0].mxu0
      %v3876 = vadd.f32 0.0, %v3875
      %v3877 = vpop.f32.mrb[0].mxu0
      %v3878 = vpop.f32.mrb[0].mxu0
      %v3879 = vadd.f32 0.0, %v3878
      %v3880 = vpop.f32.mrb[0].mxu0
      %3881 = vmatprep.mubr.bf16.mxu0 0
      %3882 = vmatmul.mubr.bf16.gmra.mrb[0].mxu0 %v3727
      %v3883 = vpop.f32.mrb[0].mxu0
      %v3884 = vadd.f32 0.0, %v3883
      %v3885 = vpop.f32.mrb[0].mxu0
      %v3886 = vpop.f32.mrb[0].mxu0
      %v3887 = vadd.f32 0.0, %v3886
      %v3888 = vpop.f32.mrb[0].mxu0
      %3889 = vmatprep.mubr.bf16.mxu0 0
      %3890 = vmatmul.mubr.bf16.gmra.mrb[0].mxu0 %v3728
      %v3891 = vpop.f32.mrb[0].mxu0
      %v3892 = vadd.f32 0.0, %v3891
      %v3893 = vpop.f32.mrb[0].mxu0
      %v3894 = vpop.f32.mrb[0].mxu0
      %v3895 = vadd.f32 0.0, %v3894
      %v3896 = vpop.f32.mrb[0].mxu0
      %3897 = vmatprep.mubr.bf16.mxu0 0
      %3898 = vmatmul.mubr.bf16.gmra.mrb[0].mxu0 %v3729
      %v3899 = vpop.f32.mrb[0].mxu0
      %v3900 = vadd.f32 0.0, %v3899
      %v3901 = vpop.f32.mrb[0].mxu0
      %v3902 = vpop.f32.mrb[0].mxu0
      %v3903 = vadd.f32 0.0, %v3902
      %v3904 = vpop.f32.mrb[0].mxu0
      %3905 = vmatprep.mubr.bf16.mxu0 0
      %3906 = vmatmul.mubr.bf16.gmra.mrb[0].mxu0 %v3730
      %v3907 = vpop.f32.mrb[0].mxu0
      %v3908 = vadd.f32 0.0, %v3907
      %v3909 = vpop.f32.mrb[0].mxu0
      %v3910 = vpop.f32.mrb[0].mxu0
      %v3911 = vadd.f32 0.0, %v3910
      %v3912 = vpop.f32.mrb[0].mxu0
      %3913 = vmatprep.mubr.bf16.mxu0 0
      %3914 = vmatmul.mubr.bf16.gmra.mrb[0].mxu0 %v3731
      %v3915 = vpop.f32.mrb[0].mxu0
      %v3916 = vadd.f32 0.0, %v3915
      %v3917 = vpop.f32.mrb[0].mxu0
      %v3918 = vpop.f32.mrb[0].mxu0
      %v3919 = vadd.f32 0.0, %v3918
      %v3920 = vpop.f32.mrb[0].mxu0
      %3921 = vmatprep.mubr.bf16.mxu0 0
      %3922 = vmatmul.mubr.bf16.gmra.mrb[0].mxu0 %v3732
      %v3923 = vpop.f32.mrb[0].mxu0
      %v3924 = vadd.f32 0.0, %v3923
      %v3925 = vpop.f32.mrb[0].mxu0
      %v3926 = vpop.f32.mrb[0].mxu0
      %v3927 = vadd.f32 0.0, %v3926
      %v3928 = vpop.f32.mrb[0].mxu0
      %3929 = vmatprep.mubr.bf16.mxu0 0
      %3930 = vmatmul.mubr.bf16.gmra.mrb[0].mxu0 %v3733
      %v3931 = vpop.f32.mrb[0].mxu0
      %v3932 = vadd.f32 0.0, %v3931
      %v3933 = vpop.f32.mrb[0].mxu0
      %v3934 = vpop.f32.mrb[0].mxu0
      %v3935 = vadd.f32 0.0, %v3934
      %v3936 = vpop.f32.mrb[0].mxu0
      %3937 = vmatprep.mubr.bf16.mxu0 0
      %3938 = vmatmul.mubr.bf16.gmra.mrb[0].mxu0 %v3734
      %v3939 = vpop.f32.mrb[0].mxu0
      %v3940 = vadd.f32 0.0, %v3939
      %v3941 = vpop.f32.mrb[0].mxu0
      %v3942 = vpop.f32.mrb[0].mxu0
      %v3943 = vadd.f32 0.0, %v3942
      %v3944 = vpop.f32.mrb[0].mxu0
      %3945 = vmatprep.mubr.bf16.mxu0 0
      %3946 = vmatmul.mubr.bf16.gmra.mrb[0].mxu0 %v3735
      %v3947 = vpop.f32.mrb[0].mxu0
      %v3948 = vadd.f32 0.0, %v3947
      %v3949 = vpop.f32.mrb[0].mxu0
      %v3950 = vpop.f32.mrb[0].mxu0
      %v3951 = vadd.f32 0.0, %v3950
      %v3952 = vpop.f32.mrb[0].mxu0
      %3953 = vmatprep.mubr.bf16.mxu0 0
      %3954 = vmatmul.mubr.bf16.gmra.mrb[0].mxu0 %v3736
      %v3955 = vpop.f32.mrb[0].mxu0
      %v3956 = vadd.f32 0.0, %v3955
      %v3957 = vpop.f32.mrb[0].mxu0
      %v3958 = vpop.f32.mrb[0].mxu0
      %v3959 = vadd.f32 0.0, %v3958
      %v3960 = vpop.f32.mrb[0].mxu0
      %3961 = vdwg.mxu0
      %v3962 = vadd.f32 %v3575, %v3836
      %v3963 = vadd.f32 %v3576, %v3839
      %v3964 = vadd.f32 %v3577, %v3844
      %v3965 = vadd.f32 %v3578, %v3847
      %v3966 = vadd.f32 %v3579, %v3852
      %v3967 = vadd.f32 %v3580, %v3855
      %v3968 = vadd.f32 %v3581, %v3860
      %v3969 = vadd.f32 %v3582, %v3863
      %v3970 = vadd.f32 %v3583, %v3868
      %v3971 = vadd.f32 %v3584, %v3871
      %v3972 = vadd.f32 %v3585, %v3876
      %v3973 = vadd.f32 %v3586, %v3879
      %v3974 = vadd.f32 %v3587, %v3884
      %v3975 = vadd.f32 %v3588, %v3887
      %v3976 = vadd.f32 %v3589, %v3892
      %v3977 = vadd.f32 %v3590, %v3895
      %v3978 = vadd.f32 %v3591, %v3900
      %v3979 = vadd.f32 %v3592, %v3903
      %v3980 = vadd.f32 %v3593, %v3908
      %v3981 = vadd.f32 %v3594, %v3911
      %v3982 = vadd.f32 %v3595, %v3916
      %v3983 = vadd.f32 %v3596, %v3919
      %v3984 = vadd.f32 %v3597, %v3924
      %v3985 = vadd.f32 %v3598, %v3927
      %v3986 = vadd.f32 %v3599, %v3932
      %v3987 = vadd.f32 %v3600, %v3935
      %v3988 = vadd.f32 %v3601, %v3940
      %v3989 = vadd.f32 %v3602, %v3943
      %v3990 = vadd.f32 %v3603, %v3948
      %v3991 = vadd.f32 %v3604, %v3951
      %v3992 = vadd.f32 %v3605, %v3956
      %v3993 = vadd.f32 %v3606, %v3959
      %v3994 = vld [vmem:[%s3607] sm:$0xf]
      %v3995 = vld [vmem:[%s3607 + $0x4] sm:$0xf]
      %v3996 = vld [vmem:[%s3607 + $0x8] sm:$0x1]
      %v3997 = vld [vmem:[%s3607 + $0xc] sm:$0xf]
      %v3998 = vld [vmem:[%s3607 + $0x10] sm:$0xf]
      %v3999 = vld [vmem:[%s3607 + $0x14] sm:$0x1]
      %v4000 = vld [vmem:[%s3607 + $0x18] sm:$0xf]
      %v4001 = vld [vmem:[%s3607 + $0x1c] sm:$0xf]
      %v4002 = vld [vmem:[%s3607 + $0x20] sm:$0x1]
      %v4003 = vld [vmem:[%s3607 + $0x24] sm:$0xf]
      %v4004 = vld [vmem:[%s3607 + $0x28] sm:$0xf]
      %v4005 = vld [vmem:[%s3607 + $0x2c] sm:$0x1]
      %v4006 = vld [vmem:[%s3607 + $0x30] sm:$0xf]
      %v4007 = vld [vmem:[%s3607 + $0x34] sm:$0xf]
      %v4008 = vld [vmem:[%s3607 + $0x38] sm:$0x1]
      %v4009 = vld [vmem:[%s3607 + $0x3c] sm:$0xf]
      %v4010 = vld [vmem:[%s3607 + $0x40] sm:$0xf]
      %v4011 = vld [vmem:[%s3607 + $0x44] sm:$0x1]
      %v4012 = vld [vmem:[%s3607 + $0x48] sm:$0xf]
      %v4013 = vld [vmem:[%s3607 + $0x4c] sm:$0xf]
      %v4014 = vld [vmem:[%s3607 + $0x50] sm:$0x1]
      %v4015 = vld [vmem:[%s3607 + $0x54] sm:$0xf]
      %v4016 = vld [vmem:[%s3607 + $0x58] sm:$0xf]
      %v4017 = vld [vmem:[%s3607 + $0x5c] sm:$0x1]
      %v4018 = vld [vmem:[%s3607 + $0x60] sm:$0xf]
      %v4019 = vld [vmem:[%s3607 + $0x64] sm:$0xf]
      %v4020 = vld [vmem:[%s3607 + $0x68] sm:$0x1]
      %v4021 = vld [vmem:[%s3607 + $0x6c] sm:$0xf]
      %v4022 = vld [vmem:[%s3607 + $0x70] sm:$0xf]
      %v4023 = vld [vmem:[%s3607 + $0x74] sm:$0x1]
      %v4024 = vld [vmem:[%s3607 + $0x78] sm:$0xf]
      %v4025 = vld [vmem:[%s3607 + $0x7c] sm:$0xf]
      %v4026 = vld [vmem:[%s3607 + $0x80] sm:$0x1]
      %v4027 = vld [vmem:[%s3607 + $0x84] sm:$0xf]
      %v4028 = vld [vmem:[%s3607 + $0x88] sm:$0xf]
      %v4029 = vld [vmem:[%s3607 + $0x8c] sm:$0x1]
      %v4030 = vld [vmem:[%s3607 + $0x90] sm:$0xf]
      %v4031 = vld [vmem:[%s3607 + $0x94] sm:$0xf]
      %v4032 = vld [vmem:[%s3607 + $0x98] sm:$0x1]
      %v4033 = vld [vmem:[%s3607 + $0x9c] sm:$0xf]
      %v4034 = vld [vmem:[%s3607 + $0xa0] sm:$0xf]
      %v4035 = vld [vmem:[%s3607 + $0xa4] sm:$0x1]
      %v4036 = vld [vmem:[%s3607 + $0xa8] sm:$0xf]
      %v4037 = vld [vmem:[%s3607 + $0xac] sm:$0xf]
      %v4038 = vld [vmem:[%s3607 + $0xb0] sm:$0x1]
      %v4039 = vld [vmem:[%s3607 + $0xb4] sm:$0xf]
      %v4040 = vld [vmem:[%s3607 + $0xb8] sm:$0xf]
      %v4041 = vld [vmem:[%s3607 + $0xbc] sm:$0x1]
      %v4043 = vshrl.u32 %v3994, 16
      %v4045 = vrot.slane %v4043, 4
      %v4046 = vshll.u32 %v3994, 16
      %v4048 = vrot.slane %v4046, 5
      %v4049 = vor.u32 %v4045, %v4048
      %v4050 = vrot.slane %v4049, 4
      %v4052 = vshll.u32 %v3995, 16
      %v4054 = vrot.slane %v4052, 5
      %v4055 = vsel %vm760, %v4050, %v4054
      %v4056 = vshrl.u32 %v3995, 16
      %v4058 = vrot.slane %v4056, 4
      %v4059 = vor.u32 %v4058, %v4054
      %v4060 = vrot.slane %v4059, 4
      %v4062 = vshll.u32 %v3996, 16
      %v4064 = vrot.slane %v4062, 5
      %v4065 = vsel %vm760, %v4060, %v4064
      %v4067 = vshrl.u32 %v3997, 16
      %v4069 = vrot.slane %v4067, 4
      %v4070 = vshll.u32 %v3997, 16
      %v4072 = vrot.slane %v4070, 5
      %v4073 = vor.u32 %v4069, %v4072
      %v4074 = vrot.slane %v4073, 4
      %v4076 = vshll.u32 %v3998, 16
      %v4078 = vrot.slane %v4076, 5
      %v4079 = vsel %vm760, %v4074, %v4078
      %v4080 = vshrl.u32 %v3998, 16
      %v4082 = vrot.slane %v4080, 4
      %v4083 = vor.u32 %v4082, %v4078
      %v4084 = vrot.slane %v4083, 4
      %v4086 = vshll.u32 %v3999, 16
      %v4088 = vrot.slane %v4086, 5
      %v4089 = vsel %vm760, %v4084, %v4088
      %v4091 = vshrl.u32 %v4000, 16
      %v4093 = vrot.slane %v4091, 4
      %v4094 = vshll.u32 %v4000, 16
      %v4096 = vrot.slane %v4094, 5
      %v4097 = vor.u32 %v4093, %v4096
      %v4098 = vrot.slane %v4097, 4
      %v4100 = vshll.u32 %v4001, 16
      %v4102 = vrot.slane %v4100, 5
      %v4103 = vsel %vm760, %v4098, %v4102
      %v4104 = vshrl.u32 %v4001, 16
      %v4106 = vrot.slane %v4104, 4
      %v4107 = vor.u32 %v4106, %v4102
      %v4108 = vrot.slane %v4107, 4
      %v4110 = vshll.u32 %v4002, 16
      %v4112 = vrot.slane %v4110, 5
      %v4113 = vsel %vm760, %v4108, %v4112
      %v4115 = vshrl.u32 %v4003, 16
      %v4117 = vrot.slane %v4115, 4
      %v4118 = vshll.u32 %v4003, 16
      %v4120 = vrot.slane %v4118, 5
      %v4121 = vor.u32 %v4117, %v4120
      %v4122 = vrot.slane %v4121, 4
      %v4124 = vshll.u32 %v4004, 16
      %v4126 = vrot.slane %v4124, 5
      %v4127 = vsel %vm760, %v4122, %v4126
      %v4128 = vshrl.u32 %v4004, 16
      %v4130 = vrot.slane %v4128, 4
      %v4131 = vor.u32 %v4130, %v4126
      %v4132 = vrot.slane %v4131, 4
      %v4134 = vshll.u32 %v4005, 16
      %v4136 = vrot.slane %v4134, 5
      %v4137 = vsel %vm760, %v4132, %v4136
      %v4139 = vshrl.u32 %v4006, 16
      %v4141 = vrot.slane %v4139, 4
      %v4142 = vshll.u32 %v4006, 16
      %v4144 = vrot.slane %v4142, 5
      %v4145 = vor.u32 %v4141, %v4144
      %v4146 = vrot.slane %v4145, 4
      %v4148 = vshll.u32 %v4007, 16
      %v4150 = vrot.slane %v4148, 5
      %v4151 = vsel %vm760, %v4146, %v4150
      %v4152 = vshrl.u32 %v4007, 16
      %v4154 = vrot.slane %v4152, 4
      %v4155 = vor.u32 %v4154, %v4150
      %v4156 = vrot.slane %v4155, 4
      %v4158 = vshll.u32 %v4008, 16
      %v4160 = vrot.slane %v4158, 5
      %v4161 = vsel %vm760, %v4156, %v4160
      %v4163 = vshrl.u32 %v4009, 16
      %v4165 = vrot.slane %v4163, 4
      %v4166 = vshll.u32 %v4009, 16
      %v4168 = vrot.slane %v4166, 5
      %v4169 = vor.u32 %v4165, %v4168
      %v4170 = vrot.slane %v4169, 4
      %v4172 = vshll.u32 %v4010, 16
      %v4174 = vrot.slane %v4172, 5
      %v4175 = vsel %vm760, %v4170, %v4174
      %v4176 = vshrl.u32 %v4010, 16
      %v4178 = vrot.slane %v4176, 4
      %v4179 = vor.u32 %v4178, %v4174
      %v4180 = vrot.slane %v4179, 4
      %v4182 = vshll.u32 %v4011, 16
      %v4184 = vrot.slane %v4182, 5
      %v4185 = vsel %vm760, %v4180, %v4184
      %v4187 = vshrl.u32 %v4012, 16
      %v4189 = vrot.slane %v4187, 4
      %v4190 = vshll.u32 %v4012, 16
      %v4192 = vrot.slane %v4190, 5
      %v4193 = vor.u32 %v4189, %v4192
      %v4194 = vrot.slane %v4193, 4
      %v4196 = vshll.u32 %v4013, 16
      %v4198 = vrot.slane %v4196, 5
      %v4199 = vsel %vm760, %v4194, %v4198
      %v4200 = vshrl.u32 %v4013, 16
      %v4202 = vrot.slane %v4200, 4
      %v4203 = vor.u32 %v4202, %v4198
      %v4204 = vrot.slane %v4203, 4
      %v4206 = vshll.u32 %v4014, 16
      %v4208 = vrot.slane %v4206, 5
      %v4209 = vsel %vm760, %v4204, %v4208
      %v4211 = vshrl.u32 %v4015, 16
      %v4213 = vrot.slane %v4211, 4
      %v4214 = vshll.u32 %v4015, 16
      %v4216 = vrot.slane %v4214, 5
      %v4217 = vor.u32 %v4213, %v4216
      %v4218 = vrot.slane %v4217, 4
      %v4220 = vshll.u32 %v4016, 16
      %v4222 = vrot.slane %v4220, 5
      %v4223 = vsel %vm760, %v4218, %v4222
      %v4224 = vshrl.u32 %v4016, 16
      %v4226 = vrot.slane %v4224, 4
      %v4227 = vor.u32 %v4226, %v4222
      %v4228 = vrot.slane %v4227, 4
      %v4230 = vshll.u32 %v4017, 16
      %v4232 = vrot.slane %v4230, 5
      %v4233 = vsel %vm760, %v4228, %v4232
      %v4235 = vshrl.u32 %v4018, 16
      %v4237 = vrot.slane %v4235, 4
      %v4238 = vshll.u32 %v4018, 16
      %v4240 = vrot.slane %v4238, 5
      %v4241 = vor.u32 %v4237, %v4240
      %v4242 = vrot.slane %v4241, 4
      %v4244 = vshll.u32 %v4019, 16
      %v4246 = vrot.slane %v4244, 5
      %v4247 = vsel %vm760, %v4242, %v4246
      %v4248 = vshrl.u32 %v4019, 16
      %v4250 = vrot.slane %v4248, 4
      %v4251 = vor.u32 %v4250, %v4246
      %v4252 = vrot.slane %v4251, 4
      %v4254 = vshll.u32 %v4020, 16
      %v4256 = vrot.slane %v4254, 5
      %v4257 = vsel %vm760, %v4252, %v4256
      %v4259 = vshrl.u32 %v4021, 16
      %v4261 = vrot.slane %v4259, 4
      %v4262 = vshll.u32 %v4021, 16
      %v4264 = vrot.slane %v4262, 5
      %v4265 = vor.u32 %v4261, %v4264
      %v4266 = vrot.slane %v4265, 4
      %v4268 = vshll.u32 %v4022, 16
      %v4270 = vrot.slane %v4268, 5
      %v4271 = vsel %vm760, %v4266, %v4270
      %v4272 = vshrl.u32 %v4022, 16
      %v4274 = vrot.slane %v4272, 4
      %v4275 = vor.u32 %v4274, %v4270
      %v4276 = vrot.slane %v4275, 4
      %v4278 = vshll.u32 %v4023, 16
      %v4280 = vrot.slane %v4278, 5
      %v4281 = vsel %vm760, %v4276, %v4280
      %v4283 = vshrl.u32 %v4024, 16
      %v4285 = vrot.slane %v4283, 4
      %v4286 = vshll.u32 %v4024, 16
      %v4288 = vrot.slane %v4286, 5
      %v4289 = vor.u32 %v4285, %v4288
      %v4290 = vrot.slane %v4289, 4
      %v4292 = vshll.u32 %v4025, 16
      %v4294 = vrot.slane %v4292, 5
      %v4295 = vsel %vm760, %v4290, %v4294
      %v4296 = vshrl.u32 %v4025, 16
      %v4298 = vrot.slane %v4296, 4
      %v4299 = vor.u32 %v4298, %v4294
      %v4300 = vrot.slane %v4299, 4
      %v4302 = vshll.u32 %v4026, 16
      %v4304 = vrot.slane %v4302, 5
      %v4305 = vsel %vm760, %v4300, %v4304
      %v4307 = vshrl.u32 %v4027, 16
      %v4309 = vrot.slane %v4307, 4
      %v4310 = vshll.u32 %v4027, 16
      %v4312 = vrot.slane %v4310, 5
      %v4313 = vor.u32 %v4309, %v4312
      %v4314 = vrot.slane %v4313, 4
      %v4316 = vshll.u32 %v4028, 16
      %v4318 = vrot.slane %v4316, 5
      %v4319 = vsel %vm760, %v4314, %v4318
      %v4320 = vshrl.u32 %v4028, 16
      %v4322 = vrot.slane %v4320, 4
      %v4323 = vor.u32 %v4322, %v4318
      %v4324 = vrot.slane %v4323, 4
      %v4326 = vshll.u32 %v4029, 16
      %v4328 = vrot.slane %v4326, 5
      %v4329 = vsel %vm760, %v4324, %v4328
      %v4331 = vshrl.u32 %v4030, 16
      %v4333 = vrot.slane %v4331, 4
      %v4334 = vshll.u32 %v4030, 16
      %v4336 = vrot.slane %v4334, 5
      %v4337 = vor.u32 %v4333, %v4336
      %v4338 = vrot.slane %v4337, 4
      %v4340 = vshll.u32 %v4031, 16
      %v4342 = vrot.slane %v4340, 5
      %v4343 = vsel %vm760, %v4338, %v4342
      %v4344 = vshrl.u32 %v4031, 16
      %v4346 = vrot.slane %v4344, 4
      %v4347 = vor.u32 %v4346, %v4342
      %v4348 = vrot.slane %v4347, 4
      %v4350 = vshll.u32 %v4032, 16
      %v4352 = vrot.slane %v4350, 5
      %v4353 = vsel %vm760, %v4348, %v4352
      %v4355 = vshrl.u32 %v4033, 16
      %v4357 = vrot.slane %v4355, 4
      %v4358 = vshll.u32 %v4033, 16
      %v4360 = vrot.slane %v4358, 5
      %v4361 = vor.u32 %v4357, %v4360
      %v4362 = vrot.slane %v4361, 4
      %v4364 = vshll.u32 %v4034, 16
      %v4366 = vrot.slane %v4364, 5
      %v4367 = vsel %vm760, %v4362, %v4366
      %v4368 = vshrl.u32 %v4034, 16
      %v4370 = vrot.slane %v4368, 4
      %v4371 = vor.u32 %v4370, %v4366
      %v4372 = vrot.slane %v4371, 4
      %v4374 = vshll.u32 %v4035, 16
      %v4376 = vrot.slane %v4374, 5
      %v4377 = vsel %vm760, %v4372, %v4376
      %v4379 = vshrl.u32 %v4036, 16
      %v4381 = vrot.slane %v4379, 4
      %v4382 = vshll.u32 %v4036, 16
      %v4384 = vrot.slane %v4382, 5
      %v4385 = vor.u32 %v4381, %v4384
      %v4386 = vrot.slane %v4385, 4
      %v4388 = vshll.u32 %v4037, 16
      %v4390 = vrot.slane %v4388, 5
      %v4391 = vsel %vm760, %v4386, %v4390
      %v4392 = vshrl.u32 %v4037, 16
      %v4394 = vrot.slane %v4392, 4
      %v4395 = vor.u32 %v4394, %v4390
      %v4396 = vrot.slane %v4395, 4
      %v4398 = vshll.u32 %v4038, 16
      %v4400 = vrot.slane %v4398, 5
      %v4401 = vsel %vm760, %v4396, %v4400
      %v4403 = vshrl.u32 %v4039, 16
      %v4405 = vrot.slane %v4403, 4
      %v4406 = vshll.u32 %v4039, 16
      %v4408 = vrot.slane %v4406, 5
      %v4409 = vor.u32 %v4405, %v4408
      %v4410 = vrot.slane %v4409, 4
      %v4412 = vshll.u32 %v4040, 16
      %v4414 = vrot.slane %v4412, 5
      %v4415 = vsel %vm760, %v4410, %v4414
      %v4416 = vshrl.u32 %v4040, 16
      %v4418 = vrot.slane %v4416, 4
      %v4419 = vor.u32 %v4418, %v4414
      %v4420 = vrot.slane %v4419, 4
      %v4422 = vshll.u32 %v4041, 16
      %v4424 = vrot.slane %v4422, 5
      %v4425 = vsel %vm760, %v4420, %v4424
      %s4426 = scalar_lea.vmem %s240, 448
      %v4427 = vld [vmem:[%s4426] sm:$0xf]
      %v4428 = vld [vmem:[%s4426 + $0x4] sm:$0xf]
      %v4429 = vld [vmem:[%s4426 + $0x8] sm:$0xf]
      %v4430 = vld [vmem:[%s4426 + $0xc] sm:$0xf]
      %v4431 = vld [vmem:[%s4426 + $0x10] sm:$0xf]
      %v4432 = vld [vmem:[%s4426 + $0x14] sm:$0xf]
      %v4433 = vld [vmem:[%s4426 + $0x18] sm:$0xf]
      %v4434 = vld [vmem:[%s4426 + $0x1c] sm:$0xf]
      %v4435 = vld [vmem:[%s4426 + $0x20] sm:$0xf]
      %v4436 = vld [vmem:[%s4426 + $0x24] sm:$0xf]
      %v4437 = vld [vmem:[%s4426 + $0x28] sm:$0xf]
      %v4438 = vld [vmem:[%s4426 + $0x2c] sm:$0xf]
      %v4439 = vld [vmem:[%s4426 + $0x30] sm:$0xf]
      %v4440 = vld [vmem:[%s4426 + $0x34] sm:$0xf]
      %v4441 = vld [vmem:[%s4426 + $0x38] sm:$0xf]
      %v4442 = vld [vmem:[%s4426 + $0x3c] sm:$0xf]
      %v4443 = vunpack.c.l.b16 %v4055
      %v4444 = vunpack.c.l.b16 %v4065
      %v4445 = vunpack.c.l.b16 %v4079
      %v4446 = vunpack.c.l.b16 %v4089
      %v4447 = vunpack.c.l.b16 %v4103
      %v4448 = vunpack.c.l.b16 %v4113
      %v4449 = vunpack.c.l.b16 %v4127
      %v4450 = vunpack.c.l.b16 %v4137
      %v4451 = vunpack.c.l.b16 %v4151
      %v4452 = vunpack.c.l.b16 %v4161
      %v4453 = vunpack.c.l.b16 %v4175
      %v4454 = vunpack.c.l.b16 %v4185
      %v4455 = vunpack.c.l.b16 %v4199
      %v4456 = vunpack.c.l.b16 %v4209
      %v4457 = vunpack.c.l.b16 %v4223
      %v4458 = vunpack.c.l.b16 %v4233
      %v4459 = vunpack.c.l.b16 %v4247
      %v4460 = vunpack.c.l.b16 %v4257
      %v4461 = vunpack.c.l.b16 %v4271
      %v4462 = vunpack.c.l.b16 %v4281
      %v4463 = vunpack.c.l.b16 %v4295
      %v4464 = vunpack.c.l.b16 %v4305
      %v4465 = vunpack.c.l.b16 %v4319
      %v4466 = vunpack.c.l.b16 %v4329
      %v4467 = vunpack.c.l.b16 %v4343
      %v4468 = vunpack.c.l.b16 %v4353
      %v4469 = vunpack.c.l.b16 %v4367
      %v4470 = vunpack.c.l.b16 %v4377
      %v4471 = vunpack.c.l.b16 %v4391
      %v4472 = vunpack.c.l.b16 %v4401
      %v4473 = vunpack.c.l.b16 %v4415
      %v4474 = vunpack.c.l.b16 %v4425
      %v4475 = vpack.c.b16 %v4444, %v4443
      %v4476 = vpack.c.b16 %v4446, %v4445
      %v4477 = vpack.c.b16 %v4448, %v4447
      %v4478 = vpack.c.b16 %v4450, %v4449
      %v4479 = vpack.c.b16 %v4452, %v4451
      %v4480 = vpack.c.b16 %v4454, %v4453
      %v4481 = vpack.c.b16 %v4456, %v4455
      %v4482 = vpack.c.b16 %v4458, %v4457
      %v4483 = vpack.c.b16 %v4460, %v4459
      %v4484 = vpack.c.b16 %v4462, %v4461
      %v4485 = vpack.c.b16 %v4464, %v4463
      %v4486 = vpack.c.b16 %v4466, %v4465
      %v4487 = vpack.c.b16 %v4468, %v4467
      %v4488 = vpack.c.b16 %v4470, %v4469
      %v4489 = vpack.c.b16 %v4472, %v4471
      %v4490 = vpack.c.b16 %v4474, %v4473
      %v4523 = vunpack.c.l.b16 %v4427
      %v4524 = vunpack.c.l.b16 %v4428
      %v4525 = vunpack.c.l.b16 %v4429
      %v4526 = vunpack.c.l.b16 %v4430
      %v4527 = vunpack.c.l.b16 %v4431
      %v4528 = vunpack.c.l.b16 %v4432
      %v4529 = vunpack.c.l.b16 %v4433
      %v4530 = vunpack.c.l.b16 %v4434
      %v4531 = vunpack.c.l.b16 %v4435
      %v4532 = vunpack.c.l.b16 %v4436
      %v4533 = vunpack.c.l.b16 %v4437
      %v4534 = vunpack.c.l.b16 %v4438
      %v4535 = vunpack.c.l.b16 %v4439
      %v4536 = vunpack.c.l.b16 %v4440
      %v4537 = vunpack.c.l.b16 %v4441
      %v4538 = vunpack.c.l.b16 %v4442
      %v4539 = vpack.c.b16 %v4524, %v4523
      %v4540 = vpack.c.b16 %v4526, %v4525
      %v4541 = vpack.c.b16 %v4528, %v4527
      %v4542 = vpack.c.b16 %v4530, %v4529
      %v4543 = vpack.c.b16 %v4532, %v4531
      %v4544 = vpack.c.b16 %v4534, %v4533
      %v4545 = vpack.c.b16 %v4536, %v4535
      %v4546 = vpack.c.b16 %v4538, %v4537
      %4555 = vmatprep.subr.bf16.mxu0 0
      %4556 = vmatpush1.bf16.msra.mxu0 %v4539
      %4557 = vmatprep.subr.bf16.mxu0 0
      %4558 = vmatpush1.bf16.msra.mxu0 %v4540
      %4559 = vmatprep.subr.bf16.mxu0 0
      %4560 = vmatpush1.bf16.msra.mxu0 %v4541
      %4561 = vmatprep.subr.bf16.mxu0 0
      %4562 = vmatpush1.bf16.msra.mxu0 %v4542
      %4563 = vmatprep.subr.bf16.mxu0 0
      %4564 = vmatpush1.bf16.msra.mxu0 %v4543
      %4565 = vmatprep.subr.bf16.mxu0 0
      %4566 = vmatpush1.bf16.msra.mxu0 %v4544
      %4567 = vmatprep.subr.bf16.mxu0 0
      %4568 = vmatpush1.bf16.msra.mxu0 %v4545
      %4569 = vmatprep.subr.bf16.mxu0 0
      %4570 = vmatpush1.bf16.msra.mxu0 %v4546
      %4571 = vmatprep.subr.bf16.mxu0 0
      %4572 = vmatpush1.bf16.msra.mxu0 0
      %4573 = vmatprep.subr.bf16.mxu0 0
      %4574 = vmatpush1.bf16.msra.mxu0 0
      %4575 = vmatprep.subr.bf16.mxu0 0
      %4576 = vmatpush1.bf16.msra.mxu0 0
      %4577 = vmatprep.subr.bf16.mxu0 0
      %4578 = vmatpush1.bf16.msra.mxu0 0
      %4579 = vmatprep.subr.bf16.mxu0 0
      %4580 = vmatpush1.bf16.msra.mxu0 0
      %4581 = vmatprep.subr.bf16.mxu0 0
      %4582 = vmatpush1.bf16.msra.mxu0 0
      %4583 = vmatprep.subr.bf16.mxu0 0
      %4584 = vmatpush1.bf16.msra.mxu0 0
      %4585 = vmatprep.subr.bf16.mxu0 0
      %4586 = vmatpush1.bf16.msra.mxu0 0
      %4587 = vmatprep.mubr.bf16.mxu0 0
      %4588 = vmatmul.mubr.bf16.gmra.mrb[0].mxu0 %v4475
      %v4589 = vpop.f32.mrb[0].mxu0
      %v4590 = vadd.f32 0.0, %v4589
      %v4591 = vpop.f32.mrb[0].mxu0
      %v4592 = vpop.f32.mrb[0].mxu0
      %v4593 = vadd.f32 0.0, %v4592
      %v4594 = vpop.f32.mrb[0].mxu0
      %4595 = vmatprep.mubr.bf16.mxu0 0
      %4596 = vmatmul.mubr.bf16.gmra.mrb[0].mxu0 %v4476
      %v4597 = vpop.f32.mrb[0].mxu0
      %v4598 = vadd.f32 0.0, %v4597
      %v4599 = vpop.f32.mrb[0].mxu0
      %v4600 = vpop.f32.mrb[0].mxu0
      %v4601 = vadd.f32 0.0, %v4600
      %v4602 = vpop.f32.mrb[0].mxu0
      %4603 = vmatprep.mubr.bf16.mxu0 0
      %4604 = vmatmul.mubr.bf16.gmra.mrb[0].mxu0 %v4477
      %v4605 = vpop.f32.mrb[0].mxu0
      %v4606 = vadd.f32 0.0, %v4605
      %v4607 = vpop.f32.mrb[0].mxu0
      %v4608 = vpop.f32.mrb[0].mxu0
      %v4609 = vadd.f32 0.0, %v4608
      %v4610 = vpop.f32.mrb[0].mxu0
      %4611 = vmatprep.mubr.bf16.mxu0 0
      %4612 = vmatmul.mubr.bf16.gmra.mrb[0].mxu0 %v4478
      %v4613 = vpop.f32.mrb[0].mxu0
      %v4614 = vadd.f32 0.0, %v4613
      %v4615 = vpop.f32.mrb[0].mxu0
      %v4616 = vpop.f32.mrb[0].mxu0
      %v4617 = vadd.f32 0.0, %v4616
      %v4618 = vpop.f32.mrb[0].mxu0
      %4619 = vmatprep.mubr.bf16.mxu0 0
      %4620 = vmatmul.mubr.bf16.gmra.mrb[0].mxu0 %v4479
      %v4621 = vpop.f32.mrb[0].mxu0
      %v4622 = vadd.f32 0.0, %v4621
      %v4623 = vpop.f32.mrb[0].mxu0
      %v4624 = vpop.f32.mrb[0].mxu0
      %v4625 = vadd.f32 0.0, %v4624
      %v4626 = vpop.f32.mrb[0].mxu0
      %4627 = vmatprep.mubr.bf16.mxu0 0
      %4628 = vmatmul.mubr.bf16.gmra.mrb[0].mxu0 %v4480
      %v4629 = vpop.f32.mrb[0].mxu0
      %v4630 = vadd.f32 0.0, %v4629
      %v4631 = vpop.f32.mrb[0].mxu0
      %v4632 = vpop.f32.mrb[0].mxu0
      %v4633 = vadd.f32 0.0, %v4632
      %v4634 = vpop.f32.mrb[0].mxu0
      %4635 = vmatprep.mubr.bf16.mxu0 0
      %4636 = vmatmul.mubr.bf16.gmra.mrb[0].mxu0 %v4481
      %v4637 = vpop.f32.mrb[0].mxu0
      %v4638 = vadd.f32 0.0, %v4637
      %v4639 = vpop.f32.mrb[0].mxu0
      %v4640 = vpop.f32.mrb[0].mxu0
      %v4641 = vadd.f32 0.0, %v4640
      %v4642 = vpop.f32.mrb[0].mxu0
      %4643 = vmatprep.mubr.bf16.mxu0 0
      %4644 = vmatmul.mubr.bf16.gmra.mrb[0].mxu0 %v4482
      %v4645 = vpop.f32.mrb[0].mxu0
      %v4646 = vadd.f32 0.0, %v4645
      %v4647 = vpop.f32.mrb[0].mxu0
      %v4648 = vpop.f32.mrb[0].mxu0
      %v4649 = vadd.f32 0.0, %v4648
      %v4650 = vpop.f32.mrb[0].mxu0
      %4651 = vmatprep.mubr.bf16.mxu0 0
      %4652 = vmatmul.mubr.bf16.gmra.mrb[0].mxu0 %v4483
      %v4653 = vpop.f32.mrb[0].mxu0
      %v4654 = vadd.f32 0.0, %v4653
      %v4655 = vpop.f32.mrb[0].mxu0
      %v4656 = vpop.f32.mrb[0].mxu0
      %v4657 = vadd.f32 0.0, %v4656
      %v4658 = vpop.f32.mrb[0].mxu0
      %4659 = vmatprep.mubr.bf16.mxu0 0
      %4660 = vmatmul.mubr.bf16.gmra.mrb[0].mxu0 %v4484
      %v4661 = vpop.f32.mrb[0].mxu0
      %v4662 = vadd.f32 0.0, %v4661
      %v4663 = vpop.f32.mrb[0].mxu0
      %v4664 = vpop.f32.mrb[0].mxu0
      %v4665 = vadd.f32 0.0, %v4664
      %v4666 = vpop.f32.mrb[0].mxu0
      %4667 = vmatprep.mubr.bf16.mxu0 0
      %4668 = vmatmul.mubr.bf16.gmra.mrb[0].mxu0 %v4485
      %v4669 = vpop.f32.mrb[0].mxu0
      %v4670 = vadd.f32 0.0, %v4669
      %v4671 = vpop.f32.mrb[0].mxu0
      %v4672 = vpop.f32.mrb[0].mxu0
      %v4673 = vadd.f32 0.0, %v4672
      %v4674 = vpop.f32.mrb[0].mxu0
      %4675 = vmatprep.mubr.bf16.mxu0 0
      %4676 = vmatmul.mubr.bf16.gmra.mrb[0].mxu0 %v4486
      %v4677 = vpop.f32.mrb[0].mxu0
      %v4678 = vadd.f32 0.0, %v4677
      %v4679 = vpop.f32.mrb[0].mxu0
      %v4680 = vpop.f32.mrb[0].mxu0
      %v4681 = vadd.f32 0.0, %v4680
      %v4682 = vpop.f32.mrb[0].mxu0
      %4683 = vmatprep.mubr.bf16.mxu0 0
      %4684 = vmatmul.mubr.bf16.gmra.mrb[0].mxu0 %v4487
      %v4685 = vpop.f32.mrb[0].mxu0
      %v4686 = vadd.f32 0.0, %v4685
      %v4687 = vpop.f32.mrb[0].mxu0
      %v4688 = vpop.f32.mrb[0].mxu0
      %v4689 = vadd.f32 0.0, %v4688
      %v4690 = vpop.f32.mrb[0].mxu0
      %4691 = vmatprep.mubr.bf16.mxu0 0
      %4692 = vmatmul.mubr.bf16.gmra.mrb[0].mxu0 %v4488
      %v4693 = vpop.f32.mrb[0].mxu0
      %v4694 = vadd.f32 0.0, %v4693
      %v4695 = vpop.f32.mrb[0].mxu0
      %v4696 = vpop.f32.mrb[0].mxu0
      %v4697 = vadd.f32 0.0, %v4696
      %v4698 = vpop.f32.mrb[0].mxu0
      %4699 = vmatprep.mubr.bf16.mxu0 0
      %4700 = vmatmul.mubr.bf16.gmra.mrb[0].mxu0 %v4489
      %v4701 = vpop.f32.mrb[0].mxu0
      %v4702 = vadd.f32 0.0, %v4701
      %v4703 = vpop.f32.mrb[0].mxu0
      %v4704 = vpop.f32.mrb[0].mxu0
      %v4705 = vadd.f32 0.0, %v4704
      %v4706 = vpop.f32.mrb[0].mxu0
      %4707 = vmatprep.mubr.bf16.mxu0 0
      %4708 = vmatmul.mubr.bf16.gmra.mrb[0].mxu0 %v4490
      %v4709 = vpop.f32.mrb[0].mxu0
      %v4710 = vadd.f32 0.0, %v4709
      %v4711 = vpop.f32.mrb[0].mxu0
      %v4712 = vpop.f32.mrb[0].mxu0
      %v4713 = vadd.f32 0.0, %v4712
      %v4714 = vpop.f32.mrb[0].mxu0
      %4715 = vdwg.mxu0
      %v4716 = vadd.f32 %v3962, %v4590
      %v4717 = vadd.f32 %v3963, %v4593
      %v4718 = vadd.f32 %v3964, %v4598
      %v4719 = vadd.f32 %v3965, %v4601
      %v4720 = vadd.f32 %v3966, %v4606
      %v4721 = vadd.f32 %v3967, %v4609
      %v4722 = vadd.f32 %v3968, %v4614
      %v4723 = vadd.f32 %v3969, %v4617
      %v4724 = vadd.f32 %v3970, %v4622
      %v4725 = vadd.f32 %v3971, %v4625
      %v4726 = vadd.f32 %v3972, %v4630
      %v4727 = vadd.f32 %v3973, %v4633
      %v4728 = vadd.f32 %v3974, %v4638
      %v4729 = vadd.f32 %v3975, %v4641
      %v4730 = vadd.f32 %v3976, %v4646
      %v4731 = vadd.f32 %v3977, %v4649
      %v4732 = vadd.f32 %v3978, %v4654
      %v4733 = vadd.f32 %v3979, %v4657
      %v4734 = vadd.f32 %v3980, %v4662
      %v4735 = vadd.f32 %v3981, %v4665
      %v4736 = vadd.f32 %v3982, %v4670
      %v4737 = vadd.f32 %v3983, %v4673
      %v4738 = vadd.f32 %v3984, %v4678
      %v4739 = vadd.f32 %v3985, %v4681
      %v4740 = vadd.f32 %v3986, %v4686
      %v4741 = vadd.f32 %v3987, %v4689
      %v4742 = vadd.f32 %v3988, %v4694
      %v4743 = vadd.f32 %v3989, %v4697
      %v4744 = vadd.f32 %v3990, %v4702
      %v4745 = vadd.f32 %v3991, %v4705
      %v4746 = vadd.f32 %v3992, %v4710
      %v4747 = vadd.f32 %v3993, %v4713
      %v4748 = vld [vmem:[%s3607] sm:$0xe]
      %v4749 = vld [vmem:[%s3607 + $0xc] sm:$0xe]
      %v4750 = vld [vmem:[%s3607 + $0x18] sm:$0xe]
      %v4751 = vld [vmem:[%s3607 + $0x24] sm:$0xe]
      %v4752 = vld [vmem:[%s3607 + $0x30] sm:$0xe]
      %v4753 = vld [vmem:[%s3607 + $0x3c] sm:$0xe]
      %v4754 = vld [vmem:[%s3607 + $0x48] sm:$0xe]
      %v4755 = vld [vmem:[%s3607 + $0x54] sm:$0xe]
      %v4756 = vld [vmem:[%s3607 + $0x60] sm:$0xe]
      %v4757 = vld [vmem:[%s3607 + $0x6c] sm:$0xe]
      %v4758 = vld [vmem:[%s3607 + $0x78] sm:$0xe]
      %v4759 = vld [vmem:[%s3607 + $0x84] sm:$0xe]
      %v4760 = vld [vmem:[%s3607 + $0x90] sm:$0xe]
      %v4761 = vld [vmem:[%s3607 + $0x9c] sm:$0xe]
      %v4762 = vld [vmem:[%s3607 + $0xa8] sm:$0xe]
      %v4763 = vld [vmem:[%s3607 + $0xb4] sm:$0xe]
      %v4812 = vrot.slane %v4748, 5
      %v4813 = vrot.slane %v4812, 4
      %v4814 = vrot.slane %v3995, 5
      %v4815 = vsel %vm1533, %v4813, %v4814
      %v4816 = vrot.slane %v4814, 4
      %v4817 = vrot.slane %v3996, 5
      %v4818 = vsel %vm1533, %v4816, %v4817
      %v4819 = vrot.slane %v4749, 5
      %v4820 = vrot.slane %v4819, 4
      %v4821 = vrot.slane %v3998, 5
      %v4822 = vsel %vm1533, %v4820, %v4821
      %v4823 = vrot.slane %v4821, 4
      %v4824 = vrot.slane %v3999, 5
      %v4825 = vsel %vm1533, %v4823, %v4824
      %v4826 = vrot.slane %v4750, 5
      %v4827 = vrot.slane %v4826, 4
      %v4828 = vrot.slane %v4001, 5
      %v4829 = vsel %vm1533, %v4827, %v4828
      %v4830 = vrot.slane %v4828, 4
      %v4831 = vrot.slane %v4002, 5
      %v4832 = vsel %vm1533, %v4830, %v4831
      %v4833 = vrot.slane %v4751, 5
      %v4834 = vrot.slane %v4833, 4
      %v4835 = vrot.slane %v4004, 5
      %v4836 = vsel %vm1533, %v4834, %v4835
      %v4837 = vrot.slane %v4835, 4
      %v4838 = vrot.slane %v4005, 5
      %v4839 = vsel %vm1533, %v4837, %v4838
      %v4840 = vrot.slane %v4752, 5
      %v4841 = vrot.slane %v4840, 4
      %v4842 = vrot.slane %v4007, 5
      %v4843 = vsel %vm1533, %v4841, %v4842
      %v4844 = vrot.slane %v4842, 4
      %v4845 = vrot.slane %v4008, 5
      %v4846 = vsel %vm1533, %v4844, %v4845
      %v4847 = vrot.slane %v4753, 5
      %v4848 = vrot.slane %v4847, 4
      %v4849 = vrot.slane %v4010, 5
      %v4850 = vsel %vm1533, %v4848, %v4849
      %v4851 = vrot.slane %v4849, 4
      %v4852 = vrot.slane %v4011, 5
      %v4853 = vsel %vm1533, %v4851, %v4852
      %v4854 = vrot.slane %v4754, 5
      %v4855 = vrot.slane %v4854, 4
      %v4856 = vrot.slane %v4013, 5
      %v4857 = vsel %vm1533, %v4855, %v4856
      %v4858 = vrot.slane %v4856, 4
      %v4859 = vrot.slane %v4014, 5
      %v4860 = vsel %vm1533, %v4858, %v4859
      %v4861 = vrot.slane %v4755, 5
      %v4862 = vrot.slane %v4861, 4
      %v4863 = vrot.slane %v4016, 5
      %v4864 = vsel %vm1533, %v4862, %v4863
      %v4865 = vrot.slane %v4863, 4
      %v4866 = vrot.slane %v4017, 5
      %v4867 = vsel %vm1533, %v4865, %v4866
      %v4868 = vrot.slane %v4756, 5
      %v4869 = vrot.slane %v4868, 4
      %v4870 = vrot.slane %v4019, 5
      %v4871 = vsel %vm1533, %v4869, %v4870
      %v4872 = vrot.slane %v4870, 4
      %v4873 = vrot.slane %v4020, 5
      %v4874 = vsel %vm1533, %v4872, %v4873
      %v4875 = vrot.slane %v4757, 5
      %v4876 = vrot.slane %v4875, 4
      %v4877 = vrot.slane %v4022, 5
      %v4878 = vsel %vm1533, %v4876, %v4877
      %v4879 = vrot.slane %v4877, 4
      %v4880 = vrot.slane %v4023, 5
      %v4881 = vsel %vm1533, %v4879, %v4880
      %v4882 = vrot.slane %v4758, 5
      %v4883 = vrot.slane %v4882, 4
      %v4884 = vrot.slane %v4025, 5
      %v4885 = vsel %vm1533, %v4883, %v4884
      %v4886 = vrot.slane %v4884, 4
      %v4887 = vrot.slane %v4026, 5
      %v4888 = vsel %vm1533, %v4886, %v4887
      %v4889 = vrot.slane %v4759, 5
      %v4890 = vrot.slane %v4889, 4
      %v4891 = vrot.slane %v4028, 5
      %v4892 = vsel %vm1533, %v4890, %v4891
      %v4893 = vrot.slane %v4891, 4
      %v4894 = vrot.slane %v4029, 5
      %v4895 = vsel %vm1533, %v4893, %v4894
      %v4896 = vrot.slane %v4760, 5
      %v4897 = vrot.slane %v4896, 4
      %v4898 = vrot.slane %v4031, 5
      %v4899 = vsel %vm1533, %v4897, %v4898
      %v4900 = vrot.slane %v4898, 4
      %v4901 = vrot.slane %v4032, 5
      %v4902 = vsel %vm1533, %v4900, %v4901
      %v4903 = vrot.slane %v4761, 5
      %v4904 = vrot.slane %v4903, 4
      %v4905 = vrot.slane %v4034, 5
      %v4906 = vsel %vm1533, %v4904, %v4905
      %v4907 = vrot.slane %v4905, 4
      %v4908 = vrot.slane %v4035, 5
      %v4909 = vsel %vm1533, %v4907, %v4908
      %v4910 = vrot.slane %v4762, 5
      %v4911 = vrot.slane %v4910, 4
      %v4912 = vrot.slane %v4037, 5
      %v4913 = vsel %vm1533, %v4911, %v4912
      %v4914 = vrot.slane %v4912, 4
      %v4915 = vrot.slane %v4038, 5
      %v4916 = vsel %vm1533, %v4914, %v4915
      %v4917 = vrot.slane %v4763, 5
      %v4918 = vrot.slane %v4917, 4
      %v4919 = vrot.slane %v4040, 5
      %v4920 = vsel %vm1533, %v4918, %v4919
      %v4921 = vrot.slane %v4919, 4
      %v4922 = vrot.slane %v4041, 5
      %v4923 = vsel %vm1533, %v4921, %v4922
      %s4924 = scalar_lea.vmem %s240, 512
      %v4925 = vld [vmem:[%s4924] sm:$0xf]
      %v4926 = vld [vmem:[%s4924 + $0x4] sm:$0xf]
      %v4927 = vld [vmem:[%s4924 + $0x8] sm:$0xf]
      %v4928 = vld [vmem:[%s4924 + $0xc] sm:$0xf]
      %v4929 = vld [vmem:[%s4924 + $0x10] sm:$0xf]
      %v4930 = vld [vmem:[%s4924 + $0x14] sm:$0xf]
      %v4931 = vld [vmem:[%s4924 + $0x18] sm:$0xf]
      %v4932 = vld [vmem:[%s4924 + $0x1c] sm:$0xf]
      %v4933 = vld [vmem:[%s4924 + $0x20] sm:$0xf]
      %v4934 = vld [vmem:[%s4924 + $0x24] sm:$0xf]
      %v4935 = vld [vmem:[%s4924 + $0x28] sm:$0xf]
      %v4936 = vld [vmem:[%s4924 + $0x2c] sm:$0xf]
      %v4937 = vld [vmem:[%s4924 + $0x30] sm:$0xf]
      %v4938 = vld [vmem:[%s4924 + $0x34] sm:$0xf]
      %v4939 = vld [vmem:[%s4924 + $0x38] sm:$0xf]
      %v4940 = vld [vmem:[%s4924 + $0x3c] sm:$0xf]
      %v4941 = vunpack.c.l.b16 %v4815
      %v4942 = vunpack.c.l.b16 %v4818
      %v4943 = vunpack.c.l.b16 %v4822
      %v4944 = vunpack.c.l.b16 %v4825
      %v4945 = vunpack.c.l.b16 %v4829
      %v4946 = vunpack.c.l.b16 %v4832
      %v4947 = vunpack.c.l.b16 %v4836
      %v4948 = vunpack.c.l.b16 %v4839
      %v4949 = vunpack.c.l.b16 %v4843
      %v4950 = vunpack.c.l.b16 %v4846
      %v4951 = vunpack.c.l.b16 %v4850
      %v4952 = vunpack.c.l.b16 %v4853
      %v4953 = vunpack.c.l.b16 %v4857
      %v4954 = vunpack.c.l.b16 %v4860
      %v4955 = vunpack.c.l.b16 %v4864
      %v4956 = vunpack.c.l.b16 %v4867
      %v4957 = vunpack.c.l.b16 %v4871
      %v4958 = vunpack.c.l.b16 %v4874
      %v4959 = vunpack.c.l.b16 %v4878
      %v4960 = vunpack.c.l.b16 %v4881
      %v4961 = vunpack.c.l.b16 %v4885
      %v4962 = vunpack.c.l.b16 %v4888
      %v4963 = vunpack.c.l.b16 %v4892
      %v4964 = vunpack.c.l.b16 %v4895
      %v4965 = vunpack.c.l.b16 %v4899
      %v4966 = vunpack.c.l.b16 %v4902
      %v4967 = vunpack.c.l.b16 %v4906
      %v4968 = vunpack.c.l.b16 %v4909
      %v4969 = vunpack.c.l.b16 %v4913
      %v4970 = vunpack.c.l.b16 %v4916
      %v4971 = vunpack.c.l.b16 %v4920
      %v4972 = vunpack.c.l.b16 %v4923
      %v4973 = vpack.c.b16 %v4942, %v4941
      %v4974 = vpack.c.b16 %v4944, %v4943
      %v4975 = vpack.c.b16 %v4946, %v4945
      %v4976 = vpack.c.b16 %v4948, %v4947
      %v4977 = vpack.c.b16 %v4950, %v4949
      %v4978 = vpack.c.b16 %v4952, %v4951
      %v4979 = vpack.c.b16 %v4954, %v4953
      %v4980 = vpack.c.b16 %v4956, %v4955
      %v4981 = vpack.c.b16 %v4958, %v4957
      %v4982 = vpack.c.b16 %v4960, %v4959
      %v4983 = vpack.c.b16 %v4962, %v4961
      %v4984 = vpack.c.b16 %v4964, %v4963
      %v4985 = vpack.c.b16 %v4966, %v4965
      %v4986 = vpack.c.b16 %v4968, %v4967
      %v4987 = vpack.c.b16 %v4970, %v4969
      %v4988 = vpack.c.b16 %v4972, %v4971
      %v5021 = vunpack.c.l.b16 %v4925
      %v5022 = vunpack.c.l.b16 %v4926
      %v5023 = vunpack.c.l.b16 %v4927
      %v5024 = vunpack.c.l.b16 %v4928
      %v5025 = vunpack.c.l.b16 %v4929
      %v5026 = vunpack.c.l.b16 %v4930
      %v5027 = vunpack.c.l.b16 %v4931
      %v5028 = vunpack.c.l.b16 %v4932
      %v5029 = vunpack.c.l.b16 %v4933
      %v5030 = vunpack.c.l.b16 %v4934
      %v5031 = vunpack.c.l.b16 %v4935
      %v5032 = vunpack.c.l.b16 %v4936
      %v5033 = vunpack.c.l.b16 %v4937
      %v5034 = vunpack.c.l.b16 %v4938
      %v5035 = vunpack.c.l.b16 %v4939
      %v5036 = vunpack.c.l.b16 %v4940
      %v5037 = vpack.c.b16 %v5022, %v5021
      %v5038 = vpack.c.b16 %v5024, %v5023
      %v5039 = vpack.c.b16 %v5026, %v5025
      %v5040 = vpack.c.b16 %v5028, %v5027
      %v5041 = vpack.c.b16 %v5030, %v5029
      %v5042 = vpack.c.b16 %v5032, %v5031
      %v5043 = vpack.c.b16 %v5034, %v5033
      %v5044 = vpack.c.b16 %v5036, %v5035
      %5053 = vmatprep.subr.bf16.mxu0 0
      %5054 = vmatpush1.bf16.msra.mxu0 %v5037
      %5055 = vmatprep.subr.bf16.mxu0 0
      %5056 = vmatpush1.bf16.msra.mxu0 %v5038
      %5057 = vmatprep.subr.bf16.mxu0 0
      %5058 = vmatpush1.bf16.msra.mxu0 %v5039
      %5059 = vmatprep.subr.bf16.mxu0 0
      %5060 = vmatpush1.bf16.msra.mxu0 %v5040
      %5061 = vmatprep.subr.bf16.mxu0 0
      %5062 = vmatpush1.bf16.msra.mxu0 %v5041
      %5063 = vmatprep.subr.bf16.mxu0 0
      %5064 = vmatpush1.bf16.msra.mxu0 %v5042
      %5065 = vmatprep.subr.bf16.mxu0 0
      %5066 = vmatpush1.bf16.msra.mxu0 %v5043
      %5067 = vmatprep.subr.bf16.mxu0 0
      %5068 = vmatpush1.bf16.msra.mxu0 %v5044
      %5069 = vmatprep.subr.bf16.mxu0 0
      %5070 = vmatpush1.bf16.msra.mxu0 0
      %5071 = vmatprep.subr.bf16.mxu0 0
      %5072 = vmatpush1.bf16.msra.mxu0 0
      %5073 = vmatprep.subr.bf16.mxu0 0
      %5074 = vmatpush1.bf16.msra.mxu0 0
      %5075 = vmatprep.subr.bf16.mxu0 0
      %5076 = vmatpush1.bf16.msra.mxu0 0
      %5077 = vmatprep.subr.bf16.mxu0 0
      %5078 = vmatpush1.bf16.msra.mxu0 0
      %5079 = vmatprep.subr.bf16.mxu0 0
      %5080 = vmatpush1.bf16.msra.mxu0 0
      %5081 = vmatprep.subr.bf16.mxu0 0
      %5082 = vmatpush1.bf16.msra.mxu0 0
      %5083 = vmatprep.subr.bf16.mxu0 0
      %5084 = vmatpush1.bf16.msra.mxu0 0
      %5085 = vmatprep.mubr.bf16.mxu0 0
      %5086 = vmatmul.mubr.bf16.gmra.mrb[0].mxu0 %v4973
      %v5087 = vpop.f32.mrb[0].mxu0
      %v5088 = vadd.f32 0.0, %v5087
      %v5089 = vpop.f32.mrb[0].mxu0
      %v5090 = vpop.f32.mrb[0].mxu0
      %v5091 = vadd.f32 0.0, %v5090
      %v5092 = vpop.f32.mrb[0].mxu0
      %5093 = vmatprep.mubr.bf16.mxu0 0
      %5094 = vmatmul.mubr.bf16.gmra.mrb[0].mxu0 %v4974
      %v5095 = vpop.f32.mrb[0].mxu0
      %v5096 = vadd.f32 0.0, %v5095
      %v5097 = vpop.f32.mrb[0].mxu0
      %v5098 = vpop.f32.mrb[0].mxu0
      %v5099 = vadd.f32 0.0, %v5098
      %v5100 = vpop.f32.mrb[0].mxu0
      %5101 = vmatprep.mubr.bf16.mxu0 0
      %5102 = vmatmul.mubr.bf16.gmra.mrb[0].mxu0 %v4975
      %v5103 = vpop.f32.mrb[0].mxu0
      %v5104 = vadd.f32 0.0, %v5103
      %v5105 = vpop.f32.mrb[0].mxu0
      %v5106 = vpop.f32.mrb[0].mxu0
      %v5107 = vadd.f32 0.0, %v5106
      %v5108 = vpop.f32.mrb[0].mxu0
      %5109 = vmatprep.mubr.bf16.mxu0 0
      %5110 = vmatmul.mubr.bf16.gmra.mrb[0].mxu0 %v4976
      %v5111 = vpop.f32.mrb[0].mxu0
      %v5112 = vadd.f32 0.0, %v5111
      %v5113 = vpop.f32.mrb[0].mxu0
      %v5114 = vpop.f32.mrb[0].mxu0
      %v5115 = vadd.f32 0.0, %v5114
      %v5116 = vpop.f32.mrb[0].mxu0
      %5117 = vmatprep.mubr.bf16.mxu0 0
      %5118 = vmatmul.mubr.bf16.gmra.mrb[0].mxu0 %v4977
      %v5119 = vpop.f32.mrb[0].mxu0
      %v5120 = vadd.f32 0.0, %v5119
      %v5121 = vpop.f32.mrb[0].mxu0
      %v5122 = vpop.f32.mrb[0].mxu0
      %v5123 = vadd.f32 0.0, %v5122
      %v5124 = vpop.f32.mrb[0].mxu0
      %5125 = vmatprep.mubr.bf16.mxu0 0
      %5126 = vmatmul.mubr.bf16.gmra.mrb[0].mxu0 %v4978
      %v5127 = vpop.f32.mrb[0].mxu0
      %v5128 = vadd.f32 0.0, %v5127
      %v5129 = vpop.f32.mrb[0].mxu0
      %v5130 = vpop.f32.mrb[0].mxu0
      %v5131 = vadd.f32 0.0, %v5130
      %v5132 = vpop.f32.mrb[0].mxu0
      %5133 = vmatprep.mubr.bf16.mxu0 0
      %5134 = vmatmul.mubr.bf16.gmra.mrb[0].mxu0 %v4979
      %v5135 = vpop.f32.mrb[0].mxu0
      %v5136 = vadd.f32 0.0, %v5135
      %v5137 = vpop.f32.mrb[0].mxu0
      %v5138 = vpop.f32.mrb[0].mxu0
      %v5139 = vadd.f32 0.0, %v5138
      %v5140 = vpop.f32.mrb[0].mxu0
      %5141 = vmatprep.mubr.bf16.mxu0 0
      %5142 = vmatmul.mubr.bf16.gmra.mrb[0].mxu0 %v4980
      %v5143 = vpop.f32.mrb[0].mxu0
      %v5144 = vadd.f32 0.0, %v5143
      %v5145 = vpop.f32.mrb[0].mxu0
      %v5146 = vpop.f32.mrb[0].mxu0
      %v5147 = vadd.f32 0.0, %v5146
      %v5148 = vpop.f32.mrb[0].mxu0
      %5149 = vmatprep.mubr.bf16.mxu0 0
      %5150 = vmatmul.mubr.bf16.gmra.mrb[0].mxu0 %v4981
      %v5151 = vpop.f32.mrb[0].mxu0
      %v5152 = vadd.f32 0.0, %v5151
      %v5153 = vpop.f32.mrb[0].mxu0
      %v5154 = vpop.f32.mrb[0].mxu0
      %v5155 = vadd.f32 0.0, %v5154
      %v5156 = vpop.f32.mrb[0].mxu0
      %5157 = vmatprep.mubr.bf16.mxu0 0
      %5158 = vmatmul.mubr.bf16.gmra.mrb[0].mxu0 %v4982
      %v5159 = vpop.f32.mrb[0].mxu0
      %v5160 = vadd.f32 0.0, %v5159
      %v5161 = vpop.f32.mrb[0].mxu0
      %v5162 = vpop.f32.mrb[0].mxu0
      %v5163 = vadd.f32 0.0, %v5162
      %v5164 = vpop.f32.mrb[0].mxu0
      %5165 = vmatprep.mubr.bf16.mxu0 0
      %5166 = vmatmul.mubr.bf16.gmra.mrb[0].mxu0 %v4983
      %v5167 = vpop.f32.mrb[0].mxu0
      %v5168 = vadd.f32 0.0, %v5167
      %v5169 = vpop.f32.mrb[0].mxu0
      %v5170 = vpop.f32.mrb[0].mxu0
      %v5171 = vadd.f32 0.0, %v5170
      %v5172 = vpop.f32.mrb[0].mxu0
      %5173 = vmatprep.mubr.bf16.mxu0 0
      %5174 = vmatmul.mubr.bf16.gmra.mrb[0].mxu0 %v4984
      %v5175 = vpop.f32.mrb[0].mxu0
      %v5176 = vadd.f32 0.0, %v5175
      %v5177 = vpop.f32.mrb[0].mxu0
      %v5178 = vpop.f32.mrb[0].mxu0
      %v5179 = vadd.f32 0.0, %v5178
      %v5180 = vpop.f32.mrb[0].mxu0
      %5181 = vmatprep.mubr.bf16.mxu0 0
      %5182 = vmatmul.mubr.bf16.gmra.mrb[0].mxu0 %v4985
      %v5183 = vpop.f32.mrb[0].mxu0
      %v5184 = vadd.f32 0.0, %v5183
      %v5185 = vpop.f32.mrb[0].mxu0
      %v5186 = vpop.f32.mrb[0].mxu0
      %v5187 = vadd.f32 0.0, %v5186
      %v5188 = vpop.f32.mrb[0].mxu0
      %5189 = vmatprep.mubr.bf16.mxu0 0
      %5190 = vmatmul.mubr.bf16.gmra.mrb[0].mxu0 %v4986
      %v5191 = vpop.f32.mrb[0].mxu0
      %v5192 = vadd.f32 0.0, %v5191
      %v5193 = vpop.f32.mrb[0].mxu0
      %v5194 = vpop.f32.mrb[0].mxu0
      %v5195 = vadd.f32 0.0, %v5194
      %v5196 = vpop.f32.mrb[0].mxu0
      %5197 = vmatprep.mubr.bf16.mxu0 0
      %5198 = vmatmul.mubr.bf16.gmra.mrb[0].mxu0 %v4987
      %v5199 = vpop.f32.mrb[0].mxu0
      %v5200 = vadd.f32 0.0, %v5199
      %v5201 = vpop.f32.mrb[0].mxu0
      %v5202 = vpop.f32.mrb[0].mxu0
      %v5203 = vadd.f32 0.0, %v5202
      %v5204 = vpop.f32.mrb[0].mxu0
      %5205 = vmatprep.mubr.bf16.mxu0 0
      %5206 = vmatmul.mubr.bf16.gmra.mrb[0].mxu0 %v4988
      %v5207 = vpop.f32.mrb[0].mxu0
      %v5208 = vadd.f32 0.0, %v5207
      %v5209 = vpop.f32.mrb[0].mxu0
      %v5210 = vpop.f32.mrb[0].mxu0
      %v5211 = vadd.f32 0.0, %v5210
      %v5212 = vpop.f32.mrb[0].mxu0
      %5213 = vdwg.mxu0
      %v5214 = vadd.f32 %v4716, %v5088
      %v5215 = vadd.f32 %v4717, %v5091
      %v5216 = vadd.f32 %v4718, %v5096
      %v5217 = vadd.f32 %v4719, %v5099
      %v5218 = vadd.f32 %v4720, %v5104
      %v5219 = vadd.f32 %v4721, %v5107
      %v5220 = vadd.f32 %v4722, %v5112
      %v5221 = vadd.f32 %v4723, %v5115
      %v5222 = vadd.f32 %v4724, %v5120
      %v5223 = vadd.f32 %v4725, %v5123
      %v5224 = vadd.f32 %v4726, %v5128
      %v5225 = vadd.f32 %v4727, %v5131
      %v5226 = vadd.f32 %v4728, %v5136
      %v5227 = vadd.f32 %v4729, %v5139
      %v5228 = vadd.f32 %v4730, %v5144
      %v5229 = vadd.f32 %v4731, %v5147
      %v5230 = vadd.f32 %v4732, %v5152
      %v5231 = vadd.f32 %v4733, %v5155
      %v5232 = vadd.f32 %v4734, %v5160
      %v5233 = vadd.f32 %v4735, %v5163
      %v5234 = vadd.f32 %v4736, %v5168
      %v5235 = vadd.f32 %v4737, %v5171
      %v5236 = vadd.f32 %v4738, %v5176
      %v5237 = vadd.f32 %v4739, %v5179
      %v5238 = vadd.f32 %v4740, %v5184
      %v5239 = vadd.f32 %v4741, %v5187
      %v5240 = vadd.f32 %v4742, %v5192
      %v5241 = vadd.f32 %v4743, %v5195
      %v5242 = vadd.f32 %v4744, %v5200
      %v5243 = vadd.f32 %v4745, %v5203
      %v5244 = vadd.f32 %v4746, %v5208
      %v5245 = vadd.f32 %v4747, %v5211
      %5246 = vst [vmem:[#allocation2] sm:$0xff] %v5214
      %5247 = vst [vmem:[#allocation2 + $0x8] sm:$0xff] %v5215
      %5248 = vst [vmem:[#allocation2 + $0x10] sm:$0xff] %v5216
      %5249 = vst [vmem:[#allocation2 + $0x18] sm:$0xff] %v5217
      %5250 = vst [vmem:[#allocation2 + $0x20] sm:$0xff] %v5218
      %5251 = vst [vmem:[#allocation2 + $0x28] sm:$0xff] %v5219
      %5252 = vst [vmem:[#allocation2 + $0x30] sm:$0xff] %v5220
      %5253 = vst [vmem:[#allocation2 + $0x38] sm:$0xff] %v5221
      %5254 = vst [vmem:[#allocation2 + $0x40] sm:$0xff] %v5222
      %5255 = vst [vmem:[#allocation2 + $0x48] sm:$0xff] %v5223
      %5256 = vst [vmem:[#allocation2 + $0x50] sm:$0xff] %v5224
      %5257 = vst [vmem:[#allocation2 + $0x58] sm:$0xff] %v5225
      %5258 = vst [vmem:[#allocation2 + $0x60] sm:$0xff] %v5226
      %5259 = vst [vmem:[#allocation2 + $0x68] sm:$0xff] %v5227
      %5260 = vst [vmem:[#allocation2 + $0x70] sm:$0xff] %v5228
      %5261 = vst [vmem:[#allocation2 + $0x78] sm:$0xff] %v5229
      %5262 = vst [vmem:[#allocation2 + $0x80] sm:$0xff] %v5230
      %5263 = vst [vmem:[#allocation2 + $0x88] sm:$0xff] %v5231
      %5264 = vst [vmem:[#allocation2 + $0x90] sm:$0xff] %v5232
      %5265 = vst [vmem:[#allocation2 + $0x98] sm:$0xff] %v5233
      %5266 = vst [vmem:[#allocation2 + $0xa0] sm:$0xff] %v5234
      %5267 = vst [vmem:[#allocation2 + $0xa8] sm:$0xff] %v5235
      %5268 = vst [vmem:[#allocation2 + $0xb0] sm:$0xff] %v5236
      %5269 = vst [vmem:[#allocation2 + $0xb8] sm:$0xff] %v5237
      %5270 = vst [vmem:[#allocation2 + $0xc0] sm:$0xff] %v5238
      %5271 = vst [vmem:[#allocation2 + $0xc8] sm:$0xff] %v5239
      %5272 = vst [vmem:[#allocation2 + $0xd0] sm:$0xff] %v5240
      %5273 = vst [vmem:[#allocation2 + $0xd8] sm:$0xff] %v5241
      %5274 = vst [vmem:[#allocation2 + $0xe0] sm:$0xff] %v5242
      %5275 = vst [vmem:[#allocation2 + $0xe8] sm:$0xff] %v5243
      %5276 = vst [vmem:[#allocation2 + $0xf0] sm:$0xff] %v5244
      %5277 = vst [vmem:[#allocation2 + $0xf8] sm:$0xff] %v5245
      // Predicated region
      $region33: #{blockg_forward.3} parent=27 // pred_check
        %p5278 = pneg %p257
      $region34: #{blockg_forward.3} parent=27 // pred_check_branch
        %5280 = sbr.rel (%p5278) target = $region36
      $region35: #{blockg_forward.3} parent=27 // pred_region
        %v5281 = vld [vmem:[#allocation2] sm:$0xff]
        %v5282 = vld [vmem:[#allocation2 + $0x8] sm:$0xff]
        %v5283 = vld [vmem:[#allocation2 + $0x10] sm:$0xff]
        %v5284 = vld [vmem:[#allocation2 + $0x18] sm:$0xff]
        %v5285 = vld [vmem:[#allocation2 + $0x20] sm:$0xff]
        %v5286 = vld [vmem:[#allocation2 + $0x28] sm:$0xff]
        %v5287 = vld [vmem:[#allocation2 + $0x30] sm:$0xff]
        %v5288 = vld [vmem:[#allocation2 + $0x38] sm:$0xff]
        %v5289 = vld [vmem:[#allocation2 + $0x40] sm:$0xff]
        %v5290 = vld [vmem:[#allocation2 + $0x48] sm:$0xff]
        %v5291 = vld [vmem:[#allocation2 + $0x50] sm:$0xff]
        %v5292 = vld [vmem:[#allocation2 + $0x58] sm:$0xff]
        %v5293 = vld [vmem:[#allocation2 + $0x60] sm:$0xff]
        %v5294 = vld [vmem:[#allocation2 + $0x68] sm:$0xff]
        %v5295 = vld [vmem:[#allocation2 + $0x70] sm:$0xff]
        %v5296 = vld [vmem:[#allocation2 + $0x78] sm:$0xff]
        %v5297 = vld [vmem:[#allocation2 + $0x80] sm:$0xff]
        %v5298 = vld [vmem:[#allocation2 + $0x88] sm:$0xff]
        %v5299 = vld [vmem:[#allocation2 + $0x90] sm:$0xff]
        %v5300 = vld [vmem:[#allocation2 + $0x98] sm:$0xff]
        %v5301 = vld [vmem:[#allocation2 + $0xa0] sm:$0xff]
        %v5302 = vld [vmem:[#allocation2 + $0xa8] sm:$0xff]
        %v5303 = vld [vmem:[#allocation2 + $0xb0] sm:$0xff]
        %v5304 = vld [vmem:[#allocation2 + $0xb8] sm:$0xff]
        %v5305 = vld [vmem:[#allocation2 + $0xc0] sm:$0xff]
        %v5306 = vld [vmem:[#allocation2 + $0xc8] sm:$0xff]
        %v5307 = vld [vmem:[#allocation2 + $0xd0] sm:$0xff]
        %v5308 = vld [vmem:[#allocation2 + $0xd8] sm:$0xff]
        %v5309 = vld [vmem:[#allocation2 + $0xe0] sm:$0xff]
        %v5310 = vld [vmem:[#allocation2 + $0xe8] sm:$0xff]
        %v5311 = vld [vmem:[#allocation2 + $0xf0] sm:$0xff]
        %v5312 = vld [vmem:[#allocation2 + $0xf8] sm:$0xff]
        %vm5313 = vcmp.ge.f32.partialorder %v5281, 0.0
        %vm5314 = vcmp.ge.f32.partialorder %v5282, 0.0
        %vm5315 = vcmp.ge.f32.partialorder %v5283, 0.0
        %vm5316 = vcmp.ge.f32.partialorder %v5284, 0.0
        %vm5317 = vcmp.ge.f32.partialorder %v5285, 0.0
        %vm5318 = vcmp.ge.f32.partialorder %v5286, 0.0
        %vm5319 = vcmp.ge.f32.partialorder %v5287, 0.0
        %vm5320 = vcmp.ge.f32.partialorder %v5288, 0.0
        %vm5321 = vcmp.ge.f32.partialorder %v5289, 0.0
        %vm5322 = vcmp.ge.f32.partialorder %v5290, 0.0
        %vm5323 = vcmp.ge.f32.partialorder %v5291, 0.0
        %vm5324 = vcmp.ge.f32.partialorder %v5292, 0.0
        %vm5325 = vcmp.ge.f32.partialorder %v5293, 0.0
        %vm5326 = vcmp.ge.f32.partialorder %v5294, 0.0
        %vm5327 = vcmp.ge.f32.partialorder %v5295, 0.0
        %vm5328 = vcmp.ge.f32.partialorder %v5296, 0.0
        %vm5329 = vcmp.ge.f32.partialorder %v5297, 0.0
        %vm5330 = vcmp.ge.f32.partialorder %v5298, 0.0
        %vm5331 = vcmp.ge.f32.partialorder %v5299, 0.0
        %vm5332 = vcmp.ge.f32.partialorder %v5300, 0.0
        %vm5333 = vcmp.ge.f32.partialorder %v5301, 0.0
        %vm5334 = vcmp.ge.f32.partialorder %v5302, 0.0
        %vm5335 = vcmp.ge.f32.partialorder %v5303, 0.0
        %vm5336 = vcmp.ge.f32.partialorder %v5304, 0.0
        %vm5337 = vcmp.ge.f32.partialorder %v5305, 0.0
        %vm5338 = vcmp.ge.f32.partialorder %v5306, 0.0
        %vm5339 = vcmp.ge.f32.partialorder %v5307, 0.0
        %vm5340 = vcmp.ge.f32.partialorder %v5308, 0.0
        %vm5341 = vcmp.ge.f32.partialorder %v5309, 0.0
        %vm5342 = vcmp.ge.f32.partialorder %v5310, 0.0
        %vm5343 = vcmp.ge.f32.partialorder %v5311, 0.0
        %vm5344 = vcmp.ge.f32.partialorder %v5312, 0.0
        %v5345 = vmul.f32 %v5281, 0.2
        %v5346 = vmul.f32 %v5282, 0.2
        %v5347 = vmul.f32 %v5283, 0.2
        %v5348 = vmul.f32 %v5284, 0.2
        %v5349 = vmul.f32 %v5285, 0.2
        %v5350 = vmul.f32 %v5286, 0.2
        %v5351 = vmul.f32 %v5287, 0.2
        %v5352 = vmul.f32 %v5288, 0.2
        %v5353 = vmul.f32 %v5289, 0.2
        %v5354 = vmul.f32 %v5290, 0.2
        %v5355 = vmul.f32 %v5291, 0.2
        %v5356 = vmul.f32 %v5292, 0.2
        %v5357 = vmul.f32 %v5293, 0.2
        %v5358 = vmul.f32 %v5294, 0.2
        %v5359 = vmul.f32 %v5295, 0.2
        %v5360 = vmul.f32 %v5296, 0.2
        %v5361 = vmul.f32 %v5297, 0.2
        %v5362 = vmul.f32 %v5298, 0.2
        %v5363 = vmul.f32 %v5299, 0.2
        %v5364 = vmul.f32 %v5300, 0.2
        %v5365 = vmul.f32 %v5301, 0.2
        %v5366 = vmul.f32 %v5302, 0.2
        %v5367 = vmul.f32 %v5303, 0.2
        %v5368 = vmul.f32 %v5304, 0.2
        %v5369 = vmul.f32 %v5305, 0.2
        %v5370 = vmul.f32 %v5306, 0.2
        %v5371 = vmul.f32 %v5307, 0.2
        %v5372 = vmul.f32 %v5308, 0.2
        %v5373 = vmul.f32 %v5309, 0.2
        %v5374 = vmul.f32 %v5310, 0.2
        %v5375 = vmul.f32 %v5311, 0.2
        %v5376 = vmul.f32 %v5312, 0.2
        %v5377 = vsel %vm5313, %v5281, %v5345
        %v5378 = vsel %vm5314, %v5282, %v5346
        %v5379 = vsel %vm5315, %v5283, %v5347
        %v5380 = vsel %vm5316, %v5284, %v5348
        %v5381 = vsel %vm5317, %v5285, %v5349
        %v5382 = vsel %vm5318, %v5286, %v5350
        %v5383 = vsel %vm5319, %v5287, %v5351
        %v5384 = vsel %vm5320, %v5288, %v5352
        %v5385 = vsel %vm5321, %v5289, %v5353
        %v5386 = vsel %vm5322, %v5290, %v5354
        %v5387 = vsel %vm5323, %v5291, %v5355
        %v5388 = vsel %vm5324, %v5292, %v5356
        %v5389 = vsel %vm5325, %v5293, %v5357
        %v5390 = vsel %vm5326, %v5294, %v5358
        %v5391 = vsel %vm5327, %v5295, %v5359
        %v5392 = vsel %vm5328, %v5296, %v5360
        %v5393 = vsel %vm5329, %v5297, %v5361
        %v5394 = vsel %vm5330, %v5298, %v5362
        %v5395 = vsel %vm5331, %v5299, %v5363
        %v5396 = vsel %vm5332, %v5300, %v5364
        %v5397 = vsel %vm5333, %v5301, %v5365
        %v5398 = vsel %vm5334, %v5302, %v5366
        %v5399 = vsel %vm5335, %v5303, %v5367
        %v5400 = vsel %vm5336, %v5304, %v5368
        %v5401 = vsel %vm5337, %v5305, %v5369
        %v5402 = vsel %vm5338, %v5306, %v5370
        %v5403 = vsel %vm5339, %v5307, %v5371
        %v5404 = vsel %vm5340, %v5308, %v5372
        %v5405 = vsel %vm5341, %v5309, %v5373
        %v5406 = vsel %vm5342, %v5310, %v5374
        %v5407 = vsel %vm5343, %v5311, %v5375
        %v5408 = vsel %vm5344, %v5312, %v5376
        %5409 = vst [vmem:[%s254] sm:$0xff] %v5377
        %5410 = vst [vmem:[%s254 + $0x8] sm:$0xff] %v5378
        %5411 = vst [vmem:[%s254 + $0x10] sm:$0xff] %v5379
        %5412 = vst [vmem:[%s254 + $0x18] sm:$0xff] %v5380
        %5413 = vst [vmem:[%s254 + $0x20] sm:$0xff] %v5381
        %5414 = vst [vmem:[%s254 + $0x28] sm:$0xff] %v5382
        %5415 = vst [vmem:[%s254 + $0x30] sm:$0xff] %v5383
        %5416 = vst [vmem:[%s254 + $0x38] sm:$0xff] %v5384
        %5417 = vst [vmem:[%s254 + $0x40] sm:$0xff] %v5385
        %5418 = vst [vmem:[%s254 + $0x48] sm:$0xff] %v5386
        %5419 = vst [vmem:[%s254 + $0x50] sm:$0xff] %v5387
        %5420 = vst [vmem:[%s254 + $0x58] sm:$0xff] %v5388
        %5421 = vst [vmem:[%s254 + $0x60] sm:$0xff] %v5389
        %5422 = vst [vmem:[%s254 + $0x68] sm:$0xff] %v5390
        %5423 = vst [vmem:[%s254 + $0x70] sm:$0xff] %v5391
        %5424 = vst [vmem:[%s254 + $0x78] sm:$0xff] %v5392
        %5425 = vst [vmem:[%s254 + $0x80] sm:$0xff] %v5393
        %5426 = vst [vmem:[%s254 + $0x88] sm:$0xff] %v5394
        %5427 = vst [vmem:[%s254 + $0x90] sm:$0xff] %v5395
        %5428 = vst [vmem:[%s254 + $0x98] sm:$0xff] %v5396
        %5429 = vst [vmem:[%s254 + $0xa0] sm:$0xff] %v5397
        %5430 = vst [vmem:[%s254 + $0xa8] sm:$0xff] %v5398
        %5431 = vst [vmem:[%s254 + $0xb0] sm:$0xff] %v5399
        %5432 = vst [vmem:[%s254 + $0xb8] sm:$0xff] %v5400
        %5433 = vst [vmem:[%s254 + $0xc0] sm:$0xff] %v5401
        %5434 = vst [vmem:[%s254 + $0xc8] sm:$0xff] %v5402
        %5435 = vst [vmem:[%s254 + $0xd0] sm:$0xff] %v5403
        %5436 = vst [vmem:[%s254 + $0xd8] sm:$0xff] %v5404
        %5437 = vst [vmem:[%s254 + $0xe0] sm:$0xff] %v5405
        %5438 = vst [vmem:[%s254 + $0xe8] sm:$0xff] %v5406
        %5439 = vst [vmem:[%s254 + $0xf0] sm:$0xff] %v5407
        %5440 = vst [vmem:[%s254 + $0xf8] sm:$0xff] %v5408
      $region36: #{blockg_forward.3} parent=27 // pred_fallthru
        _
      %s5441 = smul.u32 16, %s20
      %p5442 = scmp.lt.s32.totalorder %s19, 1
      %s5443 = scalar_select %p5442, %s19, 1
      %p5444 = scmp.lt.s32.totalorder %s5441, 15
      %s5445 = scalar_select %p5444, %s5441, 15
      %p5446 = scmp.lt.s32.totalorder %s21, 0
      %s5447 = scalar_select %p5446, %s21, 0
      %s5448 = smul.addr %s5445, 2
      %s5449 = sadd.s32 %s5447, %s5448
      %s5450 = smul.addr %s5443, 32
      %s5451 = sadd.s32 %s5449, %s5450
      %s5452 = smul.addr %s5451, 8
      %s5453 = scalar_lea.vmem %s2, %s5452
      // Predicated region
      $region37: #{blockg_forward.3} parent=27 // pred_check
        %p5454 = pneg %p121
      $region38: #{blockg_forward.3} parent=27 // pred_check_branch
        %5456 = sbr.rel (%p5454) target = $region40
      $region39: #{blockg_forward.3} parent=27 // pred_region
        %s5457 = smul.u32 16, %s20
      $region40: #{blockg_forward.3} parent=27 // pred_fallthru
        _
    $region28: #{blockg_forward.3} parent=5 // pred_fallthru
      _
    %p5458 = scmp.le.s32.totalorder 2, %s8
    // Predicated region
    $region41: #{blockg_forward.3} parent=5 // pred_check
      %p5459 = pneg %p5458
    $region42: #{blockg_forward.3} parent=5 // pred_check_branch
      %5461 = sbr.rel (%p5459) target = $region44
    $region43: #{blockg_forward.3} parent=5 // pred_region
      %s5462 = ssub.s32 %s8, 2
      // Predicated region
      $region45: #{blockg_forward.3} parent=43 // pred_check
        %p5463 = pneg %p127
      $region46: #{blockg_forward.3} parent=43 // pred_check_branch
        %5465 = sbr.rel (%p5463) target = $region48
      $region47: #{blockg_forward.3} parent=43 // pred_region
        %s5466 = smul.u32 16, %s24
        %p5467 = scmp.lt.s32.totalorder %s23, 1
        %s5468 = scalar_select %p5467, %s23, 1
        %p5469 = scmp.lt.s32.totalorder %s5466, 15
        %s5470 = scalar_select %p5469, %s5466, 15
        %p5471 = scmp.lt.s32.totalorder %s25, 0
        %s5472 = scalar_select %p5471, %s25, 0
        %s5473 = smul.addr %s5470, 2
        %s5474 = sadd.s32 %s5472, %s5473
        %s5475 = smul.addr %s5468, 32
        %s5476 = sadd.s32 %s5474, %s5475
        %s5477 = smul.addr %s5476, 8
        %s5478 = scalar_lea.vmem %s2, %s5477
      $region48: #{blockg_forward.3} parent=43 // pred_fallthru
        _
    $region44: #{blockg_forward.3} parent=5 // pred_fallthru
      _
  $region6: #{blockg_forward.3} parent=0 // loop_footer
    %s12 = sadd.s32 1, %s8
  $region7: #{blockg_forward.3} parent=0 // loop_footer_branch
    %7 = sbr.rel target = $region3
  $region8: #{blockg_forward.3} parent=0 // loop_exit
    _

</llo_original>
